<compile_context>
chip_gen: v5e
topology: v5e:2x2
jax: 0.10.0
libtpu: 0.0.40
codegen_flags: <defaults>
</compile_context>

<pallas_src>
from typing import NamedTuple, Optional

import jax
import jax.numpy as jnp
from jax.experimental import pallas as pl
from jax.experimental.pallas import tpu as pltpu


_LANE_WIDTH = 128
_VMEM_LIMIT_BYTES = 32 * 1024 * 1024   # explicit scoped-VMEM limit (safe on v5e/v6e/v7x)
_VMEM_TILE_BUDGET = 24 * 1024 * 1024   # headroom for Mosaic internals / spills


def _round_up(x: int, m: int) -> int:
    return (x + m - 1) // m * m


# ----------------------------------------------------------------------------
# Kernel: multi-hot gather-sum as one MXU matmul per packed row tile.
# ----------------------------------------------------------------------------
def _ce_kernel(idx_ref, table_ref, o_ref):
    tm = o_ref.shape[0]
    kv = table_ref.shape[0]
    n_sel = idx_ref.shape[1]               # 2 * pack selectors per physical row

    lanes = jax.lax.broadcasted_iota(jnp.int32, (tm, kv), 1)
    idx = idx_ref[...]                     # (tm, 2*pack) int32, fully pre-offset

    # Multi-hot selector (0/1 entries, exact in any dtype); indices never collide
    # because in/out halves and per-slot blocks are disjoint in the fused vocabulary.
    sel = (lanes == idx[:, 0:1]).astype(table_ref.dtype)
    for c in range(1, n_sel):
        sel = sel + (lanes == idx[:, c:c + 1]).astype(table_ref.dtype)

    # One MXU matmul == pack * (gather + gather + add), f32 accumulation.
    # HIGHEST precision pins the multi-pass f32 path (exact for a 0/1 selector).
    o_ref[...] = jnp.dot(
        sel,
        table_ref[...],
        preferred_element_type=jnp.float32,
        precision=jax.lax.Precision.HIGHEST,
    ).astype(o_ref.dtype)


# ----------------------------------------------------------------------------
# One-time parameter preparation (hoisted out of the per-call path).
# ----------------------------------------------------------------------------
class CEParams(NamedTuple):
    packed_table: jax.Array   # (pack*V, pack*H), block-diagonal replicated fused table
    pack: int                 # logical rows packed per physical output row
    num_in: int
    num_out: int
    hidden: int


def prepare_centrality_tables(in_table, out_table, dtype=None) -> CEParams:
    """Fuse + pack the two embedding tables once (not per forward call).

    dtype=jnp.bfloat16 halves table VMEM / output bytes and avoids the f32 MXU
    emulation path (recommended on v5e when the consumer tolerates bf16).
    """
    num_in, H = in_table.shape
    num_out, H2 = out_table.shape
    assert H == H2, "in/out embedding hidden sizes must match"

    fused = jnp.concatenate([in_table, out_table], axis=0)      # (V, H)
    if dtype is not None:
        fused = fused.astype(dtype)

    # Pack k = 128 // H logical rows per physical row when it divides evenly.
    pack = _LANE_WIDTH // H if (H <= _LANE_WIDTH and _LANE_WIDTH % H == 0) else 1
    if pack > 1:
        # Block-diagonal replication: packed[j*V:(j+1)*V, j*H:(j+1)*H] = fused.
        packed = jnp.kron(jnp.eye(pack, dtype=fused.dtype), fused)   # (pack*V, pack*H)
    else:
        packed = fused

    return CEParams(packed, pack, num_in, num_out, H)


# ----------------------------------------------------------------------------
# Forward pass
# ----------------------------------------------------------------------------
def _pick_tile(M_phys: int, block_rows: int, pack: int, kv: int, kh: int,
               elt_bytes: int) -> int:
    tm_full = _round_up(max(M_phys, 1), 8)
    tm = min(block_rows, tm_full)
    # v7x has 2 TensorCores: keep >= 2 grid steps on the parallel axis when possible.
    if tm == tm_full and tm >= 16:
        tm = _round_up(pl.cdiv(M_phys, 2), 8)

    def usage(t):
        out_b = t * kh * elt_bytes * 2        # double-buffered output tile
        idx_b = t * 2 * pack * 4 * 2          # double-buffered index tile
        tab_b = kv * kh * elt_bytes * 2       # table (worst case: double-buffered)
        sel_b = t * kv * 4                    # selector intermediate
        return out_b + idx_b + tab_b + sel_b

    while tm > 8 and usage(tm) > _VMEM_TILE_BUDGET:
        tm = _round_up(tm // 2, 8)
    return tm


def centrality_encoding(in_deg, out_deg, params: CEParams, *,
                        block_rows: int = 1024, out_dtype: Optional[jnp.dtype] = None):
    """in_deg/out_deg: integer arrays of identical shape.  Returns squeeze(ce)."""
    assert in_deg.shape == out_deg.shape
    orig_shape = in_deg.shape
    table, pack, num_in, num_out, H = params
    V = num_in + num_out
    kv, kh = table.shape                      # (pack*V, pack*H)
    out_dtype = out_dtype or table.dtype      # pass jnp.bfloat16 to halve writeback bytes

    M = int(in_deg.size)

    # Clamp indices: nn.Embedding would error on OOB; clamping prevents silent aliasing
    # into the other table's half of the fused vocabulary.
    in_idx = jnp.clip(in_deg.reshape(-1).astype(jnp.int32), 0, num_in - 1)
    out_idx = jnp.clip(out_deg.reshape(-1).astype(jnp.int32), 0, num_out - 1) + num_in
    idx = jnp.stack([in_idx, out_idx], axis=-1)               # (M, 2), out pre-offset

    # Fold `pack` logical rows into one physical row; add per-slot vocabulary offsets.
    M_l = _round_up(M, pack)
    if M_l != M:
        idx = jnp.pad(idx, ((0, M_l - M), (0, 0)))            # padded rows -> sliced away
    M_phys = M_l // pack
    idx = idx.reshape(M_phys, 2 * pack)
    slot_off = jnp.repeat(jnp.arange(pack, dtype=jnp.int32) * V, 2)   # [0,0,V,V,2V,2V,...]
    idx = idx + slot_off[None, :]

    # Tile selection (step-overhead amortization, VMEM budget, 2-TC split).
    tm = _pick_tile(M_phys, block_rows, pack, kv, kh, jnp.dtype(table.dtype).itemsize)
    M_pad = _round_up(M_phys, tm)
    if M_pad != M_phys:
        idx = jnp.pad(idx, ((0, M_pad - M_phys), (0, 0)))

    def _call(table_spec):
        return pl.pallas_call(
            _ce_kernel,
            out_shape=jax.ShapeDtypeStruct((M_pad, kh), out_dtype),
            grid=(M_pad // tm,),
            in_specs=[
                pl.BlockSpec((tm, 2 * pack), lambda i: (i, 0)),
                table_spec,                                    # fused table, grid-invariant
            ],
            out_specs=pl.BlockSpec((tm, kh), lambda i: (i, 0)),
            compiler_params=pltpu.CompilerParams(
                dimension_semantics=("parallel",),
                vmem_limit_bytes=_VMEM_LIMIT_BYTES,
            ),
        )(idx, table)

    try:
        # Single-buffer the grid-invariant table so its VMEM isn't reserved twice.
        out = _call(pl.BlockSpec(table.shape, lambda i: (0, 0),
                                 pipeline_mode=pl.Buffered(1)))
    except Exception:
        # Fallback for jax versions where single-buffering a block isn't supported.
        out = _call(pl.BlockSpec(table.shape, lambda i: (0, 0)))

    # Unpack physical rows back to logical rows; drop padding.
    ce = out.reshape(M_pad * pack, H)[:M].reshape(orig_shape + (H,))
    return jnp.squeeze(ce)   # matches the module's ce.squeeze()


# ----------------------------------------------------------------------------
# Pure-JAX reference (mirrors the PyTorch forward exactly)
# ----------------------------------------------------------------------------
def reference(in_deg, out_deg, in_table, out_table):
    ce = in_table[in_deg] + out_table[out_deg]
    return jnp.squeeze(ce)


if __name__ == "__main__":
    B, N, H = 2, 8, 32
    num_in_degree, num_out_degree = 64, 64

    root = jax.random.PRNGKey(0)
    k_in, k_out, k_id, k_od = jax.random.split(root, 4)

    # init_params: Embedding weight ~ N(0, 0.02) for every row (padding row included,
    # since init_params runs after nn.Embedding's padding zeroing).
    in_table = 0.02 * jax.random.normal(k_in, (num_in_degree, H), jnp.float32)
    out_table = 0.02 * jax.random.normal(k_out, (num_out_degree, H), jnp.float32)

    in_deg = jax.random.randint(k_id, (B, N), 0, num_in_degree, dtype=jnp.int32)
    out_deg = jax.random.randint(k_od, (B, N), 0, num_out_degree, dtype=jnp.int32)

    # One-time parameter prep (fused + packed table) — hoisted out of the forward path.
    # (Pass dtype=jnp.bfloat16 here + out_dtype=jnp.bfloat16 below for the mem-bound win
    #  when the downstream consumer tolerates bf16; kept f32 to meet the 1e-6 check.)
    params = prepare_centrality_tables(in_table, out_table)

    out = centrality_encoding(in_deg, out_deg, params)
    out = jax.block_until_ready(out)

    ref = reference(in_deg, out_deg, in_table, out_table)
    assert out.shape == ref.shape == (B, N, H)
    assert jnp.allclose(out, ref, atol=1e-6, rtol=1e-6), "mismatch vs reference"

    print("KERNEL_OK")
</pallas_src>

<mosaic_0001>
module attributes {stable_mosaic.version = 11 : i64} {
  func.func @_ce_kernel(%arg0: i32, %arg1: memref<8x8xi32, #tpu.memory_space<vmem>>, %arg2: memref<512x128xf32, #tpu.memory_space<vmem>>, %arg3: memref<8x128xf32, #tpu.memory_space<vmem>>) attributes {dimension_semantics = [#tpu.dimension_semantics<parallel>], iteration_bounds = array<i64: 1>, scalar_prefetch = 0 : i64, scratch_operands = 0 : i64, tpu.core_type = #tpu.core_type<tc>, window_params = [{transform_indices = @transform_0, window_bounds = array<i64: 8, 8>}, {pipeline_mode = #tpu.pipeline_mode<synchronous>, transform_indices = @transform_1, window_bounds = array<i64: 512, 128>}, {transform_indices = @transform_2, window_bounds = array<i64: 8, 128>}]} {
    %0 = tpu.iota {dimensions = array<i32: 1>} : vector<8x512xi32>
    %c0 = arith.constant 0 : index
    %c0_0 = arith.constant 0 : index
    %1 = vector.load %arg1[%c0, %c0_0] : memref<8x8xi32, #tpu.memory_space<vmem>>, vector<8x8xi32>
    %2 = vector.extract_strided_slice %1 {offsets = [0, 0], sizes = [8, 1], strides = [1, 1]} : vector<8x8xi32> to vector<8x1xi32>
    %3 = vector.broadcast %2 : vector<8x1xi32> to vector<8x512xi32>
    %4 = arith.cmpi eq, %0, %3 : vector<8x512xi32>
    %5 = arith.extui %4 : vector<8x512xi1> to vector<8x512xi32>
    %6 = arith.sitofp %5 : vector<8x512xi32> to vector<8x512xf32>
    %7 = vector.extract_strided_slice %1 {offsets = [0, 1], sizes = [8, 1], strides = [1, 1]} : vector<8x8xi32> to vector<8x1xi32>
    %8 = vector.broadcast %7 : vector<8x1xi32> to vector<8x512xi32>
    %9 = arith.cmpi eq, %0, %8 : vector<8x512xi32>
    %10 = arith.extui %9 : vector<8x512xi1> to vector<8x512xi32>
    %11 = arith.sitofp %10 : vector<8x512xi32> to vector<8x512xf32>
    %12 = arith.addf %6, %11 : vector<8x512xf32>
    %13 = vector.extract_strided_slice %1 {offsets = [0, 2], sizes = [8, 1], strides = [1, 1]} : vector<8x8xi32> to vector<8x1xi32>
    %14 = vector.broadcast %13 : vector<8x1xi32> to vector<8x512xi32>
    %15 = arith.cmpi eq, %0, %14 : vector<8x512xi32>
    %16 = arith.extui %15 : vector<8x512xi1> to vector<8x512xi32>
    %17 = arith.sitofp %16 : vector<8x512xi32> to vector<8x512xf32>
    %18 = arith.addf %12, %17 : vector<8x512xf32>
    %19 = vector.extract_strided_slice %1 {offsets = [0, 3], sizes = [8, 1], strides = [1, 1]} : vector<8x8xi32> to vector<8x1xi32>
    %20 = vector.broadcast %19 : vector<8x1xi32> to vector<8x512xi32>
    %21 = arith.cmpi eq, %0, %20 : vector<8x512xi32>
    %22 = arith.extui %21 : vector<8x512xi1> to vector<8x512xi32>
    %23 = arith.sitofp %22 : vector<8x512xi32> to vector<8x512xf32>
    %24 = arith.addf %18, %23 : vector<8x512xf32>
    %25 = vector.extract_strided_slice %1 {offsets = [0, 4], sizes = [8, 1], strides = [1, 1]} : vector<8x8xi32> to vector<8x1xi32>
    %26 = vector.broadcast %25 : vector<8x1xi32> to vector<8x512xi32>
    %27 = arith.cmpi eq, %0, %26 : vector<8x512xi32>
    %28 = arith.extui %27 : vector<8x512xi1> to vector<8x512xi32>
    %29 = arith.sitofp %28 : vector<8x512xi32> to vector<8x512xf32>
    %30 = arith.addf %24, %29 : vector<8x512xf32>
    %31 = vector.extract_strided_slice %1 {offsets = [0, 5], sizes = [8, 1], strides = [1, 1]} : vector<8x8xi32> to vector<8x1xi32>
    %32 = vector.broadcast %31 : vector<8x1xi32> to vector<8x512xi32>
    %33 = arith.cmpi eq, %0, %32 : vector<8x512xi32>
    %34 = arith.extui %33 : vector<8x512xi1> to vector<8x512xi32>
    %35 = arith.sitofp %34 : vector<8x512xi32> to vector<8x512xf32>
    %36 = arith.addf %30, %35 : vector<8x512xf32>
    %37 = vector.extract_strided_slice %1 {offsets = [0, 6], sizes = [8, 1], strides = [1, 1]} : vector<8x8xi32> to vector<8x1xi32>
    %38 = vector.broadcast %37 : vector<8x1xi32> to vector<8x512xi32>
    %39 = arith.cmpi eq, %0, %38 : vector<8x512xi32>
    %40 = arith.extui %39 : vector<8x512xi1> to vector<8x512xi32>
    %41 = arith.sitofp %40 : vector<8x512xi32> to vector<8x512xf32>
    %42 = arith.addf %36, %41 : vector<8x512xf32>
    %43 = vector.extract_strided_slice %1 {offsets = [0, 7], sizes = [8, 1], strides = [1, 1]} : vector<8x8xi32> to vector<8x1xi32>
    %44 = vector.broadcast %43 : vector<8x1xi32> to vector<8x512xi32>
    %45 = arith.cmpi eq, %0, %44 : vector<8x512xi32>
    %46 = arith.extui %45 : vector<8x512xi1> to vector<8x512xi32>
    %47 = arith.sitofp %46 : vector<8x512xi32> to vector<8x512xf32>
    %48 = arith.addf %42, %47 : vector<8x512xf32>
    %c0_1 = arith.constant 0 : index
    %c0_2 = arith.constant 0 : index
    %49 = vector.load %arg2[%c0_1, %c0_2] : memref<512x128xf32, #tpu.memory_space<vmem>>, vector<512x128xf32>
    %cst = arith.constant dense<0.000000e+00> : vector<8x128xf32>
    %50 = tpu.matmul %48, %49, %cst {dimension_numbers = #tpu.dot_dimension_numbers<[1], [0], [0], [1], [0, 0, 1, 1], [], []>, precision = #tpu.contract_precision<fp32>} : vector<8x512xf32>, vector<512x128xf32>, vector<8x128xf32> -> vector<8x128xf32>
    %c0_3 = arith.constant 0 : index
    %c0_4 = arith.constant 0 : index
    %51 = vector.load %arg3[%c0_3, %c0_4] : memref<8x128xf32, #tpu.memory_space<vmem>>, vector<8x128xf32>
    tpu.vector_store %arg3[%c0_3, %c0_4], %50 {strides = array<i32>} : memref<8x128xf32, #tpu.memory_space<vmem>>, vector<8x128xf32>,
    return
  }
  func.func @transform_0(%arg0: i32) -> (i32, i32) {
    %c0_i32 = arith.constant 0 : i32
    %c0_i32_0 = arith.constant 0 : i32
    return %arg0, %c0_i32 : i32, i32
  }
  func.func @transform_1(%arg0: i32) -> (i32, i32) {
    %c0_i32 = arith.constant 0 : i32
    %c0_i32_0 = arith.constant 0 : i32
    %c0_i32_1 = arith.constant 0 : i32
    return %c0_i32, %c0_i32_0 : i32, i32
  }
  func.func @transform_2(%arg0: i32) -> (i32, i32) {
    %c0_i32 = arith.constant 0 : i32
    %c0_i32_0 = arith.constant 0 : i32
    return %arg0, %c0_i32 : i32, i32
  }
}

module attributes {stable_mosaic.version = 11 : i64} {
  func.func @_ce_kernel(%arg0: i32, %arg1: memref<8x8xi32, #tpu.memory_space<vmem>>, %arg2: memref<512x128xf32, #tpu.memory_space<vmem>>, %arg3: memref<8x128xf32, #tpu.memory_space<vmem>>) attributes {dimension_semantics = [#tpu.dimension_semantics<parallel>], iteration_bounds = array<i64: 1>, scalar_prefetch = 0 : i64, scratch_operands = 0 : i64, tpu.core_type = #tpu.core_type<tc>, window_params = [{transform_indices = @transform_0, window_bounds = array<i64: 8, 8>}, {pipeline_mode = #tpu.pipeline_mode<synchronous>, transform_indices = @transform_1, window_bounds = array<i64: 512, 128>}, {transform_indices = @transform_2, window_bounds = array<i64: 8, 128>}]} {
    %0 = tpu.iota {dimensions = array<i32: 1>} : vector<8x512xi32>
    %c0 = arith.constant 0 : index
    %c0_0 = arith.constant 0 : index
    %1 = vector.load %arg1[%c0, %c0_0] : memref<8x8xi32, #tpu.memory_space<vmem>>, vector<8x8xi32>
    %2 = vector.extract_strided_slice %1 {offsets = [0, 0], sizes = [8, 1], strides = [1, 1]} : vector<8x8xi32> to vector<8x1xi32>
    %3 = vector.broadcast %2 : vector<8x1xi32> to vector<8x512xi32>
    %4 = arith.cmpi eq, %0, %3 : vector<8x512xi32>
    %5 = arith.extui %4 : vector<8x512xi1> to vector<8x512xi32>
    %6 = arith.sitofp %5 : vector<8x512xi32> to vector<8x512xf32>
    %7 = vector.extract_strided_slice %1 {offsets = [0, 1], sizes = [8, 1], strides = [1, 1]} : vector<8x8xi32> to vector<8x1xi32>
    %8 = vector.broadcast %7 : vector<8x1xi32> to vector<8x512xi32>
    %9 = arith.cmpi eq, %0, %8 : vector<8x512xi32>
    %10 = arith.extui %9 : vector<8x512xi1> to vector<8x512xi32>
    %11 = arith.sitofp %10 : vector<8x512xi32> to vector<8x512xf32>
    %12 = arith.addf %6, %11 : vector<8x512xf32>
    %13 = vector.extract_strided_slice %1 {offsets = [0, 2], sizes = [8, 1], strides = [1, 1]} : vector<8x8xi32> to vector<8x1xi32>
    %14 = vector.broadcast %13 : vector<8x1xi32> to vector<8x512xi32>
    %15 = arith.cmpi eq, %0, %14 : vector<8x512xi32>
    %16 = arith.extui %15 : vector<8x512xi1> to vector<8x512xi32>
    %17 = arith.sitofp %16 : vector<8x512xi32> to vector<8x512xf32>
    %18 = arith.addf %12, %17 : vector<8x512xf32>
    %19 = vector.extract_strided_slice %1 {offsets = [0, 3], sizes = [8, 1], strides = [1, 1]} : vector<8x8xi32> to vector<8x1xi32>
    %20 = vector.broadcast %19 : vector<8x1xi32> to vector<8x512xi32>
    %21 = arith.cmpi eq, %0, %20 : vector<8x512xi32>
    %22 = arith.extui %21 : vector<8x512xi1> to vector<8x512xi32>
    %23 = arith.sitofp %22 : vector<8x512xi32> to vector<8x512xf32>
    %24 = arith.addf %18, %23 : vector<8x512xf32>
    %25 = vector.extract_strided_slice %1 {offsets = [0, 4], sizes = [8, 1], strides = [1, 1]} : vector<8x8xi32> to vector<8x1xi32>
    %26 = vector.broadcast %25 : vector<8x1xi32> to vector<8x512xi32>
    %27 = arith.cmpi eq, %0, %26 : vector<8x512xi32>
    %28 = arith.extui %27 : vector<8x512xi1> to vector<8x512xi32>
    %29 = arith.sitofp %28 : vector<8x512xi32> to vector<8x512xf32>
    %30 = arith.addf %24, %29 : vector<8x512xf32>
    %31 = vector.extract_strided_slice %1 {offsets = [0, 5], sizes = [8, 1], strides = [1, 1]} : vector<8x8xi32> to vector<8x1xi32>
    %32 = vector.broadcast %31 : vector<8x1xi32> to vector<8x512xi32>
    %33 = arith.cmpi eq, %0, %32 : vector<8x512xi32>
    %34 = arith.extui %33 : vector<8x512xi1> to vector<8x512xi32>
    %35 = arith.sitofp %34 : vector<8x512xi32> to vector<8x512xf32>
    %36 = arith.addf %30, %35 : vector<8x512xf32>
    %37 = vector.extract_strided_slice %1 {offsets = [0, 6], sizes = [8, 1], strides = [1, 1]} : vector<8x8xi32> to vector<8x1xi32>
    %38 = vector.broadcast %37 : vector<8x1xi32> to vector<8x512xi32>
    %39 = arith.cmpi eq, %0, %38 : vector<8x512xi32>
    %40 = arith.extui %39 : vector<8x512xi1> to vector<8x512xi32>
    %41 = arith.sitofp %40 : vector<8x512xi32> to vector<8x512xf32>
    %42 = arith.addf %36, %41 : vector<8x512xf32>
    %43 = vector.extract_strided_slice %1 {offsets = [0, 7], sizes = [8, 1], strides = [1, 1]} : vector<8x8xi32> to vector<8x1xi32>
    %44 = vector.broadcast %43 : vector<8x1xi32> to vector<8x512xi32>
    %45 = arith.cmpi eq, %0, %44 : vector<8x512xi32>
    %46 = arith.extui %45 : vector<8x512xi1> to vector<8x512xi32>
    %47 = arith.sitofp %46 : vector<8x512xi32> to vector<8x512xf32>
    %48 = arith.addf %42, %47 : vector<8x512xf32>
    %c0_1 = arith.constant 0 : index
    %c0_2 = arith.constant 0 : index
    %49 = vector.load %arg2[%c0_1, %c0_2] : memref<512x128xf32, #tpu.memory_space<vmem>>, vector<512x128xf32>
    %cst = arith.constant dense<0.000000e+00> : vector<8x128xf32>
    %50 = tpu.matmul %48, %49, %cst {dimension_numbers = #tpu.dot_dimension_numbers<[1], [0], [0], [1], [0, 0, 1, 1], [], []>, precision = #tpu.contract_precision<fp32>} : vector<8x512xf32>, vector<512x128xf32>, vector<8x128xf32> -> vector<8x128xf32>
    %c0_3 = arith.constant 0 : index
    %c0_4 = arith.constant 0 : index
    %51 = vector.load %arg3[%c0_3, %c0_4] : memref<8x128xf32, #tpu.memory_space<vmem>>, vector<8x128xf32>
    tpu.vector_store %arg3[%c0_3, %c0_4], %50 {strides = array<i32>} : memref<8x128xf32, #tpu.memory_space<vmem>>, vector<8x128xf32>,
    return
  }
  func.func @transform_0(%arg0: i32) -> (i32, i32) {
    %c0_i32 = arith.constant 0 : i32
    %c0_i32_0 = arith.constant 0 : i32
    return %arg0, %c0_i32 : i32, i32
  }
  func.func @transform_1(%arg0: i32) -> (i32, i32) {
    %c0_i32 = arith.constant 0 : i32
    %c0_i32_0 = arith.constant 0 : i32
    %c0_i32_1 = arith.constant 0 : i32
    return %c0_i32, %c0_i32_0 : i32, i32
  }
  func.func @transform_2(%arg0: i32) -> (i32, i32) {
    %c0_i32 = arith.constant 0 : i32
    %c0_i32_0 = arith.constant 0 : i32
    return %arg0, %c0_i32 : i32, i32
  }
}

</mosaic_0001>

<llo_original>
// kernel: tpu_custom_call.1
$region0: #{tpu_custom_call.1}
  #allocation0 [shape = 'u32[]', space=smem, size = 0x4, offset = 0x4, fixed_abs, tag = 'smem constant byte address 0x4 - core index']
  #allocation1 [shape = 'u32[72,128]{1,0:T(1,128)}', space=vmem, size = 0x9000, scoped, tag = 'internal scratch']
  %s0 = inlined_call_operand.hbm [shape: s32[8,8], index: 0, kind: input, shape index: {}]
  %s1 = inlined_call_operand.hbm [shape: f32[512,128], index: 1, kind: input, shape index: {}]
  %s2 = inlined_call_operand.hbm [shape: f32[8,128], index: 2, kind: output, shape index: {}]
  %s3 = sld [smem:[#allocation0]]
  $region26: #{tpu_custom_call.1} parent=0
    _
  %s5 = ssub.s32 1, %s3
  %s6 = scalar_select 0, %s5, %s3
  $region1: #{tpu_custom_call.1} parent=0
    #allocation2 [shape = 'u8[4096]{0}', space=vmem, size = 0x1000, scoped, tag = 'input window, operand 0, single buffered']
    #allocation3 [shape = 's32[1]{0}', space=sflag, size = 0x4, scoped, tag = 'scoped memory for tpu_custom_call.1']
    #allocation4 [shape = 's32[1]{0}', space=sflag, size = 0x4, scoped, tag = 'scoped memory for tpu_custom_call.1']
    #allocation5 [shape = 'u8[262144]{0}', space=vmem, size = 0x40000, scoped, tag = 'input window, operand 1, single buffered']
    #allocation6 [shape = 's32[1]{0}', space=sflag, size = 0x4, scoped, tag = 'scoped memory for tpu_custom_call.1']
    #allocation7 [shape = 'u8[4096]{0}', space=vmem, size = 0x1000, scoped, tag = 'output window, operand 0, single buffered']
    %7 = vsyncpa [#allocation3], 0
    %8 = vsyncpa [#allocation6], 0
    %9 = vsyncpa [#allocation4], 0
    // Predicated region
    $region2: #{tpu_custom_call.1} parent=1 // pred_check
      _
    $region3: #{tpu_custom_call.1} parent=1 // pred_check_branch
      %11 = sbr.rel (0) target = $region5
    $region4: #{tpu_custom_call.1} parent=1 // pred_region
      %13 = vsyncadd [#allocation3], 0
      %s15 = sshll.u32 %s0, 4
      %s16 = int_to_ptr.hbm [resolvable:$true] %s15
      %s17 = sshll.u32 [#allocation2], 4
      %s18 = int_to_ptr.vmem [resolvable:$true] %s17
      %20 = dma.hbm_to_vmem [thread:$0]  %s16, 128, %s18, [#allocation3]
    $region5: #{tpu_custom_call.1} parent=1 // pred_fallthru
      _
    // Predicated region
    $region6: #{tpu_custom_call.1} parent=1 // pred_check
      _
    $region7: #{tpu_custom_call.1} parent=1 // pred_check_branch
      %22 = sbr.rel (0) target = $region9
    $region8: #{tpu_custom_call.1} parent=1 // pred_region
      %24 = vsyncadd [#allocation6], 0
      %s25 = sshll.u32 %s1, 4
      %s26 = int_to_ptr.hbm [resolvable:$true] %s25
      %s27 = sshll.u32 [#allocation5], 4
      %s28 = int_to_ptr.vmem [resolvable:$true] %s27
      %33 = dma.hbm_to_vmem [thread:$0]  %s26, 8192, %s28, [#allocation6], 128, 128, 8
    $region9: #{tpu_custom_call.1} parent=1 // pred_fallthru
      _
    // Predicated region
    $region10: #{tpu_custom_call.1} parent=1 // pred_check
      _
    $region11: #{tpu_custom_call.1} parent=1 // pred_check_branch
      %35 = sbr.rel (0) target = $region13
    $region12: #{tpu_custom_call.1} parent=1 // pred_region
      %37 = dma.done [#allocation3], 128
    $region13: #{tpu_custom_call.1} parent=1 // pred_fallthru
      _
    // Predicated region
    $region14: #{tpu_custom_call.1} parent=1 // pred_check
      _
    $region15: #{tpu_custom_call.1} parent=1 // pred_check_branch
      %39 = sbr.rel (0) target = $region17
    $region16: #{tpu_custom_call.1} parent=1 // pred_region
      %41 = dma.done [#allocation6], 8192
    $region17: #{tpu_custom_call.1} parent=1 // pred_fallthru
      _
    %v42 = vlaneseq
    %v43 = vand.u32 %v42, 127
    %v44 = vadd.s32 %v43, 128
    %v45 = vadd.s32 %v43, 256
    %v46 = vadd.s32 %v43, 384
    %v47 = vld [vmem:[#allocation2] sm:$0xff]
    %48 = vset.pattern.permute.xlu0 0
    %49 = vperm.xlu0 %48, %v47
    %v50 = vpop.permute.xlu0 %49
    %vm51 = vcmp.eq.s32.totalorder %v43, %v50
    %vm52 = vcmp.eq.s32.totalorder %v44, %v50
    %vm53 = vcmp.eq.s32.totalorder %v45, %v50
    %vm54 = vcmp.eq.s32.totalorder %v46, %v50
    %v55 = vsel %vm51, 1, 0
    %v56 = vsel %vm52, 1, 0
    %v57 = vsel %vm53, 1, 0
    %v58 = vsel %vm54, 1, 0
    %v59 = vcvt.s32.f32 %v55
    %v60 = vcvt.s32.f32 %v56
    %v61 = vcvt.s32.f32 %v57
    %v62 = vcvt.s32.f32 %v58
    %63 = vset.pattern.permute.xlu0 1
    %64 = vperm.xlu0 %63, %v47
    %v65 = vpop.permute.xlu0 %64
    %vm66 = vcmp.eq.s32.totalorder %v43, %v65
    %vm67 = vcmp.eq.s32.totalorder %v44, %v65
    %vm68 = vcmp.eq.s32.totalorder %v45, %v65
    %vm69 = vcmp.eq.s32.totalorder %v46, %v65
    %v70 = vsel %vm66, 1, 0
    %v71 = vsel %vm67, 1, 0
    %v72 = vsel %vm68, 1, 0
    %v73 = vsel %vm69, 1, 0
    %v74 = vcvt.s32.f32 %v70
    %v75 = vcvt.s32.f32 %v71
    %v76 = vcvt.s32.f32 %v72
    %v77 = vcvt.s32.f32 %v73
    %v78 = vadd.f32 %v59, %v74
    %v79 = vadd.f32 %v60, %v75
    %v80 = vadd.f32 %v61, %v76
    %v81 = vadd.f32 %v62, %v77
    %82 = vset.pattern.permute.xlu0 2
    %83 = vperm.xlu0 %82, %v47
    %v84 = vpop.permute.xlu0 %83
    %vm85 = vcmp.eq.s32.totalorder %v43, %v84
    %vm86 = vcmp.eq.s32.totalorder %v44, %v84
    %vm87 = vcmp.eq.s32.totalorder %v45, %v84
    %vm88 = vcmp.eq.s32.totalorder %v46, %v84
    %v89 = vsel %vm85, 1, 0
    %v90 = vsel %vm86, 1, 0
    %v91 = vsel %vm87, 1, 0
    %v92 = vsel %vm88, 1, 0
    %v93 = vcvt.s32.f32 %v89
    %v94 = vcvt.s32.f32 %v90
    %v95 = vcvt.s32.f32 %v91
    %v96 = vcvt.s32.f32 %v92
    %v97 = vadd.f32 %v78, %v93
    %v98 = vadd.f32 %v79, %v94
    %v99 = vadd.f32 %v80, %v95
    %v100 = vadd.f32 %v81, %v96
    %101 = vset.pattern.permute.xlu0 3
    %102 = vperm.xlu0 %101, %v47
    %v103 = vpop.permute.xlu0 %102
    %vm104 = vcmp.eq.s32.totalorder %v43, %v103
    %vm105 = vcmp.eq.s32.totalorder %v44, %v103
    %vm106 = vcmp.eq.s32.totalorder %v45, %v103
    %vm107 = vcmp.eq.s32.totalorder %v46, %v103
    %v108 = vsel %vm104, 1, 0
    %v109 = vsel %vm105, 1, 0
    %v110 = vsel %vm106, 1, 0
    %v111 = vsel %vm107, 1, 0
    %v112 = vcvt.s32.f32 %v108
    %v113 = vcvt.s32.f32 %v109
    %v114 = vcvt.s32.f32 %v110
    %v115 = vcvt.s32.f32 %v111
    %v116 = vadd.f32 %v97, %v112
    %v117 = vadd.f32 %v98, %v113
    %v118 = vadd.f32 %v99, %v114
    %v119 = vadd.f32 %v100, %v115
    %120 = vset.pattern.permute.xlu0 4
    %121 = vperm.xlu0 %120, %v47
    %v122 = vpop.permute.xlu0 %121
    %vm123 = vcmp.eq.s32.totalorder %v43, %v122
    %vm124 = vcmp.eq.s32.totalorder %v44, %v122
    %vm125 = vcmp.eq.s32.totalorder %v45, %v122
    %vm126 = vcmp.eq.s32.totalorder %v46, %v122
    %v127 = vsel %vm123, 1, 0
    %v128 = vsel %vm124, 1, 0
    %v129 = vsel %vm125, 1, 0
    %v130 = vsel %vm126, 1, 0
    %v131 = vcvt.s32.f32 %v127
    %v132 = vcvt.s32.f32 %v128
    %v133 = vcvt.s32.f32 %v129
    %v134 = vcvt.s32.f32 %v130
    %v135 = vadd.f32 %v116, %v131
    %v136 = vadd.f32 %v117, %v132
    %v137 = vadd.f32 %v118, %v133
    %v138 = vadd.f32 %v119, %v134
    %139 = vset.pattern.permute.xlu0 5
    %140 = vperm.xlu0 %139, %v47
    %v141 = vpop.permute.xlu0 %140
    %vm142 = vcmp.eq.s32.totalorder %v43, %v141
    %vm143 = vcmp.eq.s32.totalorder %v44, %v141
    %vm144 = vcmp.eq.s32.totalorder %v45, %v141
    %vm145 = vcmp.eq.s32.totalorder %v46, %v141
    %v146 = vsel %vm142, 1, 0
    %v147 = vsel %vm143, 1, 0
    %v148 = vsel %vm144, 1, 0
    %v149 = vsel %vm145, 1, 0
    %v150 = vcvt.s32.f32 %v146
    %v151 = vcvt.s32.f32 %v147
    %v152 = vcvt.s32.f32 %v148
    %v153 = vcvt.s32.f32 %v149
    %v154 = vadd.f32 %v135, %v150
    %v155 = vadd.f32 %v136, %v151
    %v156 = vadd.f32 %v137, %v152
    %v157 = vadd.f32 %v138, %v153
    %158 = vset.pattern.permute.xlu0 6
    %159 = vperm.xlu0 %158, %v47
    %v160 = vpop.permute.xlu0 %159
    %vm161 = vcmp.eq.s32.totalorder %v43, %v160
    %vm162 = vcmp.eq.s32.totalorder %v44, %v160
    %vm163 = vcmp.eq.s32.totalorder %v45, %v160
    %vm164 = vcmp.eq.s32.totalorder %v46, %v160
    %v165 = vsel %vm161, 1, 0
    %v166 = vsel %vm162, 1, 0
    %v167 = vsel %vm163, 1, 0
    %v168 = vsel %vm164, 1, 0
    %v169 = vcvt.s32.f32 %v165
    %v170 = vcvt.s32.f32 %v166
    %v171 = vcvt.s32.f32 %v167
    %v172 = vcvt.s32.f32 %v168
    %v173 = vadd.f32 %v154, %v169
    %v174 = vadd.f32 %v155, %v170
    %v175 = vadd.f32 %v156, %v171
    %v176 = vadd.f32 %v157, %v172
    %177 = vset.pattern.permute.xlu0 7
    %178 = vperm.xlu0 %177, %v47
    %v179 = vpop.permute.xlu0 %178
    %vm180 = vcmp.eq.s32.totalorder %v43, %v179
    %vm181 = vcmp.eq.s32.totalorder %v44, %v179
    %vm182 = vcmp.eq.s32.totalorder %v45, %v179
    %vm183 = vcmp.eq.s32.totalorder %v46, %v179
    %v184 = vsel %vm180, 1, 0
    %v185 = vsel %vm181, 1, 0
    %v186 = vsel %vm182, 1, 0
    %v187 = vsel %vm183, 1, 0
    %v188 = vcvt.s32.f32 %v184
    %v189 = vcvt.s32.f32 %v185
    %v190 = vcvt.s32.f32 %v186
    %v191 = vcvt.s32.f32 %v187
    %v192 = vadd.f32 %v173, %v188
    %v193 = vadd.f32 %v174, %v189
    %v194 = vadd.f32 %v175, %v190
    %v195 = vadd.f32 %v176, %v191
    %v196 = vld [vmem:[#allocation5] sm:$0xff]
    %v197 = vld [vmem:[#allocation5 + $0x8] sm:$0xff]
    %v198 = vld [vmem:[#allocation5 + $0x10] sm:$0xff]
    %v199 = vld [vmem:[#allocation5 + $0x18] sm:$0xff]
    %v200 = vld [vmem:[#allocation5 + $0x20] sm:$0xff]
    %v201 = vld [vmem:[#allocation5 + $0x28] sm:$0xff]
    %v202 = vld [vmem:[#allocation5 + $0x30] sm:$0xff]
    %v203 = vld [vmem:[#allocation5 + $0x38] sm:$0xff]
    %v204 = vld [vmem:[#allocation5 + $0x40] sm:$0xff]
    %v205 = vld [vmem:[#allocation5 + $0x48] sm:$0xff]
    %v206 = vld [vmem:[#allocation5 + $0x50] sm:$0xff]
    %v207 = vld [vmem:[#allocation5 + $0x58] sm:$0xff]
    %v208 = vld [vmem:[#allocation5 + $0x60] sm:$0xff]
    %v209 = vld [vmem:[#allocation5 + $0x68] sm:$0xff]
    %v210 = vld [vmem:[#allocation5 + $0x70] sm:$0xff]
    %v211 = vld [vmem:[#allocation5 + $0x78] sm:$0xff]
    %v212 = vld [vmem:[#allocation5 + $0x80] sm:$0xff]
    %v213 = vld [vmem:[#allocation5 + $0x88] sm:$0xff]
    %v214 = vld [vmem:[#allocation5 + $0x90] sm:$0xff]
    %v215 = vld [vmem:[#allocation5 + $0x98] sm:$0xff]
    %v216 = vld [vmem:[#allocation5 + $0xa0] sm:$0xff]
    %v217 = vld [vmem:[#allocation5 + $0xa8] sm:$0xff]
    %v218 = vld [vmem:[#allocation5 + $0xb0] sm:$0xff]
    %v219 = vld [vmem:[#allocation5 + $0xb8] sm:$0xff]
    %v220 = vld [vmem:[#allocation5 + $0xc0] sm:$0xff]
    %v221 = vld [vmem:[#allocation5 + $0xc8] sm:$0xff]
    %v222 = vld [vmem:[#allocation5 + $0xd0] sm:$0xff]
    %v223 = vld [vmem:[#allocation5 + $0xd8] sm:$0xff]
    %v224 = vld [vmem:[#allocation5 + $0xe0] sm:$0xff]
    %v225 = vld [vmem:[#allocation5 + $0xe8] sm:$0xff]
    %v226 = vld [vmem:[#allocation5 + $0xf0] sm:$0xff]
    %v227 = vld [vmem:[#allocation5 + $0xf8] sm:$0xff]
    %v228 = vld [vmem:[#allocation5 + $0x100] sm:$0xff]
    %v229 = vld [vmem:[#allocation5 + $0x108] sm:$0xff]
    %v230 = vld [vmem:[#allocation5 + $0x110] sm:$0xff]
    %v231 = vld [vmem:[#allocation5 + $0x118] sm:$0xff]
    %v232 = vld [vmem:[#allocation5 + $0x120] sm:$0xff]
    %v233 = vld [vmem:[#allocation5 + $0x128] sm:$0xff]
    %v234 = vld [vmem:[#allocation5 + $0x130] sm:$0xff]
    %v235 = vld [vmem:[#allocation5 + $0x138] sm:$0xff]
    %v236 = vld [vmem:[#allocation5 + $0x140] sm:$0xff]
    %v237 = vld [vmem:[#allocation5 + $0x148] sm:$0xff]
    %v238 = vld [vmem:[#allocation5 + $0x150] sm:$0xff]
    %v239 = vld [vmem:[#allocation5 + $0x158] sm:$0xff]
    %v240 = vld [vmem:[#allocation5 + $0x160] sm:$0xff]
    %v241 = vld [vmem:[#allocation5 + $0x168] sm:$0xff]
    %v242 = vld [vmem:[#allocation5 + $0x170] sm:$0xff]
    %v243 = vld [vmem:[#allocation5 + $0x178] sm:$0xff]
    %v244 = vld [vmem:[#allocation5 + $0x180] sm:$0xff]
    %v245 = vld [vmem:[#allocation5 + $0x188] sm:$0xff]
    %v246 = vld [vmem:[#allocation5 + $0x190] sm:$0xff]
    %v247 = vld [vmem:[#allocation5 + $0x198] sm:$0xff]
    %v248 = vld [vmem:[#allocation5 + $0x1a0] sm:$0xff]
    %v249 = vld [vmem:[#allocation5 + $0x1a8] sm:$0xff]
    %v250 = vld [vmem:[#allocation5 + $0x1b0] sm:$0xff]
    %v251 = vld [vmem:[#allocation5 + $0x1b8] sm:$0xff]
    %v252 = vld [vmem:[#allocation5 + $0x1c0] sm:$0xff]
    %v253 = vld [vmem:[#allocation5 + $0x1c8] sm:$0xff]
    %v254 = vld [vmem:[#allocation5 + $0x1d0] sm:$0xff]
    %v255 = vld [vmem:[#allocation5 + $0x1d8] sm:$0xff]
    %v256 = vld [vmem:[#allocation5 + $0x1e0] sm:$0xff]
    %v257 = vld [vmem:[#allocation5 + $0x1e8] sm:$0xff]
    %v258 = vld [vmem:[#allocation5 + $0x1f0] sm:$0xff]
    %v259 = vld [vmem:[#allocation5 + $0x1f8] sm:$0xff]
    %v260 = vand.u32 %v211, 4294901760
    %261 = vmatpush.msra.mxu0 %v260
    %v262 = vand.u32 %v210, 4294901760
    %263 = vmatpush.msra.mxu0 %v262
    %v264 = vand.u32 %v209, 4294901760
    %265 = vmatpush.msra.mxu0 %v264
    %v266 = vand.u32 %v208, 4294901760
    %267 = vmatpush.msra.mxu0 %v266
    %v268 = vand.u32 %v207, 4294901760
    %269 = vmatpush.msra.mxu0 %v268
    %v270 = vand.u32 %v206, 4294901760
    %271 = vmatpush.msra.mxu0 %v270
    %v272 = vand.u32 %v205, 4294901760
    %273 = vmatpush.msra.mxu0 %v272
    %v274 = vand.u32 %v204, 4294901760
    %275 = vmatpush.msra.mxu0 %v274
    %v276 = vand.u32 %v203, 4294901760
    %277 = vmatpush.msra.mxu0 %v276
    %v278 = vand.u32 %v202, 4294901760
    %279 = vmatpush.msra.mxu0 %v278
    %v280 = vand.u32 %v201, 4294901760
    %281 = vmatpush.msra.mxu0 %v280
    %v282 = vand.u32 %v200, 4294901760
    %283 = vmatpush.msra.mxu0 %v282
    %v284 = vand.u32 %v199, 4294901760
    %285 = vmatpush.msra.mxu0 %v284
    %v286 = vand.u32 %v198, 4294901760
    %287 = vmatpush.msra.mxu0 %v286
    %v288 = vand.u32 %v197, 4294901760
    %289 = vmatpush.msra.mxu0 %v288
    %v290 = vand.u32 %v196, 4294901760
    %291 = vmatpush.msra.mxu0 %v290
    %v292 = vand.u32 %v192, 4294901760
    %v293 = vsub.f32 %v192, %v292
    %v294 = vand.u32 %v293, 4294901760
    %v295 = vsub.f32 %v293, %v294
    %v296 = vand.u32 %v295, 4294901760
    %297 = vmatmul.f32.gmra.mxu0 %v296
    %v298 = vpop.f32.mrf.mxu0
    %v299 = vadd.f32 0.0, %v298
    %300 = vdwg.mxu0
    %v301 = vand.u32 %v211, 4294901760
    %v302 = vsub.f32 %v211, %v301
    %v303 = vand.u32 %v302, 4294901760
    %v304 = vsub.f32 %v302, %v303
    %v305 = vand.u32 %v304, 4294901760
    %306 = vmatpush.msra.mxu0 %v305
    %v307 = vand.u32 %v210, 4294901760
    %v308 = vsub.f32 %v210, %v307
    %v309 = vand.u32 %v308, 4294901760
    %v310 = vsub.f32 %v308, %v309
    %v311 = vand.u32 %v310, 4294901760
    %312 = vmatpush.msra.mxu0 %v311
    %v313 = vand.u32 %v209, 4294901760
    %v314 = vsub.f32 %v209, %v313
    %v315 = vand.u32 %v314, 4294901760
    %v316 = vsub.f32 %v314, %v315
    %v317 = vand.u32 %v316, 4294901760
    %318 = vmatpush.msra.mxu0 %v317
    %v319 = vand.u32 %v208, 4294901760
    %v320 = vsub.f32 %v208, %v319
    %v321 = vand.u32 %v320, 4294901760
    %v322 = vsub.f32 %v320, %v321
    %v323 = vand.u32 %v322, 4294901760
    %324 = vmatpush.msra.mxu0 %v323
    %v325 = vand.u32 %v207, 4294901760
    %v326 = vsub.f32 %v207, %v325
    %v327 = vand.u32 %v326, 4294901760
    %v328 = vsub.f32 %v326, %v327
    %v329 = vand.u32 %v328, 4294901760
    %330 = vmatpush.msra.mxu0 %v329
    %v331 = vand.u32 %v206, 4294901760
    %v332 = vsub.f32 %v206, %v331
    %v333 = vand.u32 %v332, 4294901760
    %v334 = vsub.f32 %v332, %v333
    %v335 = vand.u32 %v334, 4294901760
    %336 = vmatpush.msra.mxu0 %v335
    %v337 = vand.u32 %v205, 4294901760
    %v338 = vsub.f32 %v205, %v337
    %v339 = vand.u32 %v338, 4294901760
    %v340 = vsub.f32 %v338, %v339
    %v341 = vand.u32 %v340, 4294901760
    %342 = vmatpush.msra.mxu0 %v341
    %v343 = vand.u32 %v204, 4294901760
    %v344 = vsub.f32 %v204, %v343
    %v345 = vand.u32 %v344, 4294901760
    %v346 = vsub.f32 %v344, %v345
    %v347 = vand.u32 %v346, 4294901760
    %348 = vmatpush.msra.mxu0 %v347
    %v349 = vand.u32 %v203, 4294901760
    %v350 = vsub.f32 %v203, %v349
    %v351 = vand.u32 %v350, 4294901760
    %v352 = vsub.f32 %v350, %v351
    %v353 = vand.u32 %v352, 4294901760
    %354 = vmatpush.msra.mxu0 %v353
    %v355 = vand.u32 %v202, 4294901760
    %v356 = vsub.f32 %v202, %v355
    %v357 = vand.u32 %v356, 4294901760
    %v358 = vsub.f32 %v356, %v357
    %v359 = vand.u32 %v358, 4294901760
    %360 = vmatpush.msra.mxu0 %v359
    %v361 = vand.u32 %v201, 4294901760
    %v362 = vsub.f32 %v201, %v361
    %v363 = vand.u32 %v362, 4294901760
    %v364 = vsub.f32 %v362, %v363
    %v365 = vand.u32 %v364, 4294901760
    %366 = vmatpush.msra.mxu0 %v365
    %v367 = vand.u32 %v200, 4294901760
    %v368 = vsub.f32 %v200, %v367
    %v369 = vand.u32 %v368, 4294901760
    %v370 = vsub.f32 %v368, %v369
    %v371 = vand.u32 %v370, 4294901760
    %372 = vmatpush.msra.mxu0 %v371
    %v373 = vand.u32 %v199, 4294901760
    %v374 = vsub.f32 %v199, %v373
    %v375 = vand.u32 %v374, 4294901760
    %v376 = vsub.f32 %v374, %v375
    %v377 = vand.u32 %v376, 4294901760
    %378 = vmatpush.msra.mxu0 %v377
    %v379 = vand.u32 %v198, 4294901760
    %v380 = vsub.f32 %v198, %v379
    %v381 = vand.u32 %v380, 4294901760
    %v382 = vsub.f32 %v380, %v381
    %v383 = vand.u32 %v382, 4294901760
    %384 = vmatpush.msra.mxu0 %v383
    %v385 = vand.u32 %v197, 4294901760
    %v386 = vsub.f32 %v197, %v385
    %v387 = vand.u32 %v386, 4294901760
    %v388 = vsub.f32 %v386, %v387
    %v389 = vand.u32 %v388, 4294901760
    %390 = vmatpush.msra.mxu0 %v389
    %v391 = vand.u32 %v196, 4294901760
    %v392 = vsub.f32 %v196, %v391
    %v393 = vand.u32 %v392, 4294901760
    %v394 = vsub.f32 %v392, %v393
    %v395 = vand.u32 %v394, 4294901760
    %396 = vmatpush.msra.mxu0 %v395
    %v397 = vand.u32 %v192, 4294901760
    %398 = vmatmul.f32.gmra.mxu0 %v397
    %v399 = vpop.f32.mrf.mxu0
    %v400 = vadd.f32 %v299, %v399
    %401 = vdwg.mxu0
    %v402 = vand.u32 %v211, 4294901760
    %v403 = vsub.f32 %v211, %v402
    %404 = vmatpush.msra.mxu0 %v403
    %v405 = vand.u32 %v210, 4294901760
    %v406 = vsub.f32 %v210, %v405
    %407 = vmatpush.msra.mxu0 %v406
    %v408 = vand.u32 %v209, 4294901760
    %v409 = vsub.f32 %v209, %v408
    %410 = vmatpush.msra.mxu0 %v409
    %v411 = vand.u32 %v208, 4294901760
    %v412 = vsub.f32 %v208, %v411
    %413 = vmatpush.msra.mxu0 %v412
    %v414 = vand.u32 %v207, 4294901760
    %v415 = vsub.f32 %v207, %v414
    %416 = vmatpush.msra.mxu0 %v415
    %v417 = vand.u32 %v206, 4294901760
    %v418 = vsub.f32 %v206, %v417
    %419 = vmatpush.msra.mxu0 %v418
    %v420 = vand.u32 %v205, 4294901760
    %v421 = vsub.f32 %v205, %v420
    %422 = vmatpush.msra.mxu0 %v421
    %v423 = vand.u32 %v204, 4294901760
    %v424 = vsub.f32 %v204, %v423
    %425 = vmatpush.msra.mxu0 %v424
    %v426 = vand.u32 %v203, 4294901760
    %v427 = vsub.f32 %v203, %v426
    %428 = vmatpush.msra.mxu0 %v427
    %v429 = vand.u32 %v202, 4294901760
    %v430 = vsub.f32 %v202, %v429
    %431 = vmatpush.msra.mxu0 %v430
    %v432 = vand.u32 %v201, 4294901760
    %v433 = vsub.f32 %v201, %v432
    %434 = vmatpush.msra.mxu0 %v433
    %v435 = vand.u32 %v200, 4294901760
    %v436 = vsub.f32 %v200, %v435
    %437 = vmatpush.msra.mxu0 %v436
    %v438 = vand.u32 %v199, 4294901760
    %v439 = vsub.f32 %v199, %v438
    %440 = vmatpush.msra.mxu0 %v439
    %v441 = vand.u32 %v198, 4294901760
    %v442 = vsub.f32 %v198, %v441
    %443 = vmatpush.msra.mxu0 %v442
    %v444 = vand.u32 %v197, 4294901760
    %v445 = vsub.f32 %v197, %v444
    %446 = vmatpush.msra.mxu0 %v445
    %v447 = vand.u32 %v196, 4294901760
    %v448 = vsub.f32 %v196, %v447
    %449 = vmatpush.msra.mxu0 %v448
    %v450 = vand.u32 %v192, 4294901760
    %v451 = vsub.f32 %v192, %v450
    %452 = vmatmul.f32.gmra.mxu0 %v451
    %v453 = vpop.f32.mrf.mxu0
    %v454 = vadd.f32 %v400, %v453
    %455 = vdwg.mxu0
    %v456 = vand.u32 %v211, 4294901760
    %457 = vmatpush.msra.mxu0 %v456
    %v458 = vand.u32 %v210, 4294901760
    %459 = vmatpush.msra.mxu0 %v458
    %v460 = vand.u32 %v209, 4294901760
    %461 = vmatpush.msra.mxu0 %v460
    %v462 = vand.u32 %v208, 4294901760
    %463 = vmatpush.msra.mxu0 %v462
    %v464 = vand.u32 %v207, 4294901760
    %465 = vmatpush.msra.mxu0 %v464
    %v466 = vand.u32 %v206, 4294901760
    %467 = vmatpush.msra.mxu0 %v466
    %v468 = vand.u32 %v205, 4294901760
    %469 = vmatpush.msra.mxu0 %v468
    %v470 = vand.u32 %v204, 4294901760
    %471 = vmatpush.msra.mxu0 %v470
    %v472 = vand.u32 %v203, 4294901760
    %473 = vmatpush.msra.mxu0 %v472
    %v474 = vand.u32 %v202, 4294901760
    %475 = vmatpush.msra.mxu0 %v474
    %v476 = vand.u32 %v201, 4294901760
    %477 = vmatpush.msra.mxu0 %v476
    %v478 = vand.u32 %v200, 4294901760
    %479 = vmatpush.msra.mxu0 %v478
    %v480 = vand.u32 %v199, 4294901760
    %481 = vmatpush.msra.mxu0 %v480
    %v482 = vand.u32 %v198, 4294901760
    %483 = vmatpush.msra.mxu0 %v482
    %v484 = vand.u32 %v197, 4294901760
    %485 = vmatpush.msra.mxu0 %v484
    %v486 = vand.u32 %v196, 4294901760
    %487 = vmatpush.msra.mxu0 %v486
    %v488 = vand.u32 %v192, 4294901760
    %v489 = vsub.f32 %v192, %v488
    %v490 = vand.u32 %v489, 4294901760
    %491 = vmatmul.f32.gmra.mxu0 %v490
    %v492 = vpop.f32.mrf.mxu0
    %v493 = vadd.f32 %v454, %v492
    %494 = vdwg.mxu0
    %v495 = vand.u32 %v211, 4294901760
    %v496 = vsub.f32 %v211, %v495
    %v497 = vand.u32 %v496, 4294901760
    %498 = vmatpush.msra.mxu0 %v497
    %v499 = vand.u32 %v210, 4294901760
    %v500 = vsub.f32 %v210, %v499
    %v501 = vand.u32 %v500, 4294901760
    %502 = vmatpush.msra.mxu0 %v501
    %v503 = vand.u32 %v209, 4294901760
    %v504 = vsub.f32 %v209, %v503
    %v505 = vand.u32 %v504, 4294901760
    %506 = vmatpush.msra.mxu0 %v505
    %v507 = vand.u32 %v208, 4294901760
    %v508 = vsub.f32 %v208, %v507
    %v509 = vand.u32 %v508, 4294901760
    %510 = vmatpush.msra.mxu0 %v509
    %v511 = vand.u32 %v207, 4294901760
    %v512 = vsub.f32 %v207, %v511
    %v513 = vand.u32 %v512, 4294901760
    %514 = vmatpush.msra.mxu0 %v513
    %v515 = vand.u32 %v206, 4294901760
    %v516 = vsub.f32 %v206, %v515
    %v517 = vand.u32 %v516, 4294901760
    %518 = vmatpush.msra.mxu0 %v517
    %v519 = vand.u32 %v205, 4294901760
    %v520 = vsub.f32 %v205, %v519
    %v521 = vand.u32 %v520, 4294901760
    %522 = vmatpush.msra.mxu0 %v521
    %v523 = vand.u32 %v204, 4294901760
    %v524 = vsub.f32 %v204, %v523
    %v525 = vand.u32 %v524, 4294901760
    %526 = vmatpush.msra.mxu0 %v525
    %v527 = vand.u32 %v203, 4294901760
    %v528 = vsub.f32 %v203, %v527
    %v529 = vand.u32 %v528, 4294901760
    %530 = vmatpush.msra.mxu0 %v529
    %v531 = vand.u32 %v202, 4294901760
    %v532 = vsub.f32 %v202, %v531
    %v533 = vand.u32 %v532, 4294901760
    %534 = vmatpush.msra.mxu0 %v533
    %v535 = vand.u32 %v201, 4294901760
    %v536 = vsub.f32 %v201, %v535
    %v537 = vand.u32 %v536, 4294901760
    %538 = vmatpush.msra.mxu0 %v537
    %v539 = vand.u32 %v200, 4294901760
    %v540 = vsub.f32 %v200, %v539
    %v541 = vand.u32 %v540, 4294901760
    %542 = vmatpush.msra.mxu0 %v541
    %v543 = vand.u32 %v199, 4294901760
    %v544 = vsub.f32 %v199, %v543
    %v545 = vand.u32 %v544, 4294901760
    %546 = vmatpush.msra.mxu0 %v545
    %v547 = vand.u32 %v198, 4294901760
    %v548 = vsub.f32 %v198, %v547
    %v549 = vand.u32 %v548, 4294901760
    %550 = vmatpush.msra.mxu0 %v549
    %v551 = vand.u32 %v197, 4294901760
    %v552 = vsub.f32 %v197, %v551
    %v553 = vand.u32 %v552, 4294901760
    %554 = vmatpush.msra.mxu0 %v553
    %v555 = vand.u32 %v196, 4294901760
    %v556 = vsub.f32 %v196, %v555
    %v557 = vand.u32 %v556, 4294901760
    %558 = vmatpush.msra.mxu0 %v557
    %v559 = vand.u32 %v192, 4294901760
    %560 = vmatmul.f32.gmra.mxu0 %v559
    %v561 = vpop.f32.mrf.mxu0
    %v562 = vadd.f32 %v493, %v561
    %563 = vdwg.mxu0
    %v564 = vand.u32 %v211, 4294901760
    %565 = vmatpush.msra.mxu0 %v564
    %v566 = vand.u32 %v210, 4294901760
    %567 = vmatpush.msra.mxu0 %v566
    %v568 = vand.u32 %v209, 4294901760
    %569 = vmatpush.msra.mxu0 %v568
    %v570 = vand.u32 %v208, 4294901760
    %571 = vmatpush.msra.mxu0 %v570
    %v572 = vand.u32 %v207, 4294901760
    %573 = vmatpush.msra.mxu0 %v572
    %v574 = vand.u32 %v206, 4294901760
    %575 = vmatpush.msra.mxu0 %v574
    %v576 = vand.u32 %v205, 4294901760
    %577 = vmatpush.msra.mxu0 %v576
    %v578 = vand.u32 %v204, 4294901760
    %579 = vmatpush.msra.mxu0 %v578
    %v580 = vand.u32 %v203, 4294901760
    %581 = vmatpush.msra.mxu0 %v580
    %v582 = vand.u32 %v202, 4294901760
    %583 = vmatpush.msra.mxu0 %v582
    %v584 = vand.u32 %v201, 4294901760
    %585 = vmatpush.msra.mxu0 %v584
    %v586 = vand.u32 %v200, 4294901760
    %587 = vmatpush.msra.mxu0 %v586
    %v588 = vand.u32 %v199, 4294901760
    %589 = vmatpush.msra.mxu0 %v588
    %v590 = vand.u32 %v198, 4294901760
    %591 = vmatpush.msra.mxu0 %v590
    %v592 = vand.u32 %v197, 4294901760
    %593 = vmatpush.msra.mxu0 %v592
    %v594 = vand.u32 %v196, 4294901760
    %595 = vmatpush.msra.mxu0 %v594
    %v596 = vand.u32 %v192, 4294901760
    %597 = vmatmul.f32.gmra.mxu0 %v596
    %v598 = vpop.f32.mrf.mxu0
    %v599 = vadd.f32 %v562, %v598
    %600 = vdwg.mxu0
    %v601 = vand.u32 %v227, 4294901760
    %602 = vmatpush.msra.mxu0 %v601
    %v603 = vand.u32 %v226, 4294901760
    %604 = vmatpush.msra.mxu0 %v603
    %v605 = vand.u32 %v225, 4294901760
    %606 = vmatpush.msra.mxu0 %v605
    %v607 = vand.u32 %v224, 4294901760
    %608 = vmatpush.msra.mxu0 %v607
    %v609 = vand.u32 %v223, 4294901760
    %610 = vmatpush.msra.mxu0 %v609
    %v611 = vand.u32 %v222, 4294901760
    %612 = vmatpush.msra.mxu0 %v611
    %v613 = vand.u32 %v221, 4294901760
    %614 = vmatpush.msra.mxu0 %v613
    %v615 = vand.u32 %v220, 4294901760
    %616 = vmatpush.msra.mxu0 %v615
    %v617 = vand.u32 %v219, 4294901760
    %618 = vmatpush.msra.mxu0 %v617
    %v619 = vand.u32 %v218, 4294901760
    %620 = vmatpush.msra.mxu0 %v619
    %v621 = vand.u32 %v217, 4294901760
    %622 = vmatpush.msra.mxu0 %v621
    %v623 = vand.u32 %v216, 4294901760
    %624 = vmatpush.msra.mxu0 %v623
    %v625 = vand.u32 %v215, 4294901760
    %626 = vmatpush.msra.mxu0 %v625
    %v627 = vand.u32 %v214, 4294901760
    %628 = vmatpush.msra.mxu0 %v627
    %v629 = vand.u32 %v213, 4294901760
    %630 = vmatpush.msra.mxu0 %v629
    %v631 = vand.u32 %v212, 4294901760
    %632 = vmatpush.msra.mxu0 %v631
    %v633 = vand.u32 %v193, 4294901760
    %v634 = vsub.f32 %v193, %v633
    %v635 = vand.u32 %v634, 4294901760
    %v636 = vsub.f32 %v634, %v635
    %v637 = vand.u32 %v636, 4294901760
    %638 = vmatmul.f32.gmra.mxu0 %v637
    %v639 = vpop.f32.mrf.mxu0
    %v640 = vadd.f32 %v599, %v639
    %641 = vdwg.mxu0
    %v642 = vand.u32 %v227, 4294901760
    %v643 = vsub.f32 %v227, %v642
    %v644 = vand.u32 %v643, 4294901760
    %v645 = vsub.f32 %v643, %v644
    %v646 = vand.u32 %v645, 4294901760
    %647 = vmatpush.msra.mxu0 %v646
    %v648 = vand.u32 %v226, 4294901760
    %v649 = vsub.f32 %v226, %v648
    %v650 = vand.u32 %v649, 4294901760
    %v651 = vsub.f32 %v649, %v650
    %v652 = vand.u32 %v651, 4294901760
    %653 = vmatpush.msra.mxu0 %v652
    %v654 = vand.u32 %v225, 4294901760
    %v655 = vsub.f32 %v225, %v654
    %v656 = vand.u32 %v655, 4294901760
    %v657 = vsub.f32 %v655, %v656
    %v658 = vand.u32 %v657, 4294901760
    %659 = vmatpush.msra.mxu0 %v658
    %v660 = vand.u32 %v224, 4294901760
    %v661 = vsub.f32 %v224, %v660
    %v662 = vand.u32 %v661, 4294901760
    %v663 = vsub.f32 %v661, %v662
    %v664 = vand.u32 %v663, 4294901760
    %665 = vmatpush.msra.mxu0 %v664
    %v666 = vand.u32 %v223, 4294901760
    %v667 = vsub.f32 %v223, %v666
    %v668 = vand.u32 %v667, 4294901760
    %v669 = vsub.f32 %v667, %v668
    %v670 = vand.u32 %v669, 4294901760
    %671 = vmatpush.msra.mxu0 %v670
    %v672 = vand.u32 %v222, 4294901760
    %v673 = vsub.f32 %v222, %v672
    %v674 = vand.u32 %v673, 4294901760
    %v675 = vsub.f32 %v673, %v674
    %v676 = vand.u32 %v675, 4294901760
    %677 = vmatpush.msra.mxu0 %v676
    %v678 = vand.u32 %v221, 4294901760
    %v679 = vsub.f32 %v221, %v678
    %v680 = vand.u32 %v679, 4294901760
    %v681 = vsub.f32 %v679, %v680
    %v682 = vand.u32 %v681, 4294901760
    %683 = vmatpush.msra.mxu0 %v682
    %v684 = vand.u32 %v220, 4294901760
    %v685 = vsub.f32 %v220, %v684
    %v686 = vand.u32 %v685, 4294901760
    %v687 = vsub.f32 %v685, %v686
    %v688 = vand.u32 %v687, 4294901760
    %689 = vmatpush.msra.mxu0 %v688
    %v690 = vand.u32 %v219, 4294901760
    %v691 = vsub.f32 %v219, %v690
    %v692 = vand.u32 %v691, 4294901760
    %v693 = vsub.f32 %v691, %v692
    %v694 = vand.u32 %v693, 4294901760
    %695 = vmatpush.msra.mxu0 %v694
    %v696 = vand.u32 %v218, 4294901760
    %v697 = vsub.f32 %v218, %v696
    %v698 = vand.u32 %v697, 4294901760
    %v699 = vsub.f32 %v697, %v698
    %v700 = vand.u32 %v699, 4294901760
    %701 = vmatpush.msra.mxu0 %v700
    %v702 = vand.u32 %v217, 4294901760
    %v703 = vsub.f32 %v217, %v702
    %v704 = vand.u32 %v703, 4294901760
    %v705 = vsub.f32 %v703, %v704
    %v706 = vand.u32 %v705, 4294901760
    %707 = vmatpush.msra.mxu0 %v706
    %v708 = vand.u32 %v216, 4294901760
    %v709 = vsub.f32 %v216, %v708
    %v710 = vand.u32 %v709, 4294901760
    %v711 = vsub.f32 %v709, %v710
    %v712 = vand.u32 %v711, 4294901760
    %713 = vmatpush.msra.mxu0 %v712
    %v714 = vand.u32 %v215, 4294901760
    %v715 = vsub.f32 %v215, %v714
    %v716 = vand.u32 %v715, 4294901760
    %v717 = vsub.f32 %v715, %v716
    %v718 = vand.u32 %v717, 4294901760
    %719 = vmatpush.msra.mxu0 %v718
    %v720 = vand.u32 %v214, 4294901760
    %v721 = vsub.f32 %v214, %v720
    %v722 = vand.u32 %v721, 4294901760
    %v723 = vsub.f32 %v721, %v722
    %v724 = vand.u32 %v723, 4294901760
    %725 = vmatpush.msra.mxu0 %v724
    %v726 = vand.u32 %v213, 4294901760
    %v727 = vsub.f32 %v213, %v726
    %v728 = vand.u32 %v727, 4294901760
    %v729 = vsub.f32 %v727, %v728
    %v730 = vand.u32 %v729, 4294901760
    %731 = vmatpush.msra.mxu0 %v730
    %v732 = vand.u32 %v212, 4294901760
    %v733 = vsub.f32 %v212, %v732
    %v734 = vand.u32 %v733, 4294901760
    %v735 = vsub.f32 %v733, %v734
    %v736 = vand.u32 %v735, 4294901760
    %737 = vmatpush.msra.mxu0 %v736
    %v738 = vand.u32 %v193, 4294901760
    %739 = vmatmul.f32.gmra.mxu0 %v738
    %v740 = vpop.f32.mrf.mxu0
    %v741 = vadd.f32 %v640, %v740
    %742 = vdwg.mxu0
    %v743 = vand.u32 %v227, 4294901760
    %v744 = vsub.f32 %v227, %v743
    %745 = vmatpush.msra.mxu0 %v744
    %v746 = vand.u32 %v226, 4294901760
    %v747 = vsub.f32 %v226, %v746
    %748 = vmatpush.msra.mxu0 %v747
    %v749 = vand.u32 %v225, 4294901760
    %v750 = vsub.f32 %v225, %v749
    %751 = vmatpush.msra.mxu0 %v750
    %v752 = vand.u32 %v224, 4294901760
    %v753 = vsub.f32 %v224, %v752
    %754 = vmatpush.msra.mxu0 %v753
    %v755 = vand.u32 %v223, 4294901760
    %v756 = vsub.f32 %v223, %v755
    %757 = vmatpush.msra.mxu0 %v756
    %v758 = vand.u32 %v222, 4294901760
    %v759 = vsub.f32 %v222, %v758
    %760 = vmatpush.msra.mxu0 %v759
    %v761 = vand.u32 %v221, 4294901760
    %v762 = vsub.f32 %v221, %v761
    %763 = vmatpush.msra.mxu0 %v762
    %v764 = vand.u32 %v220, 4294901760
    %v765 = vsub.f32 %v220, %v764
    %766 = vmatpush.msra.mxu0 %v765
    %v767 = vand.u32 %v219, 4294901760
    %v768 = vsub.f32 %v219, %v767
    %769 = vmatpush.msra.mxu0 %v768
    %v770 = vand.u32 %v218, 4294901760
    %v771 = vsub.f32 %v218, %v770
    %772 = vmatpush.msra.mxu0 %v771
    %v773 = vand.u32 %v217, 4294901760
    %v774 = vsub.f32 %v217, %v773
    %775 = vmatpush.msra.mxu0 %v774
    %v776 = vand.u32 %v216, 4294901760
    %v777 = vsub.f32 %v216, %v776
    %778 = vmatpush.msra.mxu0 %v777
    %v779 = vand.u32 %v215, 4294901760
    %v780 = vsub.f32 %v215, %v779
    %781 = vmatpush.msra.mxu0 %v780
    %v782 = vand.u32 %v214, 4294901760
    %v783 = vsub.f32 %v214, %v782
    %784 = vmatpush.msra.mxu0 %v783
    %v785 = vand.u32 %v213, 4294901760
    %v786 = vsub.f32 %v213, %v785
    %787 = vmatpush.msra.mxu0 %v786
    %v788 = vand.u32 %v212, 4294901760
    %v789 = vsub.f32 %v212, %v788
    %790 = vmatpush.msra.mxu0 %v789
    %v791 = vand.u32 %v193, 4294901760
    %v792 = vsub.f32 %v193, %v791
    %793 = vmatmul.f32.gmra.mxu0 %v792
    %v794 = vpop.f32.mrf.mxu0
    %v795 = vadd.f32 %v741, %v794
    %796 = vdwg.mxu0
    %v797 = vand.u32 %v227, 4294901760
    %798 = vmatpush.msra.mxu0 %v797
    %v799 = vand.u32 %v226, 4294901760
    %800 = vmatpush.msra.mxu0 %v799
    %v801 = vand.u32 %v225, 4294901760
    %802 = vmatpush.msra.mxu0 %v801
    %v803 = vand.u32 %v224, 4294901760
    %804 = vmatpush.msra.mxu0 %v803
    %v805 = vand.u32 %v223, 4294901760
    %806 = vmatpush.msra.mxu0 %v805
    %v807 = vand.u32 %v222, 4294901760
    %808 = vmatpush.msra.mxu0 %v807
    %v809 = vand.u32 %v221, 4294901760
    %810 = vmatpush.msra.mxu0 %v809
    %v811 = vand.u32 %v220, 4294901760
    %812 = vmatpush.msra.mxu0 %v811
    %v813 = vand.u32 %v219, 4294901760
    %814 = vmatpush.msra.mxu0 %v813
    %v815 = vand.u32 %v218, 4294901760
    %816 = vmatpush.msra.mxu0 %v815
    %v817 = vand.u32 %v217, 4294901760
    %818 = vmatpush.msra.mxu0 %v817
    %v819 = vand.u32 %v216, 4294901760
    %820 = vmatpush.msra.mxu0 %v819
    %v821 = vand.u32 %v215, 4294901760
    %822 = vmatpush.msra.mxu0 %v821
    %v823 = vand.u32 %v214, 4294901760
    %824 = vmatpush.msra.mxu0 %v823
    %v825 = vand.u32 %v213, 4294901760
    %826 = vmatpush.msra.mxu0 %v825
    %v827 = vand.u32 %v212, 4294901760
    %828 = vmatpush.msra.mxu0 %v827
    %v829 = vand.u32 %v193, 4294901760
    %v830 = vsub.f32 %v193, %v829
    %v831 = vand.u32 %v830, 4294901760
    %832 = vmatmul.f32.gmra.mxu0 %v831
    %v833 = vpop.f32.mrf.mxu0
    %v834 = vadd.f32 %v795, %v833
    %835 = vdwg.mxu0
    %v836 = vand.u32 %v227, 4294901760
    %v837 = vsub.f32 %v227, %v836
    %v838 = vand.u32 %v837, 4294901760
    %839 = vmatpush.msra.mxu0 %v838
    %v840 = vand.u32 %v226, 4294901760
    %v841 = vsub.f32 %v226, %v840
    %v842 = vand.u32 %v841, 4294901760
    %843 = vmatpush.msra.mxu0 %v842
    %v844 = vand.u32 %v225, 4294901760
    %v845 = vsub.f32 %v225, %v844
    %v846 = vand.u32 %v845, 4294901760
    %847 = vmatpush.msra.mxu0 %v846
    %v848 = vand.u32 %v224, 4294901760
    %v849 = vsub.f32 %v224, %v848
    %v850 = vand.u32 %v849, 4294901760
    %851 = vmatpush.msra.mxu0 %v850
    %v852 = vand.u32 %v223, 4294901760
    %v853 = vsub.f32 %v223, %v852
    %v854 = vand.u32 %v853, 4294901760
    %855 = vmatpush.msra.mxu0 %v854
    %v856 = vand.u32 %v222, 4294901760
    %v857 = vsub.f32 %v222, %v856
    %v858 = vand.u32 %v857, 4294901760
    %859 = vmatpush.msra.mxu0 %v858
    %v860 = vand.u32 %v221, 4294901760
    %v861 = vsub.f32 %v221, %v860
    %v862 = vand.u32 %v861, 4294901760
    %863 = vmatpush.msra.mxu0 %v862
    %v864 = vand.u32 %v220, 4294901760
    %v865 = vsub.f32 %v220, %v864
    %v866 = vand.u32 %v865, 4294901760
    %867 = vmatpush.msra.mxu0 %v866
    %v868 = vand.u32 %v219, 4294901760
    %v869 = vsub.f32 %v219, %v868
    %v870 = vand.u32 %v869, 4294901760
    %871 = vmatpush.msra.mxu0 %v870
    %v872 = vand.u32 %v218, 4294901760
    %v873 = vsub.f32 %v218, %v872
    %v874 = vand.u32 %v873, 4294901760
    %875 = vmatpush.msra.mxu0 %v874
    %v876 = vand.u32 %v217, 4294901760
    %v877 = vsub.f32 %v217, %v876
    %v878 = vand.u32 %v877, 4294901760
    %879 = vmatpush.msra.mxu0 %v878
    %v880 = vand.u32 %v216, 4294901760
    %v881 = vsub.f32 %v216, %v880
    %v882 = vand.u32 %v881, 4294901760
    %883 = vmatpush.msra.mxu0 %v882
    %v884 = vand.u32 %v215, 4294901760
    %v885 = vsub.f32 %v215, %v884
    %v886 = vand.u32 %v885, 4294901760
    %887 = vmatpush.msra.mxu0 %v886
    %v888 = vand.u32 %v214, 4294901760
    %v889 = vsub.f32 %v214, %v888
    %v890 = vand.u32 %v889, 4294901760
    %891 = vmatpush.msra.mxu0 %v890
    %v892 = vand.u32 %v213, 4294901760
    %v893 = vsub.f32 %v213, %v892
    %v894 = vand.u32 %v893, 4294901760
    %895 = vmatpush.msra.mxu0 %v894
    %v896 = vand.u32 %v212, 4294901760
    %v897 = vsub.f32 %v212, %v896
    %v898 = vand.u32 %v897, 4294901760
    %899 = vmatpush.msra.mxu0 %v898
    %v900 = vand.u32 %v193, 4294901760
    %901 = vmatmul.f32.gmra.mxu0 %v900
    %v902 = vpop.f32.mrf.mxu0
    %v903 = vadd.f32 %v834, %v902
    %904 = vdwg.mxu0
    %v905 = vand.u32 %v227, 4294901760
    %906 = vmatpush.msra.mxu0 %v905
    %v907 = vand.u32 %v226, 4294901760
    %908 = vmatpush.msra.mxu0 %v907
    %v909 = vand.u32 %v225, 4294901760
    %910 = vmatpush.msra.mxu0 %v909
    %v911 = vand.u32 %v224, 4294901760
    %912 = vmatpush.msra.mxu0 %v911
    %v913 = vand.u32 %v223, 4294901760
    %914 = vmatpush.msra.mxu0 %v913
    %v915 = vand.u32 %v222, 4294901760
    %916 = vmatpush.msra.mxu0 %v915
    %v917 = vand.u32 %v221, 4294901760
    %918 = vmatpush.msra.mxu0 %v917
    %v919 = vand.u32 %v220, 4294901760
    %920 = vmatpush.msra.mxu0 %v919
    %v921 = vand.u32 %v219, 4294901760
    %922 = vmatpush.msra.mxu0 %v921
    %v923 = vand.u32 %v218, 4294901760
    %924 = vmatpush.msra.mxu0 %v923
    %v925 = vand.u32 %v217, 4294901760
    %926 = vmatpush.msra.mxu0 %v925
    %v927 = vand.u32 %v216, 4294901760
    %928 = vmatpush.msra.mxu0 %v927
    %v929 = vand.u32 %v215, 4294901760
    %930 = vmatpush.msra.mxu0 %v929
    %v931 = vand.u32 %v214, 4294901760
    %932 = vmatpush.msra.mxu0 %v931
    %v933 = vand.u32 %v213, 4294901760
    %934 = vmatpush.msra.mxu0 %v933
    %v935 = vand.u32 %v212, 4294901760
    %936 = vmatpush.msra.mxu0 %v935
    %v937 = vand.u32 %v193, 4294901760
    %938 = vmatmul.f32.gmra.mxu0 %v937
    %v939 = vpop.f32.mrf.mxu0
    %v940 = vadd.f32 %v903, %v939
    %941 = vdwg.mxu0
    %v942 = vand.u32 %v243, 4294901760
    %943 = vmatpush.msra.mxu0 %v942
    %v944 = vand.u32 %v242, 4294901760
    %945 = vmatpush.msra.mxu0 %v944
    %v946 = vand.u32 %v241, 4294901760
    %947 = vmatpush.msra.mxu0 %v946
    %v948 = vand.u32 %v240, 4294901760
    %949 = vmatpush.msra.mxu0 %v948
    %v950 = vand.u32 %v239, 4294901760
    %951 = vmatpush.msra.mxu0 %v950
    %v952 = vand.u32 %v238, 4294901760
    %953 = vmatpush.msra.mxu0 %v952
    %v954 = vand.u32 %v237, 4294901760
    %955 = vmatpush.msra.mxu0 %v954
    %v956 = vand.u32 %v236, 4294901760
    %957 = vmatpush.msra.mxu0 %v956
    %v958 = vand.u32 %v235, 4294901760
    %959 = vmatpush.msra.mxu0 %v958
    %v960 = vand.u32 %v234, 4294901760
    %961 = vmatpush.msra.mxu0 %v960
    %v962 = vand.u32 %v233, 4294901760
    %963 = vmatpush.msra.mxu0 %v962
    %v964 = vand.u32 %v232, 4294901760
    %965 = vmatpush.msra.mxu0 %v964
    %v966 = vand.u32 %v231, 4294901760
    %967 = vmatpush.msra.mxu0 %v966
    %v968 = vand.u32 %v230, 4294901760
    %969 = vmatpush.msra.mxu0 %v968
    %v970 = vand.u32 %v229, 4294901760
    %971 = vmatpush.msra.mxu0 %v970
    %v972 = vand.u32 %v228, 4294901760
    %973 = vmatpush.msra.mxu0 %v972
    %v974 = vand.u32 %v194, 4294901760
    %v975 = vsub.f32 %v194, %v974
    %v976 = vand.u32 %v975, 4294901760
    %v977 = vsub.f32 %v975, %v976
    %v978 = vand.u32 %v977, 4294901760
    %979 = vmatmul.f32.gmra.mxu0 %v978
    %v980 = vpop.f32.mrf.mxu0
    %v981 = vadd.f32 %v940, %v980
    %982 = vdwg.mxu0
    %v983 = vand.u32 %v243, 4294901760
    %v984 = vsub.f32 %v243, %v983
    %v985 = vand.u32 %v984, 4294901760
    %v986 = vsub.f32 %v984, %v985
    %v987 = vand.u32 %v986, 4294901760
    %988 = vmatpush.msra.mxu0 %v987
    %v989 = vand.u32 %v242, 4294901760
    %v990 = vsub.f32 %v242, %v989
    %v991 = vand.u32 %v990, 4294901760
    %v992 = vsub.f32 %v990, %v991
    %v993 = vand.u32 %v992, 4294901760
    %994 = vmatpush.msra.mxu0 %v993
    %v995 = vand.u32 %v241, 4294901760
    %v996 = vsub.f32 %v241, %v995
    %v997 = vand.u32 %v996, 4294901760
    %v998 = vsub.f32 %v996, %v997
    %v999 = vand.u32 %v998, 4294901760
    %1000 = vmatpush.msra.mxu0 %v999
    %v1001 = vand.u32 %v240, 4294901760
    %v1002 = vsub.f32 %v240, %v1001
    %v1003 = vand.u32 %v1002, 4294901760
    %v1004 = vsub.f32 %v1002, %v1003
    %v1005 = vand.u32 %v1004, 4294901760
    %1006 = vmatpush.msra.mxu0 %v1005
    %v1007 = vand.u32 %v239, 4294901760
    %v1008 = vsub.f32 %v239, %v1007
    %v1009 = vand.u32 %v1008, 4294901760
    %v1010 = vsub.f32 %v1008, %v1009
    %v1011 = vand.u32 %v1010, 4294901760
    %1012 = vmatpush.msra.mxu0 %v1011
    %v1013 = vand.u32 %v238, 4294901760
    %v1014 = vsub.f32 %v238, %v1013
    %v1015 = vand.u32 %v1014, 4294901760
    %v1016 = vsub.f32 %v1014, %v1015
    %v1017 = vand.u32 %v1016, 4294901760
    %1018 = vmatpush.msra.mxu0 %v1017
    %v1019 = vand.u32 %v237, 4294901760
    %v1020 = vsub.f32 %v237, %v1019
    %v1021 = vand.u32 %v1020, 4294901760
    %v1022 = vsub.f32 %v1020, %v1021
    %v1023 = vand.u32 %v1022, 4294901760
    %1024 = vmatpush.msra.mxu0 %v1023
    %v1025 = vand.u32 %v236, 4294901760
    %v1026 = vsub.f32 %v236, %v1025
    %v1027 = vand.u32 %v1026, 4294901760
    %v1028 = vsub.f32 %v1026, %v1027
    %v1029 = vand.u32 %v1028, 4294901760
    %1030 = vmatpush.msra.mxu0 %v1029
    %v1031 = vand.u32 %v235, 4294901760
    %v1032 = vsub.f32 %v235, %v1031
    %v1033 = vand.u32 %v1032, 4294901760
    %v1034 = vsub.f32 %v1032, %v1033
    %v1035 = vand.u32 %v1034, 4294901760
    %1036 = vmatpush.msra.mxu0 %v1035
    %v1037 = vand.u32 %v234, 4294901760
    %v1038 = vsub.f32 %v234, %v1037
    %v1039 = vand.u32 %v1038, 4294901760
    %v1040 = vsub.f32 %v1038, %v1039
    %v1041 = vand.u32 %v1040, 4294901760
    %1042 = vmatpush.msra.mxu0 %v1041
    %v1043 = vand.u32 %v233, 4294901760
    %v1044 = vsub.f32 %v233, %v1043
    %v1045 = vand.u32 %v1044, 4294901760
    %v1046 = vsub.f32 %v1044, %v1045
    %v1047 = vand.u32 %v1046, 4294901760
    %1048 = vmatpush.msra.mxu0 %v1047
    %v1049 = vand.u32 %v232, 4294901760
    %v1050 = vsub.f32 %v232, %v1049
    %v1051 = vand.u32 %v1050, 4294901760
    %v1052 = vsub.f32 %v1050, %v1051
    %v1053 = vand.u32 %v1052, 4294901760
    %1054 = vmatpush.msra.mxu0 %v1053
    %v1055 = vand.u32 %v231, 4294901760
    %v1056 = vsub.f32 %v231, %v1055
    %v1057 = vand.u32 %v1056, 4294901760
    %v1058 = vsub.f32 %v1056, %v1057
    %v1059 = vand.u32 %v1058, 4294901760
    %1060 = vmatpush.msra.mxu0 %v1059
    %v1061 = vand.u32 %v230, 4294901760
    %v1062 = vsub.f32 %v230, %v1061
    %v1063 = vand.u32 %v1062, 4294901760
    %v1064 = vsub.f32 %v1062, %v1063
    %v1065 = vand.u32 %v1064, 4294901760
    %1066 = vmatpush.msra.mxu0 %v1065
    %v1067 = vand.u32 %v229, 4294901760
    %v1068 = vsub.f32 %v229, %v1067
    %v1069 = vand.u32 %v1068, 4294901760
    %v1070 = vsub.f32 %v1068, %v1069
    %v1071 = vand.u32 %v1070, 4294901760
    %1072 = vmatpush.msra.mxu0 %v1071
    %v1073 = vand.u32 %v228, 4294901760
    %v1074 = vsub.f32 %v228, %v1073
    %v1075 = vand.u32 %v1074, 4294901760
    %v1076 = vsub.f32 %v1074, %v1075
    %v1077 = vand.u32 %v1076, 4294901760
    %1078 = vmatpush.msra.mxu0 %v1077
    %v1079 = vand.u32 %v194, 4294901760
    %1080 = vmatmul.f32.gmra.mxu0 %v1079
    %v1081 = vpop.f32.mrf.mxu0
    %v1082 = vadd.f32 %v981, %v1081
    %1083 = vdwg.mxu0
    %v1084 = vand.u32 %v243, 4294901760
    %v1085 = vsub.f32 %v243, %v1084
    %1086 = vmatpush.msra.mxu0 %v1085
    %v1087 = vand.u32 %v242, 4294901760
    %v1088 = vsub.f32 %v242, %v1087
    %1089 = vmatpush.msra.mxu0 %v1088
    %v1090 = vand.u32 %v241, 4294901760
    %v1091 = vsub.f32 %v241, %v1090
    %1092 = vmatpush.msra.mxu0 %v1091
    %v1093 = vand.u32 %v240, 4294901760
    %v1094 = vsub.f32 %v240, %v1093
    %1095 = vmatpush.msra.mxu0 %v1094
    %v1096 = vand.u32 %v239, 4294901760
    %v1097 = vsub.f32 %v239, %v1096
    %1098 = vmatpush.msra.mxu0 %v1097
    %v1099 = vand.u32 %v238, 4294901760
    %v1100 = vsub.f32 %v238, %v1099
    %1101 = vmatpush.msra.mxu0 %v1100
    %v1102 = vand.u32 %v237, 4294901760
    %v1103 = vsub.f32 %v237, %v1102
    %1104 = vmatpush.msra.mxu0 %v1103
    %v1105 = vand.u32 %v236, 4294901760
    %v1106 = vsub.f32 %v236, %v1105
    %1107 = vmatpush.msra.mxu0 %v1106
    %v1108 = vand.u32 %v235, 4294901760
    %v1109 = vsub.f32 %v235, %v1108
    %1110 = vmatpush.msra.mxu0 %v1109
    %v1111 = vand.u32 %v234, 4294901760
    %v1112 = vsub.f32 %v234, %v1111
    %1113 = vmatpush.msra.mxu0 %v1112
    %v1114 = vand.u32 %v233, 4294901760
    %v1115 = vsub.f32 %v233, %v1114
    %1116 = vmatpush.msra.mxu0 %v1115
    %v1117 = vand.u32 %v232, 4294901760
    %v1118 = vsub.f32 %v232, %v1117
    %1119 = vmatpush.msra.mxu0 %v1118
    %v1120 = vand.u32 %v231, 4294901760
    %v1121 = vsub.f32 %v231, %v1120
    %1122 = vmatpush.msra.mxu0 %v1121
    %v1123 = vand.u32 %v230, 4294901760
    %v1124 = vsub.f32 %v230, %v1123
    %1125 = vmatpush.msra.mxu0 %v1124
    %v1126 = vand.u32 %v229, 4294901760
    %v1127 = vsub.f32 %v229, %v1126
    %1128 = vmatpush.msra.mxu0 %v1127
    %v1129 = vand.u32 %v228, 4294901760
    %v1130 = vsub.f32 %v228, %v1129
    %1131 = vmatpush.msra.mxu0 %v1130
    %v1132 = vand.u32 %v194, 4294901760
    %v1133 = vsub.f32 %v194, %v1132
    %1134 = vmatmul.f32.gmra.mxu0 %v1133
    %v1135 = vpop.f32.mrf.mxu0
    %v1136 = vadd.f32 %v1082, %v1135
    %1137 = vdwg.mxu0
    %v1138 = vand.u32 %v243, 4294901760
    %1139 = vmatpush.msra.mxu0 %v1138
    %v1140 = vand.u32 %v242, 4294901760
    %1141 = vmatpush.msra.mxu0 %v1140
    %v1142 = vand.u32 %v241, 4294901760
    %1143 = vmatpush.msra.mxu0 %v1142
    %v1144 = vand.u32 %v240, 4294901760
    %1145 = vmatpush.msra.mxu0 %v1144
    %v1146 = vand.u32 %v239, 4294901760
    %1147 = vmatpush.msra.mxu0 %v1146
    %v1148 = vand.u32 %v238, 4294901760
    %1149 = vmatpush.msra.mxu0 %v1148
    %v1150 = vand.u32 %v237, 4294901760
    %1151 = vmatpush.msra.mxu0 %v1150
    %v1152 = vand.u32 %v236, 4294901760
    %1153 = vmatpush.msra.mxu0 %v1152
    %v1154 = vand.u32 %v235, 4294901760
    %1155 = vmatpush.msra.mxu0 %v1154
    %v1156 = vand.u32 %v234, 4294901760
    %1157 = vmatpush.msra.mxu0 %v1156
    %v1158 = vand.u32 %v233, 4294901760
    %1159 = vmatpush.msra.mxu0 %v1158
    %v1160 = vand.u32 %v232, 4294901760
    %1161 = vmatpush.msra.mxu0 %v1160
    %v1162 = vand.u32 %v231, 4294901760
    %1163 = vmatpush.msra.mxu0 %v1162
    %v1164 = vand.u32 %v230, 4294901760
    %1165 = vmatpush.msra.mxu0 %v1164
    %v1166 = vand.u32 %v229, 4294901760
    %1167 = vmatpush.msra.mxu0 %v1166
    %v1168 = vand.u32 %v228, 4294901760
    %1169 = vmatpush.msra.mxu0 %v1168
    %v1170 = vand.u32 %v194, 4294901760
    %v1171 = vsub.f32 %v194, %v1170
    %v1172 = vand.u32 %v1171, 4294901760
    %1173 = vmatmul.f32.gmra.mxu0 %v1172
    %v1174 = vpop.f32.mrf.mxu0
    %v1175 = vadd.f32 %v1136, %v1174
    %1176 = vdwg.mxu0
    %v1177 = vand.u32 %v243, 4294901760
    %v1178 = vsub.f32 %v243, %v1177
    %v1179 = vand.u32 %v1178, 4294901760
    %1180 = vmatpush.msra.mxu0 %v1179
    %v1181 = vand.u32 %v242, 4294901760
    %v1182 = vsub.f32 %v242, %v1181
    %v1183 = vand.u32 %v1182, 4294901760
    %1184 = vmatpush.msra.mxu0 %v1183
    %v1185 = vand.u32 %v241, 4294901760
    %v1186 = vsub.f32 %v241, %v1185
    %v1187 = vand.u32 %v1186, 4294901760
    %1188 = vmatpush.msra.mxu0 %v1187
    %v1189 = vand.u32 %v240, 4294901760
    %v1190 = vsub.f32 %v240, %v1189
    %v1191 = vand.u32 %v1190, 4294901760
    %1192 = vmatpush.msra.mxu0 %v1191
    %v1193 = vand.u32 %v239, 4294901760
    %v1194 = vsub.f32 %v239, %v1193
    %v1195 = vand.u32 %v1194, 4294901760
    %1196 = vmatpush.msra.mxu0 %v1195
    %v1197 = vand.u32 %v238, 4294901760
    %v1198 = vsub.f32 %v238, %v1197
    %v1199 = vand.u32 %v1198, 4294901760
    %1200 = vmatpush.msra.mxu0 %v1199
    %v1201 = vand.u32 %v237, 4294901760
    %v1202 = vsub.f32 %v237, %v1201
    %v1203 = vand.u32 %v1202, 4294901760
    %1204 = vmatpush.msra.mxu0 %v1203
    %v1205 = vand.u32 %v236, 4294901760
    %v1206 = vsub.f32 %v236, %v1205
    %v1207 = vand.u32 %v1206, 4294901760
    %1208 = vmatpush.msra.mxu0 %v1207
    %v1209 = vand.u32 %v235, 4294901760
    %v1210 = vsub.f32 %v235, %v1209
    %v1211 = vand.u32 %v1210, 4294901760
    %1212 = vmatpush.msra.mxu0 %v1211
    %v1213 = vand.u32 %v234, 4294901760
    %v1214 = vsub.f32 %v234, %v1213
    %v1215 = vand.u32 %v1214, 4294901760
    %1216 = vmatpush.msra.mxu0 %v1215
    %v1217 = vand.u32 %v233, 4294901760
    %v1218 = vsub.f32 %v233, %v1217
    %v1219 = vand.u32 %v1218, 4294901760
    %1220 = vmatpush.msra.mxu0 %v1219
    %v1221 = vand.u32 %v232, 4294901760
    %v1222 = vsub.f32 %v232, %v1221
    %v1223 = vand.u32 %v1222, 4294901760
    %1224 = vmatpush.msra.mxu0 %v1223
    %v1225 = vand.u32 %v231, 4294901760
    %v1226 = vsub.f32 %v231, %v1225
    %v1227 = vand.u32 %v1226, 4294901760
    %1228 = vmatpush.msra.mxu0 %v1227
    %v1229 = vand.u32 %v230, 4294901760
    %v1230 = vsub.f32 %v230, %v1229
    %v1231 = vand.u32 %v1230, 4294901760
    %1232 = vmatpush.msra.mxu0 %v1231
    %v1233 = vand.u32 %v229, 4294901760
    %v1234 = vsub.f32 %v229, %v1233
    %v1235 = vand.u32 %v1234, 4294901760
    %1236 = vmatpush.msra.mxu0 %v1235
    %v1237 = vand.u32 %v228, 4294901760
    %v1238 = vsub.f32 %v228, %v1237
    %v1239 = vand.u32 %v1238, 4294901760
    %1240 = vmatpush.msra.mxu0 %v1239
    %v1241 = vand.u32 %v194, 4294901760
    %1242 = vmatmul.f32.gmra.mxu0 %v1241
    %v1243 = vpop.f32.mrf.mxu0
    %v1244 = vadd.f32 %v1175, %v1243
    %1245 = vdwg.mxu0
    %v1246 = vand.u32 %v243, 4294901760
    %1247 = vmatpush.msra.mxu0 %v1246
    %v1248 = vand.u32 %v242, 4294901760
    %1249 = vmatpush.msra.mxu0 %v1248
    %v1250 = vand.u32 %v241, 4294901760
    %1251 = vmatpush.msra.mxu0 %v1250
    %v1252 = vand.u32 %v240, 4294901760
    %1253 = vmatpush.msra.mxu0 %v1252
    %v1254 = vand.u32 %v239, 4294901760
    %1255 = vmatpush.msra.mxu0 %v1254
    %v1256 = vand.u32 %v238, 4294901760
    %1257 = vmatpush.msra.mxu0 %v1256
    %v1258 = vand.u32 %v237, 4294901760
    %1259 = vmatpush.msra.mxu0 %v1258
    %v1260 = vand.u32 %v236, 4294901760
    %1261 = vmatpush.msra.mxu0 %v1260
    %v1262 = vand.u32 %v235, 4294901760
    %1263 = vmatpush.msra.mxu0 %v1262
    %v1264 = vand.u32 %v234, 4294901760
    %1265 = vmatpush.msra.mxu0 %v1264
    %v1266 = vand.u32 %v233, 4294901760
    %1267 = vmatpush.msra.mxu0 %v1266
    %v1268 = vand.u32 %v232, 4294901760
    %1269 = vmatpush.msra.mxu0 %v1268
    %v1270 = vand.u32 %v231, 4294901760
    %1271 = vmatpush.msra.mxu0 %v1270
    %v1272 = vand.u32 %v230, 4294901760
    %1273 = vmatpush.msra.mxu0 %v1272
    %v1274 = vand.u32 %v229, 4294901760
    %1275 = vmatpush.msra.mxu0 %v1274
    %v1276 = vand.u32 %v228, 4294901760
    %1277 = vmatpush.msra.mxu0 %v1276
    %v1278 = vand.u32 %v194, 4294901760
    %1279 = vmatmul.f32.gmra.mxu0 %v1278
    %v1280 = vpop.f32.mrf.mxu0
    %v1281 = vadd.f32 %v1244, %v1280
    %1282 = vdwg.mxu0
    %v1283 = vand.u32 %v259, 4294901760
    %1284 = vmatpush.msra.mxu0 %v1283
    %v1285 = vand.u32 %v258, 4294901760
    %1286 = vmatpush.msra.mxu0 %v1285
    %v1287 = vand.u32 %v257, 4294901760
    %1288 = vmatpush.msra.mxu0 %v1287
    %v1289 = vand.u32 %v256, 4294901760
    %1290 = vmatpush.msra.mxu0 %v1289
    %v1291 = vand.u32 %v255, 4294901760
    %1292 = vmatpush.msra.mxu0 %v1291
    %v1293 = vand.u32 %v254, 4294901760
    %1294 = vmatpush.msra.mxu0 %v1293
    %v1295 = vand.u32 %v253, 4294901760
    %1296 = vmatpush.msra.mxu0 %v1295
    %v1297 = vand.u32 %v252, 4294901760
    %1298 = vmatpush.msra.mxu0 %v1297
    %v1299 = vand.u32 %v251, 4294901760
    %1300 = vmatpush.msra.mxu0 %v1299
    %v1301 = vand.u32 %v250, 4294901760
    %1302 = vmatpush.msra.mxu0 %v1301
    %v1303 = vand.u32 %v249, 4294901760
    %1304 = vmatpush.msra.mxu0 %v1303
    %v1305 = vand.u32 %v248, 4294901760
    %1306 = vmatpush.msra.mxu0 %v1305
    %v1307 = vand.u32 %v247, 4294901760
    %1308 = vmatpush.msra.mxu0 %v1307
    %v1309 = vand.u32 %v246, 4294901760
    %1310 = vmatpush.msra.mxu0 %v1309
    %v1311 = vand.u32 %v245, 4294901760
    %1312 = vmatpush.msra.mxu0 %v1311
    %v1313 = vand.u32 %v244, 4294901760
    %1314 = vmatpush.msra.mxu0 %v1313
    %v1315 = vand.u32 %v195, 4294901760
    %v1316 = vsub.f32 %v195, %v1315
    %v1317 = vand.u32 %v1316, 4294901760
    %v1318 = vsub.f32 %v1316, %v1317
    %v1319 = vand.u32 %v1318, 4294901760
    %1320 = vmatmul.f32.gmra.mxu0 %v1319
    %v1321 = vpop.f32.mrf.mxu0
    %v1322 = vadd.f32 %v1281, %v1321
    %1323 = vdwg.mxu0
    %v1324 = vand.u32 %v259, 4294901760
    %v1325 = vsub.f32 %v259, %v1324
    %v1326 = vand.u32 %v1325, 4294901760
    %v1327 = vsub.f32 %v1325, %v1326
    %v1328 = vand.u32 %v1327, 4294901760
    %1329 = vmatpush.msra.mxu0 %v1328
    %v1330 = vand.u32 %v258, 4294901760
    %v1331 = vsub.f32 %v258, %v1330
    %v1332 = vand.u32 %v1331, 4294901760
    %v1333 = vsub.f32 %v1331, %v1332
    %v1334 = vand.u32 %v1333, 4294901760
    %1335 = vmatpush.msra.mxu0 %v1334
    %v1336 = vand.u32 %v257, 4294901760
    %v1337 = vsub.f32 %v257, %v1336
    %v1338 = vand.u32 %v1337, 4294901760
    %v1339 = vsub.f32 %v1337, %v1338
    %v1340 = vand.u32 %v1339, 4294901760
    %1341 = vmatpush.msra.mxu0 %v1340
    %v1342 = vand.u32 %v256, 4294901760
    %v1343 = vsub.f32 %v256, %v1342
    %v1344 = vand.u32 %v1343, 4294901760
    %v1345 = vsub.f32 %v1343, %v1344
    %v1346 = vand.u32 %v1345, 4294901760
    %1347 = vmatpush.msra.mxu0 %v1346
    %v1348 = vand.u32 %v255, 4294901760
    %v1349 = vsub.f32 %v255, %v1348
    %v1350 = vand.u32 %v1349, 4294901760
    %v1351 = vsub.f32 %v1349, %v1350
    %v1352 = vand.u32 %v1351, 4294901760
    %1353 = vmatpush.msra.mxu0 %v1352
    %v1354 = vand.u32 %v254, 4294901760
    %v1355 = vsub.f32 %v254, %v1354
    %v1356 = vand.u32 %v1355, 4294901760
    %v1357 = vsub.f32 %v1355, %v1356
    %v1358 = vand.u32 %v1357, 4294901760
    %1359 = vmatpush.msra.mxu0 %v1358
    %v1360 = vand.u32 %v253, 4294901760
    %v1361 = vsub.f32 %v253, %v1360
    %v1362 = vand.u32 %v1361, 4294901760
    %v1363 = vsub.f32 %v1361, %v1362
    %v1364 = vand.u32 %v1363, 4294901760
    %1365 = vmatpush.msra.mxu0 %v1364
    %v1366 = vand.u32 %v252, 4294901760
    %v1367 = vsub.f32 %v252, %v1366
    %v1368 = vand.u32 %v1367, 4294901760
    %v1369 = vsub.f32 %v1367, %v1368
    %v1370 = vand.u32 %v1369, 4294901760
    %1371 = vmatpush.msra.mxu0 %v1370
    %v1372 = vand.u32 %v251, 4294901760
    %v1373 = vsub.f32 %v251, %v1372
    %v1374 = vand.u32 %v1373, 4294901760
    %v1375 = vsub.f32 %v1373, %v1374
    %v1376 = vand.u32 %v1375, 4294901760
    %1377 = vmatpush.msra.mxu0 %v1376
    %v1378 = vand.u32 %v250, 4294901760
    %v1379 = vsub.f32 %v250, %v1378
    %v1380 = vand.u32 %v1379, 4294901760
    %v1381 = vsub.f32 %v1379, %v1380
    %v1382 = vand.u32 %v1381, 4294901760
    %1383 = vmatpush.msra.mxu0 %v1382
    %v1384 = vand.u32 %v249, 4294901760
    %v1385 = vsub.f32 %v249, %v1384
    %v1386 = vand.u32 %v1385, 4294901760
    %v1387 = vsub.f32 %v1385, %v1386
    %v1388 = vand.u32 %v1387, 4294901760
    %1389 = vmatpush.msra.mxu0 %v1388
    %v1390 = vand.u32 %v248, 4294901760
    %v1391 = vsub.f32 %v248, %v1390
    %v1392 = vand.u32 %v1391, 4294901760
    %v1393 = vsub.f32 %v1391, %v1392
    %v1394 = vand.u32 %v1393, 4294901760
    %1395 = vmatpush.msra.mxu0 %v1394
    %v1396 = vand.u32 %v247, 4294901760
    %v1397 = vsub.f32 %v247, %v1396
    %v1398 = vand.u32 %v1397, 4294901760
    %v1399 = vsub.f32 %v1397, %v1398
    %v1400 = vand.u32 %v1399, 4294901760
    %1401 = vmatpush.msra.mxu0 %v1400
    %v1402 = vand.u32 %v246, 4294901760
    %v1403 = vsub.f32 %v246, %v1402
    %v1404 = vand.u32 %v1403, 4294901760
    %v1405 = vsub.f32 %v1403, %v1404
    %v1406 = vand.u32 %v1405, 4294901760
    %1407 = vmatpush.msra.mxu0 %v1406
    %v1408 = vand.u32 %v245, 4294901760
    %v1409 = vsub.f32 %v245, %v1408
    %v1410 = vand.u32 %v1409, 4294901760
    %v1411 = vsub.f32 %v1409, %v1410
    %v1412 = vand.u32 %v1411, 4294901760
    %1413 = vmatpush.msra.mxu0 %v1412
    %v1414 = vand.u32 %v244, 4294901760
    %v1415 = vsub.f32 %v244, %v1414
    %v1416 = vand.u32 %v1415, 4294901760
    %v1417 = vsub.f32 %v1415, %v1416
    %v1418 = vand.u32 %v1417, 4294901760
    %1419 = vmatpush.msra.mxu0 %v1418
    %v1420 = vand.u32 %v195, 4294901760
    %1421 = vmatmul.f32.gmra.mxu0 %v1420
    %v1422 = vpop.f32.mrf.mxu0
    %v1423 = vadd.f32 %v1322, %v1422
    %1424 = vdwg.mxu0
    %v1425 = vand.u32 %v259, 4294901760
    %v1426 = vsub.f32 %v259, %v1425
    %1427 = vmatpush.msra.mxu0 %v1426
    %v1428 = vand.u32 %v258, 4294901760
    %v1429 = vsub.f32 %v258, %v1428
    %1430 = vmatpush.msra.mxu0 %v1429
    %v1431 = vand.u32 %v257, 4294901760
    %v1432 = vsub.f32 %v257, %v1431
    %1433 = vmatpush.msra.mxu0 %v1432
    %v1434 = vand.u32 %v256, 4294901760
    %v1435 = vsub.f32 %v256, %v1434
    %1436 = vmatpush.msra.mxu0 %v1435
    %v1437 = vand.u32 %v255, 4294901760
    %v1438 = vsub.f32 %v255, %v1437
    %1439 = vmatpush.msra.mxu0 %v1438
    %v1440 = vand.u32 %v254, 4294901760
    %v1441 = vsub.f32 %v254, %v1440
    %1442 = vmatpush.msra.mxu0 %v1441
    %v1443 = vand.u32 %v253, 4294901760
    %v1444 = vsub.f32 %v253, %v1443
    %1445 = vmatpush.msra.mxu0 %v1444
    %v1446 = vand.u32 %v252, 4294901760
    %v1447 = vsub.f32 %v252, %v1446
    %1448 = vmatpush.msra.mxu0 %v1447
    %v1449 = vand.u32 %v251, 4294901760
    %v1450 = vsub.f32 %v251, %v1449
    %1451 = vmatpush.msra.mxu0 %v1450
    %v1452 = vand.u32 %v250, 4294901760
    %v1453 = vsub.f32 %v250, %v1452
    %1454 = vmatpush.msra.mxu0 %v1453
    %v1455 = vand.u32 %v249, 4294901760
    %v1456 = vsub.f32 %v249, %v1455
    %1457 = vmatpush.msra.mxu0 %v1456
    %v1458 = vand.u32 %v248, 4294901760
    %v1459 = vsub.f32 %v248, %v1458
    %1460 = vmatpush.msra.mxu0 %v1459
    %v1461 = vand.u32 %v247, 4294901760
    %v1462 = vsub.f32 %v247, %v1461
    %1463 = vmatpush.msra.mxu0 %v1462
    %v1464 = vand.u32 %v246, 4294901760
    %v1465 = vsub.f32 %v246, %v1464
    %1466 = vmatpush.msra.mxu0 %v1465
    %v1467 = vand.u32 %v245, 4294901760
    %v1468 = vsub.f32 %v245, %v1467
    %1469 = vmatpush.msra.mxu0 %v1468
    %v1470 = vand.u32 %v244, 4294901760
    %v1471 = vsub.f32 %v244, %v1470
    %1472 = vmatpush.msra.mxu0 %v1471
    %v1473 = vand.u32 %v195, 4294901760
    %v1474 = vsub.f32 %v195, %v1473
    %1475 = vmatmul.f32.gmra.mxu0 %v1474
    %v1476 = vpop.f32.mrf.mxu0
    %v1477 = vadd.f32 %v1423, %v1476
    %1478 = vdwg.mxu0
    %v1479 = vand.u32 %v259, 4294901760
    %1480 = vmatpush.msra.mxu0 %v1479
    %v1481 = vand.u32 %v258, 4294901760
    %1482 = vmatpush.msra.mxu0 %v1481
    %v1483 = vand.u32 %v257, 4294901760
    %1484 = vmatpush.msra.mxu0 %v1483
    %v1485 = vand.u32 %v256, 4294901760
    %1486 = vmatpush.msra.mxu0 %v1485
    %v1487 = vand.u32 %v255, 4294901760
    %1488 = vmatpush.msra.mxu0 %v1487
    %v1489 = vand.u32 %v254, 4294901760
    %1490 = vmatpush.msra.mxu0 %v1489
    %v1491 = vand.u32 %v253, 4294901760
    %1492 = vmatpush.msra.mxu0 %v1491
    %v1493 = vand.u32 %v252, 4294901760
    %1494 = vmatpush.msra.mxu0 %v1493
    %v1495 = vand.u32 %v251, 4294901760
    %1496 = vmatpush.msra.mxu0 %v1495
    %v1497 = vand.u32 %v250, 4294901760
    %1498 = vmatpush.msra.mxu0 %v1497
    %v1499 = vand.u32 %v249, 4294901760
    %1500 = vmatpush.msra.mxu0 %v1499
    %v1501 = vand.u32 %v248, 4294901760
    %1502 = vmatpush.msra.mxu0 %v1501
    %v1503 = vand.u32 %v247, 4294901760
    %1504 = vmatpush.msra.mxu0 %v1503
    %v1505 = vand.u32 %v246, 4294901760
    %1506 = vmatpush.msra.mxu0 %v1505
    %v1507 = vand.u32 %v245, 4294901760
    %1508 = vmatpush.msra.mxu0 %v1507
    %v1509 = vand.u32 %v244, 4294901760
    %1510 = vmatpush.msra.mxu0 %v1509
    %v1511 = vand.u32 %v195, 4294901760
    %v1512 = vsub.f32 %v195, %v1511
    %v1513 = vand.u32 %v1512, 4294901760
    %1514 = vmatmul.f32.gmra.mxu0 %v1513
    %v1515 = vpop.f32.mrf.mxu0
    %v1516 = vadd.f32 %v1477, %v1515
    %1517 = vdwg.mxu0
    %v1518 = vand.u32 %v259, 4294901760
    %v1519 = vsub.f32 %v259, %v1518
    %v1520 = vand.u32 %v1519, 4294901760
    %1521 = vmatpush.msra.mxu0 %v1520
    %v1522 = vand.u32 %v258, 4294901760
    %v1523 = vsub.f32 %v258, %v1522
    %v1524 = vand.u32 %v1523, 4294901760
    %1525 = vmatpush.msra.mxu0 %v1524
    %v1526 = vand.u32 %v257, 4294901760
    %v1527 = vsub.f32 %v257, %v1526
    %v1528 = vand.u32 %v1527, 4294901760
    %1529 = vmatpush.msra.mxu0 %v1528
    %v1530 = vand.u32 %v256, 4294901760
    %v1531 = vsub.f32 %v256, %v1530
    %v1532 = vand.u32 %v1531, 4294901760
    %1533 = vmatpush.msra.mxu0 %v1532
    %v1534 = vand.u32 %v255, 4294901760
    %v1535 = vsub.f32 %v255, %v1534
    %v1536 = vand.u32 %v1535, 4294901760
    %1537 = vmatpush.msra.mxu0 %v1536
    %v1538 = vand.u32 %v254, 4294901760
    %v1539 = vsub.f32 %v254, %v1538
    %v1540 = vand.u32 %v1539, 4294901760
    %1541 = vmatpush.msra.mxu0 %v1540
    %v1542 = vand.u32 %v253, 4294901760
    %v1543 = vsub.f32 %v253, %v1542
    %v1544 = vand.u32 %v1543, 4294901760
    %1545 = vmatpush.msra.mxu0 %v1544
    %v1546 = vand.u32 %v252, 4294901760
    %v1547 = vsub.f32 %v252, %v1546
    %v1548 = vand.u32 %v1547, 4294901760
    %1549 = vmatpush.msra.mxu0 %v1548
    %v1550 = vand.u32 %v251, 4294901760
    %v1551 = vsub.f32 %v251, %v1550
    %v1552 = vand.u32 %v1551, 4294901760
    %1553 = vmatpush.msra.mxu0 %v1552
    %v1554 = vand.u32 %v250, 4294901760
    %v1555 = vsub.f32 %v250, %v1554
    %v1556 = vand.u32 %v1555, 4294901760
    %1557 = vmatpush.msra.mxu0 %v1556
    %v1558 = vand.u32 %v249, 4294901760
    %v1559 = vsub.f32 %v249, %v1558
    %v1560 = vand.u32 %v1559, 4294901760
    %1561 = vmatpush.msra.mxu0 %v1560
    %v1562 = vand.u32 %v248, 4294901760
    %v1563 = vsub.f32 %v248, %v1562
    %v1564 = vand.u32 %v1563, 4294901760
    %1565 = vmatpush.msra.mxu0 %v1564
    %v1566 = vand.u32 %v247, 4294901760
    %v1567 = vsub.f32 %v247, %v1566
    %v1568 = vand.u32 %v1567, 4294901760
    %1569 = vmatpush.msra.mxu0 %v1568
    %v1570 = vand.u32 %v246, 4294901760
    %v1571 = vsub.f32 %v246, %v1570
    %v1572 = vand.u32 %v1571, 4294901760
    %1573 = vmatpush.msra.mxu0 %v1572
    %v1574 = vand.u32 %v245, 4294901760
    %v1575 = vsub.f32 %v245, %v1574
    %v1576 = vand.u32 %v1575, 4294901760
    %1577 = vmatpush.msra.mxu0 %v1576
    %v1578 = vand.u32 %v244, 4294901760
    %v1579 = vsub.f32 %v244, %v1578
    %v1580 = vand.u32 %v1579, 4294901760
    %1581 = vmatpush.msra.mxu0 %v1580
    %v1582 = vand.u32 %v195, 4294901760
    %1583 = vmatmul.f32.gmra.mxu0 %v1582
    %v1584 = vpop.f32.mrf.mxu0
    %v1585 = vadd.f32 %v1516, %v1584
    %1586 = vdwg.mxu0
    %v1587 = vand.u32 %v259, 4294901760
    %1588 = vmatpush.msra.mxu0 %v1587
    %v1589 = vand.u32 %v258, 4294901760
    %1590 = vmatpush.msra.mxu0 %v1589
    %v1591 = vand.u32 %v257, 4294901760
    %1592 = vmatpush.msra.mxu0 %v1591
    %v1593 = vand.u32 %v256, 4294901760
    %1594 = vmatpush.msra.mxu0 %v1593
    %v1595 = vand.u32 %v255, 4294901760
    %1596 = vmatpush.msra.mxu0 %v1595
    %v1597 = vand.u32 %v254, 4294901760
    %1598 = vmatpush.msra.mxu0 %v1597
    %v1599 = vand.u32 %v253, 4294901760
    %1600 = vmatpush.msra.mxu0 %v1599
    %v1601 = vand.u32 %v252, 4294901760
    %1602 = vmatpush.msra.mxu0 %v1601
    %v1603 = vand.u32 %v251, 4294901760
    %1604 = vmatpush.msra.mxu0 %v1603
    %v1605 = vand.u32 %v250, 4294901760
    %1606 = vmatpush.msra.mxu0 %v1605
    %v1607 = vand.u32 %v249, 4294901760
    %1608 = vmatpush.msra.mxu0 %v1607
    %v1609 = vand.u32 %v248, 4294901760
    %1610 = vmatpush.msra.mxu0 %v1609
    %v1611 = vand.u32 %v247, 4294901760
    %1612 = vmatpush.msra.mxu0 %v1611
    %v1613 = vand.u32 %v246, 4294901760
    %1614 = vmatpush.msra.mxu0 %v1613
    %v1615 = vand.u32 %v245, 4294901760
    %1616 = vmatpush.msra.mxu0 %v1615
    %v1617 = vand.u32 %v244, 4294901760
    %1618 = vmatpush.msra.mxu0 %v1617
    %v1619 = vand.u32 %v195, 4294901760
    %1620 = vmatmul.f32.gmra.mxu0 %v1619
    %v1621 = vpop.f32.mrf.mxu0
    %v1622 = vadd.f32 %v1585, %v1621
    %1623 = vdwg.mxu0
    %1624 = vst [vmem:[#allocation7] sm:$0xff] %v1622
    // Predicated region
    $region18: #{tpu_custom_call.1} parent=1 // pred_check
      _
    $region19: #{tpu_custom_call.1} parent=1 // pred_check_branch
      %1626 = sbr.rel (0) target = $region21
    $region20: #{tpu_custom_call.1} parent=1 // pred_region
      %1628 = vsyncadd [#allocation4], 0
      %s1630 = sshll.u32 [#allocation7], 4
      %s1631 = int_to_ptr.vmem [resolvable:$true] %s1630
      %s1632 = sshll.u32 %s2, 4
      %s1633 = int_to_ptr.hbm [resolvable:$true] %s1632
      %1635 = dma.vmem_to_hbm [thread:$0]  %s1631, 128, %s1633, [#allocation4]
    $region21: #{tpu_custom_call.1} parent=1 // pred_fallthru
      _
    // Predicated region
    $region22: #{tpu_custom_call.1} parent=1 // pred_check
      _
    $region23: #{tpu_custom_call.1} parent=1 // pred_check_branch
      %1637 = sbr.rel (0) target = $region25
    $region24: #{tpu_custom_call.1} parent=1 // pred_region
      %1639 = dma.done [#allocation4], 128
    $region25: #{tpu_custom_call.1} parent=1 // pred_fallthru
      _
    %1640 = vsyncpa [#allocation3], 1
    %1641 = vsyncpa [#allocation6], 1
    %1642 = vsyncpa [#allocation4], 1

// kernel: tpu_custom_call.1
$region0: #{tpu_custom_call.1}
  #allocation0 [shape = 'u32[]', space=smem, size = 0x4, offset = 0x4, fixed_abs, tag = 'smem constant byte address 0x4 - core index']
  #allocation1 [shape = 'u32[72,128]{1,0:T(1,128)}', space=vmem, size = 0x9000, scoped, tag = 'internal scratch']
  %s0 = inlined_call_operand.hbm [shape: s32[8,8], index: 0, kind: input, shape index: {}]
  %s1 = inlined_call_operand.hbm [shape: f32[512,128], index: 1, kind: input, shape index: {}]
  %s2 = inlined_call_operand.hbm [shape: f32[8,128], index: 2, kind: output, shape index: {}]
  %s3 = sld [smem:[#allocation0]]
  $region26: #{tpu_custom_call.1} parent=0
    _
  %s5 = ssub.s32 1, %s3
  %s6 = scalar_select 0, %s5, %s3
  $region1: #{tpu_custom_call.1} parent=0
    #allocation2 [shape = 'u8[4096]{0}', space=vmem, size = 0x1000, scoped, tag = 'input window, operand 0, single buffered']
    #allocation3 [shape = 's32[1]{0}', space=sflag, size = 0x4, scoped, tag = 'scoped memory for tpu_custom_call.1']
    #allocation4 [shape = 's32[1]{0}', space=sflag, size = 0x4, scoped, tag = 'scoped memory for tpu_custom_call.1']
    #allocation5 [shape = 'u8[262144]{0}', space=vmem, size = 0x40000, scoped, tag = 'input window, operand 1, single buffered']
    #allocation6 [shape = 's32[1]{0}', space=sflag, size = 0x4, scoped, tag = 'scoped memory for tpu_custom_call.1']
    #allocation7 [shape = 'u8[4096]{0}', space=vmem, size = 0x1000, scoped, tag = 'output window, operand 0, single buffered']
    %7 = vsyncpa [#allocation3], 0
    %8 = vsyncpa [#allocation6], 0
    %9 = vsyncpa [#allocation4], 0
    // Predicated region
    $region2: #{tpu_custom_call.1} parent=1 // pred_check
      _
    $region3: #{tpu_custom_call.1} parent=1 // pred_check_branch
      %11 = sbr.rel (0) target = $region5
    $region4: #{tpu_custom_call.1} parent=1 // pred_region
      %13 = vsyncadd [#allocation3], 0
      %s15 = sshll.u32 %s0, 4
      %s16 = int_to_ptr.hbm [resolvable:$true] %s15
      %s17 = sshll.u32 [#allocation2], 4
      %s18 = int_to_ptr.vmem [resolvable:$true] %s17
      %20 = dma.hbm_to_vmem [thread:$0]  %s16, 128, %s18, [#allocation3]
    $region5: #{tpu_custom_call.1} parent=1 // pred_fallthru
      _
    // Predicated region
    $region6: #{tpu_custom_call.1} parent=1 // pred_check
      _
    $region7: #{tpu_custom_call.1} parent=1 // pred_check_branch
      %22 = sbr.rel (0) target = $region9
    $region8: #{tpu_custom_call.1} parent=1 // pred_region
      %24 = vsyncadd [#allocation6], 0
      %s25 = sshll.u32 %s1, 4
      %s26 = int_to_ptr.hbm [resolvable:$true] %s25
      %s27 = sshll.u32 [#allocation5], 4
      %s28 = int_to_ptr.vmem [resolvable:$true] %s27
      %33 = dma.hbm_to_vmem [thread:$0]  %s26, 8192, %s28, [#allocation6], 128, 128, 8
    $region9: #{tpu_custom_call.1} parent=1 // pred_fallthru
      _
    // Predicated region
    $region10: #{tpu_custom_call.1} parent=1 // pred_check
      _
    $region11: #{tpu_custom_call.1} parent=1 // pred_check_branch
      %35 = sbr.rel (0) target = $region13
    $region12: #{tpu_custom_call.1} parent=1 // pred_region
      %37 = dma.done [#allocation3], 128
    $region13: #{tpu_custom_call.1} parent=1 // pred_fallthru
      _
    // Predicated region
    $region14: #{tpu_custom_call.1} parent=1 // pred_check
      _
    $region15: #{tpu_custom_call.1} parent=1 // pred_check_branch
      %39 = sbr.rel (0) target = $region17
    $region16: #{tpu_custom_call.1} parent=1 // pred_region
      %41 = dma.done [#allocation6], 8192
    $region17: #{tpu_custom_call.1} parent=1 // pred_fallthru
      _
    %v42 = vlaneseq
    %v43 = vand.u32 %v42, 127
    %v44 = vadd.s32 %v43, 128
    %v45 = vadd.s32 %v43, 256
    %v46 = vadd.s32 %v43, 384
    %v47 = vld [vmem:[#allocation2] sm:$0xff]
    %48 = vset.pattern.permute.xlu0 0
    %49 = vperm.xlu0 %48, %v47
    %v50 = vpop.permute.xlu0 %49
    %vm51 = vcmp.eq.s32.totalorder %v43, %v50
    %vm52 = vcmp.eq.s32.totalorder %v44, %v50
    %vm53 = vcmp.eq.s32.totalorder %v45, %v50
    %vm54 = vcmp.eq.s32.totalorder %v46, %v50
    %v55 = vsel %vm51, 1, 0
    %v56 = vsel %vm52, 1, 0
    %v57 = vsel %vm53, 1, 0
    %v58 = vsel %vm54, 1, 0
    %v59 = vcvt.s32.f32 %v55
    %v60 = vcvt.s32.f32 %v56
    %v61 = vcvt.s32.f32 %v57
    %v62 = vcvt.s32.f32 %v58
    %63 = vset.pattern.permute.xlu0 1
    %64 = vperm.xlu0 %63, %v47
    %v65 = vpop.permute.xlu0 %64
    %vm66 = vcmp.eq.s32.totalorder %v43, %v65
    %vm67 = vcmp.eq.s32.totalorder %v44, %v65
    %vm68 = vcmp.eq.s32.totalorder %v45, %v65
    %vm69 = vcmp.eq.s32.totalorder %v46, %v65
    %v70 = vsel %vm66, 1, 0
    %v71 = vsel %vm67, 1, 0
    %v72 = vsel %vm68, 1, 0
    %v73 = vsel %vm69, 1, 0
    %v74 = vcvt.s32.f32 %v70
    %v75 = vcvt.s32.f32 %v71
    %v76 = vcvt.s32.f32 %v72
    %v77 = vcvt.s32.f32 %v73
    %v78 = vadd.f32 %v59, %v74
    %v79 = vadd.f32 %v60, %v75
    %v80 = vadd.f32 %v61, %v76
    %v81 = vadd.f32 %v62, %v77
    %82 = vset.pattern.permute.xlu0 2
    %83 = vperm.xlu0 %82, %v47
    %v84 = vpop.permute.xlu0 %83
    %vm85 = vcmp.eq.s32.totalorder %v43, %v84
    %vm86 = vcmp.eq.s32.totalorder %v44, %v84
    %vm87 = vcmp.eq.s32.totalorder %v45, %v84
    %vm88 = vcmp.eq.s32.totalorder %v46, %v84
    %v89 = vsel %vm85, 1, 0
    %v90 = vsel %vm86, 1, 0
    %v91 = vsel %vm87, 1, 0
    %v92 = vsel %vm88, 1, 0
    %v93 = vcvt.s32.f32 %v89
    %v94 = vcvt.s32.f32 %v90
    %v95 = vcvt.s32.f32 %v91
    %v96 = vcvt.s32.f32 %v92
    %v97 = vadd.f32 %v78, %v93
    %v98 = vadd.f32 %v79, %v94
    %v99 = vadd.f32 %v80, %v95
    %v100 = vadd.f32 %v81, %v96
    %101 = vset.pattern.permute.xlu0 3
    %102 = vperm.xlu0 %101, %v47
    %v103 = vpop.permute.xlu0 %102
    %vm104 = vcmp.eq.s32.totalorder %v43, %v103
    %vm105 = vcmp.eq.s32.totalorder %v44, %v103
    %vm106 = vcmp.eq.s32.totalorder %v45, %v103
    %vm107 = vcmp.eq.s32.totalorder %v46, %v103
    %v108 = vsel %vm104, 1, 0
    %v109 = vsel %vm105, 1, 0
    %v110 = vsel %vm106, 1, 0
    %v111 = vsel %vm107, 1, 0
    %v112 = vcvt.s32.f32 %v108
    %v113 = vcvt.s32.f32 %v109
    %v114 = vcvt.s32.f32 %v110
    %v115 = vcvt.s32.f32 %v111
    %v116 = vadd.f32 %v97, %v112
    %v117 = vadd.f32 %v98, %v113
    %v118 = vadd.f32 %v99, %v114
    %v119 = vadd.f32 %v100, %v115
    %120 = vset.pattern.permute.xlu0 4
    %121 = vperm.xlu0 %120, %v47
    %v122 = vpop.permute.xlu0 %121
    %vm123 = vcmp.eq.s32.totalorder %v43, %v122
    %vm124 = vcmp.eq.s32.totalorder %v44, %v122
    %vm125 = vcmp.eq.s32.totalorder %v45, %v122
    %vm126 = vcmp.eq.s32.totalorder %v46, %v122
    %v127 = vsel %vm123, 1, 0
    %v128 = vsel %vm124, 1, 0
    %v129 = vsel %vm125, 1, 0
    %v130 = vsel %vm126, 1, 0
    %v131 = vcvt.s32.f32 %v127
    %v132 = vcvt.s32.f32 %v128
    %v133 = vcvt.s32.f32 %v129
    %v134 = vcvt.s32.f32 %v130
    %v135 = vadd.f32 %v116, %v131
    %v136 = vadd.f32 %v117, %v132
    %v137 = vadd.f32 %v118, %v133
    %v138 = vadd.f32 %v119, %v134
    %139 = vset.pattern.permute.xlu0 5
    %140 = vperm.xlu0 %139, %v47
    %v141 = vpop.permute.xlu0 %140
    %vm142 = vcmp.eq.s32.totalorder %v43, %v141
    %vm143 = vcmp.eq.s32.totalorder %v44, %v141
    %vm144 = vcmp.eq.s32.totalorder %v45, %v141
    %vm145 = vcmp.eq.s32.totalorder %v46, %v141
    %v146 = vsel %vm142, 1, 0
    %v147 = vsel %vm143, 1, 0
    %v148 = vsel %vm144, 1, 0
    %v149 = vsel %vm145, 1, 0
    %v150 = vcvt.s32.f32 %v146
    %v151 = vcvt.s32.f32 %v147
    %v152 = vcvt.s32.f32 %v148
    %v153 = vcvt.s32.f32 %v149
    %v154 = vadd.f32 %v135, %v150
    %v155 = vadd.f32 %v136, %v151
    %v156 = vadd.f32 %v137, %v152
    %v157 = vadd.f32 %v138, %v153
    %158 = vset.pattern.permute.xlu0 6
    %159 = vperm.xlu0 %158, %v47
    %v160 = vpop.permute.xlu0 %159
    %vm161 = vcmp.eq.s32.totalorder %v43, %v160
    %vm162 = vcmp.eq.s32.totalorder %v44, %v160
    %vm163 = vcmp.eq.s32.totalorder %v45, %v160
    %vm164 = vcmp.eq.s32.totalorder %v46, %v160
    %v165 = vsel %vm161, 1, 0
    %v166 = vsel %vm162, 1, 0
    %v167 = vsel %vm163, 1, 0
    %v168 = vsel %vm164, 1, 0
    %v169 = vcvt.s32.f32 %v165
    %v170 = vcvt.s32.f32 %v166
    %v171 = vcvt.s32.f32 %v167
    %v172 = vcvt.s32.f32 %v168
    %v173 = vadd.f32 %v154, %v169
    %v174 = vadd.f32 %v155, %v170
    %v175 = vadd.f32 %v156, %v171
    %v176 = vadd.f32 %v157, %v172
    %177 = vset.pattern.permute.xlu0 7
    %178 = vperm.xlu0 %177, %v47
    %v179 = vpop.permute.xlu0 %178
    %vm180 = vcmp.eq.s32.totalorder %v43, %v179
    %vm181 = vcmp.eq.s32.totalorder %v44, %v179
    %vm182 = vcmp.eq.s32.totalorder %v45, %v179
    %vm183 = vcmp.eq.s32.totalorder %v46, %v179
    %v184 = vsel %vm180, 1, 0
    %v185 = vsel %vm181, 1, 0
    %v186 = vsel %vm182, 1, 0
    %v187 = vsel %vm183, 1, 0
    %v188 = vcvt.s32.f32 %v184
    %v189 = vcvt.s32.f32 %v185
    %v190 = vcvt.s32.f32 %v186
    %v191 = vcvt.s32.f32 %v187
    %v192 = vadd.f32 %v173, %v188
    %v193 = vadd.f32 %v174, %v189
    %v194 = vadd.f32 %v175, %v190
    %v195 = vadd.f32 %v176, %v191
    %v196 = vld [vmem:[#allocation5] sm:$0xff]
    %v197 = vld [vmem:[#allocation5 + $0x8] sm:$0xff]
    %v198 = vld [vmem:[#allocation5 + $0x10] sm:$0xff]
    %v199 = vld [vmem:[#allocation5 + $0x18] sm:$0xff]
    %v200 = vld [vmem:[#allocation5 + $0x20] sm:$0xff]
    %v201 = vld [vmem:[#allocation5 + $0x28] sm:$0xff]
    %v202 = vld [vmem:[#allocation5 + $0x30] sm:$0xff]
    %v203 = vld [vmem:[#allocation5 + $0x38] sm:$0xff]
    %v204 = vld [vmem:[#allocation5 + $0x40] sm:$0xff]
    %v205 = vld [vmem:[#allocation5 + $0x48] sm:$0xff]
    %v206 = vld [vmem:[#allocation5 + $0x50] sm:$0xff]
    %v207 = vld [vmem:[#allocation5 + $0x58] sm:$0xff]
    %v208 = vld [vmem:[#allocation5 + $0x60] sm:$0xff]
    %v209 = vld [vmem:[#allocation5 + $0x68] sm:$0xff]
    %v210 = vld [vmem:[#allocation5 + $0x70] sm:$0xff]
    %v211 = vld [vmem:[#allocation5 + $0x78] sm:$0xff]
    %v212 = vld [vmem:[#allocation5 + $0x80] sm:$0xff]
    %v213 = vld [vmem:[#allocation5 + $0x88] sm:$0xff]
    %v214 = vld [vmem:[#allocation5 + $0x90] sm:$0xff]
    %v215 = vld [vmem:[#allocation5 + $0x98] sm:$0xff]
    %v216 = vld [vmem:[#allocation5 + $0xa0] sm:$0xff]
    %v217 = vld [vmem:[#allocation5 + $0xa8] sm:$0xff]
    %v218 = vld [vmem:[#allocation5 + $0xb0] sm:$0xff]
    %v219 = vld [vmem:[#allocation5 + $0xb8] sm:$0xff]
    %v220 = vld [vmem:[#allocation5 + $0xc0] sm:$0xff]
    %v221 = vld [vmem:[#allocation5 + $0xc8] sm:$0xff]
    %v222 = vld [vmem:[#allocation5 + $0xd0] sm:$0xff]
    %v223 = vld [vmem:[#allocation5 + $0xd8] sm:$0xff]
    %v224 = vld [vmem:[#allocation5 + $0xe0] sm:$0xff]
    %v225 = vld [vmem:[#allocation5 + $0xe8] sm:$0xff]
    %v226 = vld [vmem:[#allocation5 + $0xf0] sm:$0xff]
    %v227 = vld [vmem:[#allocation5 + $0xf8] sm:$0xff]
    %v228 = vld [vmem:[#allocation5 + $0x100] sm:$0xff]
    %v229 = vld [vmem:[#allocation5 + $0x108] sm:$0xff]
    %v230 = vld [vmem:[#allocation5 + $0x110] sm:$0xff]
    %v231 = vld [vmem:[#allocation5 + $0x118] sm:$0xff]
    %v232 = vld [vmem:[#allocation5 + $0x120] sm:$0xff]
    %v233 = vld [vmem:[#allocation5 + $0x128] sm:$0xff]
    %v234 = vld [vmem:[#allocation5 + $0x130] sm:$0xff]
    %v235 = vld [vmem:[#allocation5 + $0x138] sm:$0xff]
    %v236 = vld [vmem:[#allocation5 + $0x140] sm:$0xff]
    %v237 = vld [vmem:[#allocation5 + $0x148] sm:$0xff]
    %v238 = vld [vmem:[#allocation5 + $0x150] sm:$0xff]
    %v239 = vld [vmem:[#allocation5 + $0x158] sm:$0xff]
    %v240 = vld [vmem:[#allocation5 + $0x160] sm:$0xff]
    %v241 = vld [vmem:[#allocation5 + $0x168] sm:$0xff]
    %v242 = vld [vmem:[#allocation5 + $0x170] sm:$0xff]
    %v243 = vld [vmem:[#allocation5 + $0x178] sm:$0xff]
    %v244 = vld [vmem:[#allocation5 + $0x180] sm:$0xff]
    %v245 = vld [vmem:[#allocation5 + $0x188] sm:$0xff]
    %v246 = vld [vmem:[#allocation5 + $0x190] sm:$0xff]
    %v247 = vld [vmem:[#allocation5 + $0x198] sm:$0xff]
    %v248 = vld [vmem:[#allocation5 + $0x1a0] sm:$0xff]
    %v249 = vld [vmem:[#allocation5 + $0x1a8] sm:$0xff]
    %v250 = vld [vmem:[#allocation5 + $0x1b0] sm:$0xff]
    %v251 = vld [vmem:[#allocation5 + $0x1b8] sm:$0xff]
    %v252 = vld [vmem:[#allocation5 + $0x1c0] sm:$0xff]
    %v253 = vld [vmem:[#allocation5 + $0x1c8] sm:$0xff]
    %v254 = vld [vmem:[#allocation5 + $0x1d0] sm:$0xff]
    %v255 = vld [vmem:[#allocation5 + $0x1d8] sm:$0xff]
    %v256 = vld [vmem:[#allocation5 + $0x1e0] sm:$0xff]
    %v257 = vld [vmem:[#allocation5 + $0x1e8] sm:$0xff]
    %v258 = vld [vmem:[#allocation5 + $0x1f0] sm:$0xff]
    %v259 = vld [vmem:[#allocation5 + $0x1f8] sm:$0xff]
    %v260 = vand.u32 %v211, 4294901760
    %261 = vmatpush.msra.mxu0 %v260
    %v262 = vand.u32 %v210, 4294901760
    %263 = vmatpush.msra.mxu0 %v262
    %v264 = vand.u32 %v209, 4294901760
    %265 = vmatpush.msra.mxu0 %v264
    %v266 = vand.u32 %v208, 4294901760
    %267 = vmatpush.msra.mxu0 %v266
    %v268 = vand.u32 %v207, 4294901760
    %269 = vmatpush.msra.mxu0 %v268
    %v270 = vand.u32 %v206, 4294901760
    %271 = vmatpush.msra.mxu0 %v270
    %v272 = vand.u32 %v205, 4294901760
    %273 = vmatpush.msra.mxu0 %v272
    %v274 = vand.u32 %v204, 4294901760
    %275 = vmatpush.msra.mxu0 %v274
    %v276 = vand.u32 %v203, 4294901760
    %277 = vmatpush.msra.mxu0 %v276
    %v278 = vand.u32 %v202, 4294901760
    %279 = vmatpush.msra.mxu0 %v278
    %v280 = vand.u32 %v201, 4294901760
    %281 = vmatpush.msra.mxu0 %v280
    %v282 = vand.u32 %v200, 4294901760
    %283 = vmatpush.msra.mxu0 %v282
    %v284 = vand.u32 %v199, 4294901760
    %285 = vmatpush.msra.mxu0 %v284
    %v286 = vand.u32 %v198, 4294901760
    %287 = vmatpush.msra.mxu0 %v286
    %v288 = vand.u32 %v197, 4294901760
    %289 = vmatpush.msra.mxu0 %v288
    %v290 = vand.u32 %v196, 4294901760
    %291 = vmatpush.msra.mxu0 %v290
    %v292 = vand.u32 %v192, 4294901760
    %v293 = vsub.f32 %v192, %v292
    %v294 = vand.u32 %v293, 4294901760
    %v295 = vsub.f32 %v293, %v294
    %v296 = vand.u32 %v295, 4294901760
    %297 = vmatmul.f32.gmra.mxu0 %v296
    %v298 = vpop.f32.mrf.mxu0
    %v299 = vadd.f32 0.0, %v298
    %300 = vdwg.mxu0
    %v301 = vand.u32 %v211, 4294901760
    %v302 = vsub.f32 %v211, %v301
    %v303 = vand.u32 %v302, 4294901760
    %v304 = vsub.f32 %v302, %v303
    %v305 = vand.u32 %v304, 4294901760
    %306 = vmatpush.msra.mxu0 %v305
    %v307 = vand.u32 %v210, 4294901760
    %v308 = vsub.f32 %v210, %v307
    %v309 = vand.u32 %v308, 4294901760
    %v310 = vsub.f32 %v308, %v309
    %v311 = vand.u32 %v310, 4294901760
    %312 = vmatpush.msra.mxu0 %v311
    %v313 = vand.u32 %v209, 4294901760
    %v314 = vsub.f32 %v209, %v313
    %v315 = vand.u32 %v314, 4294901760
    %v316 = vsub.f32 %v314, %v315
    %v317 = vand.u32 %v316, 4294901760
    %318 = vmatpush.msra.mxu0 %v317
    %v319 = vand.u32 %v208, 4294901760
    %v320 = vsub.f32 %v208, %v319
    %v321 = vand.u32 %v320, 4294901760
    %v322 = vsub.f32 %v320, %v321
    %v323 = vand.u32 %v322, 4294901760
    %324 = vmatpush.msra.mxu0 %v323
    %v325 = vand.u32 %v207, 4294901760
    %v326 = vsub.f32 %v207, %v325
    %v327 = vand.u32 %v326, 4294901760
    %v328 = vsub.f32 %v326, %v327
    %v329 = vand.u32 %v328, 4294901760
    %330 = vmatpush.msra.mxu0 %v329
    %v331 = vand.u32 %v206, 4294901760
    %v332 = vsub.f32 %v206, %v331
    %v333 = vand.u32 %v332, 4294901760
    %v334 = vsub.f32 %v332, %v333
    %v335 = vand.u32 %v334, 4294901760
    %336 = vmatpush.msra.mxu0 %v335
    %v337 = vand.u32 %v205, 4294901760
    %v338 = vsub.f32 %v205, %v337
    %v339 = vand.u32 %v338, 4294901760
    %v340 = vsub.f32 %v338, %v339
    %v341 = vand.u32 %v340, 4294901760
    %342 = vmatpush.msra.mxu0 %v341
    %v343 = vand.u32 %v204, 4294901760
    %v344 = vsub.f32 %v204, %v343
    %v345 = vand.u32 %v344, 4294901760
    %v346 = vsub.f32 %v344, %v345
    %v347 = vand.u32 %v346, 4294901760
    %348 = vmatpush.msra.mxu0 %v347
    %v349 = vand.u32 %v203, 4294901760
    %v350 = vsub.f32 %v203, %v349
    %v351 = vand.u32 %v350, 4294901760
    %v352 = vsub.f32 %v350, %v351
    %v353 = vand.u32 %v352, 4294901760
    %354 = vmatpush.msra.mxu0 %v353
    %v355 = vand.u32 %v202, 4294901760
    %v356 = vsub.f32 %v202, %v355
    %v357 = vand.u32 %v356, 4294901760
    %v358 = vsub.f32 %v356, %v357
    %v359 = vand.u32 %v358, 4294901760
    %360 = vmatpush.msra.mxu0 %v359
    %v361 = vand.u32 %v201, 4294901760
    %v362 = vsub.f32 %v201, %v361
    %v363 = vand.u32 %v362, 4294901760
    %v364 = vsub.f32 %v362, %v363
    %v365 = vand.u32 %v364, 4294901760
    %366 = vmatpush.msra.mxu0 %v365
    %v367 = vand.u32 %v200, 4294901760
    %v368 = vsub.f32 %v200, %v367
    %v369 = vand.u32 %v368, 4294901760
    %v370 = vsub.f32 %v368, %v369
    %v371 = vand.u32 %v370, 4294901760
    %372 = vmatpush.msra.mxu0 %v371
    %v373 = vand.u32 %v199, 4294901760
    %v374 = vsub.f32 %v199, %v373
    %v375 = vand.u32 %v374, 4294901760
    %v376 = vsub.f32 %v374, %v375
    %v377 = vand.u32 %v376, 4294901760
    %378 = vmatpush.msra.mxu0 %v377
    %v379 = vand.u32 %v198, 4294901760
    %v380 = vsub.f32 %v198, %v379
    %v381 = vand.u32 %v380, 4294901760
    %v382 = vsub.f32 %v380, %v381
    %v383 = vand.u32 %v382, 4294901760
    %384 = vmatpush.msra.mxu0 %v383
    %v385 = vand.u32 %v197, 4294901760
    %v386 = vsub.f32 %v197, %v385
    %v387 = vand.u32 %v386, 4294901760
    %v388 = vsub.f32 %v386, %v387
    %v389 = vand.u32 %v388, 4294901760
    %390 = vmatpush.msra.mxu0 %v389
    %v391 = vand.u32 %v196, 4294901760
    %v392 = vsub.f32 %v196, %v391
    %v393 = vand.u32 %v392, 4294901760
    %v394 = vsub.f32 %v392, %v393
    %v395 = vand.u32 %v394, 4294901760
    %396 = vmatpush.msra.mxu0 %v395
    %v397 = vand.u32 %v192, 4294901760
    %398 = vmatmul.f32.gmra.mxu0 %v397
    %v399 = vpop.f32.mrf.mxu0
    %v400 = vadd.f32 %v299, %v399
    %401 = vdwg.mxu0
    %v402 = vand.u32 %v211, 4294901760
    %v403 = vsub.f32 %v211, %v402
    %404 = vmatpush.msra.mxu0 %v403
    %v405 = vand.u32 %v210, 4294901760
    %v406 = vsub.f32 %v210, %v405
    %407 = vmatpush.msra.mxu0 %v406
    %v408 = vand.u32 %v209, 4294901760
    %v409 = vsub.f32 %v209, %v408
    %410 = vmatpush.msra.mxu0 %v409
    %v411 = vand.u32 %v208, 4294901760
    %v412 = vsub.f32 %v208, %v411
    %413 = vmatpush.msra.mxu0 %v412
    %v414 = vand.u32 %v207, 4294901760
    %v415 = vsub.f32 %v207, %v414
    %416 = vmatpush.msra.mxu0 %v415
    %v417 = vand.u32 %v206, 4294901760
    %v418 = vsub.f32 %v206, %v417
    %419 = vmatpush.msra.mxu0 %v418
    %v420 = vand.u32 %v205, 4294901760
    %v421 = vsub.f32 %v205, %v420
    %422 = vmatpush.msra.mxu0 %v421
    %v423 = vand.u32 %v204, 4294901760
    %v424 = vsub.f32 %v204, %v423
    %425 = vmatpush.msra.mxu0 %v424
    %v426 = vand.u32 %v203, 4294901760
    %v427 = vsub.f32 %v203, %v426
    %428 = vmatpush.msra.mxu0 %v427
    %v429 = vand.u32 %v202, 4294901760
    %v430 = vsub.f32 %v202, %v429
    %431 = vmatpush.msra.mxu0 %v430
    %v432 = vand.u32 %v201, 4294901760
    %v433 = vsub.f32 %v201, %v432
    %434 = vmatpush.msra.mxu0 %v433
    %v435 = vand.u32 %v200, 4294901760
    %v436 = vsub.f32 %v200, %v435
    %437 = vmatpush.msra.mxu0 %v436
    %v438 = vand.u32 %v199, 4294901760
    %v439 = vsub.f32 %v199, %v438
    %440 = vmatpush.msra.mxu0 %v439
    %v441 = vand.u32 %v198, 4294901760
    %v442 = vsub.f32 %v198, %v441
    %443 = vmatpush.msra.mxu0 %v442
    %v444 = vand.u32 %v197, 4294901760
    %v445 = vsub.f32 %v197, %v444
    %446 = vmatpush.msra.mxu0 %v445
    %v447 = vand.u32 %v196, 4294901760
    %v448 = vsub.f32 %v196, %v447
    %449 = vmatpush.msra.mxu0 %v448
    %v450 = vand.u32 %v192, 4294901760
    %v451 = vsub.f32 %v192, %v450
    %452 = vmatmul.f32.gmra.mxu0 %v451
    %v453 = vpop.f32.mrf.mxu0
    %v454 = vadd.f32 %v400, %v453
    %455 = vdwg.mxu0
    %v456 = vand.u32 %v211, 4294901760
    %457 = vmatpush.msra.mxu0 %v456
    %v458 = vand.u32 %v210, 4294901760
    %459 = vmatpush.msra.mxu0 %v458
    %v460 = vand.u32 %v209, 4294901760
    %461 = vmatpush.msra.mxu0 %v460
    %v462 = vand.u32 %v208, 4294901760
    %463 = vmatpush.msra.mxu0 %v462
    %v464 = vand.u32 %v207, 4294901760
    %465 = vmatpush.msra.mxu0 %v464
    %v466 = vand.u32 %v206, 4294901760
    %467 = vmatpush.msra.mxu0 %v466
    %v468 = vand.u32 %v205, 4294901760
    %469 = vmatpush.msra.mxu0 %v468
    %v470 = vand.u32 %v204, 4294901760
    %471 = vmatpush.msra.mxu0 %v470
    %v472 = vand.u32 %v203, 4294901760
    %473 = vmatpush.msra.mxu0 %v472
    %v474 = vand.u32 %v202, 4294901760
    %475 = vmatpush.msra.mxu0 %v474
    %v476 = vand.u32 %v201, 4294901760
    %477 = vmatpush.msra.mxu0 %v476
    %v478 = vand.u32 %v200, 4294901760
    %479 = vmatpush.msra.mxu0 %v478
    %v480 = vand.u32 %v199, 4294901760
    %481 = vmatpush.msra.mxu0 %v480
    %v482 = vand.u32 %v198, 4294901760
    %483 = vmatpush.msra.mxu0 %v482
    %v484 = vand.u32 %v197, 4294901760
    %485 = vmatpush.msra.mxu0 %v484
    %v486 = vand.u32 %v196, 4294901760
    %487 = vmatpush.msra.mxu0 %v486
    %v488 = vand.u32 %v192, 4294901760
    %v489 = vsub.f32 %v192, %v488
    %v490 = vand.u32 %v489, 4294901760
    %491 = vmatmul.f32.gmra.mxu0 %v490
    %v492 = vpop.f32.mrf.mxu0
    %v493 = vadd.f32 %v454, %v492
    %494 = vdwg.mxu0
    %v495 = vand.u32 %v211, 4294901760
    %v496 = vsub.f32 %v211, %v495
    %v497 = vand.u32 %v496, 4294901760
    %498 = vmatpush.msra.mxu0 %v497
    %v499 = vand.u32 %v210, 4294901760
    %v500 = vsub.f32 %v210, %v499
    %v501 = vand.u32 %v500, 4294901760
    %502 = vmatpush.msra.mxu0 %v501
    %v503 = vand.u32 %v209, 4294901760
    %v504 = vsub.f32 %v209, %v503
    %v505 = vand.u32 %v504, 4294901760
    %506 = vmatpush.msra.mxu0 %v505
    %v507 = vand.u32 %v208, 4294901760
    %v508 = vsub.f32 %v208, %v507
    %v509 = vand.u32 %v508, 4294901760
    %510 = vmatpush.msra.mxu0 %v509
    %v511 = vand.u32 %v207, 4294901760
    %v512 = vsub.f32 %v207, %v511
    %v513 = vand.u32 %v512, 4294901760
    %514 = vmatpush.msra.mxu0 %v513
    %v515 = vand.u32 %v206, 4294901760
    %v516 = vsub.f32 %v206, %v515
    %v517 = vand.u32 %v516, 4294901760
    %518 = vmatpush.msra.mxu0 %v517
    %v519 = vand.u32 %v205, 4294901760
    %v520 = vsub.f32 %v205, %v519
    %v521 = vand.u32 %v520, 4294901760
    %522 = vmatpush.msra.mxu0 %v521
    %v523 = vand.u32 %v204, 4294901760
    %v524 = vsub.f32 %v204, %v523
    %v525 = vand.u32 %v524, 4294901760
    %526 = vmatpush.msra.mxu0 %v525
    %v527 = vand.u32 %v203, 4294901760
    %v528 = vsub.f32 %v203, %v527
    %v529 = vand.u32 %v528, 4294901760
    %530 = vmatpush.msra.mxu0 %v529
    %v531 = vand.u32 %v202, 4294901760
    %v532 = vsub.f32 %v202, %v531
    %v533 = vand.u32 %v532, 4294901760
    %534 = vmatpush.msra.mxu0 %v533
    %v535 = vand.u32 %v201, 4294901760
    %v536 = vsub.f32 %v201, %v535
    %v537 = vand.u32 %v536, 4294901760
    %538 = vmatpush.msra.mxu0 %v537
    %v539 = vand.u32 %v200, 4294901760
    %v540 = vsub.f32 %v200, %v539
    %v541 = vand.u32 %v540, 4294901760
    %542 = vmatpush.msra.mxu0 %v541
    %v543 = vand.u32 %v199, 4294901760
    %v544 = vsub.f32 %v199, %v543
    %v545 = vand.u32 %v544, 4294901760
    %546 = vmatpush.msra.mxu0 %v545
    %v547 = vand.u32 %v198, 4294901760
    %v548 = vsub.f32 %v198, %v547
    %v549 = vand.u32 %v548, 4294901760
    %550 = vmatpush.msra.mxu0 %v549
    %v551 = vand.u32 %v197, 4294901760
    %v552 = vsub.f32 %v197, %v551
    %v553 = vand.u32 %v552, 4294901760
    %554 = vmatpush.msra.mxu0 %v553
    %v555 = vand.u32 %v196, 4294901760
    %v556 = vsub.f32 %v196, %v555
    %v557 = vand.u32 %v556, 4294901760
    %558 = vmatpush.msra.mxu0 %v557
    %v559 = vand.u32 %v192, 4294901760
    %560 = vmatmul.f32.gmra.mxu0 %v559
    %v561 = vpop.f32.mrf.mxu0
    %v562 = vadd.f32 %v493, %v561
    %563 = vdwg.mxu0
    %v564 = vand.u32 %v211, 4294901760
    %565 = vmatpush.msra.mxu0 %v564
    %v566 = vand.u32 %v210, 4294901760
    %567 = vmatpush.msra.mxu0 %v566
    %v568 = vand.u32 %v209, 4294901760
    %569 = vmatpush.msra.mxu0 %v568
    %v570 = vand.u32 %v208, 4294901760
    %571 = vmatpush.msra.mxu0 %v570
    %v572 = vand.u32 %v207, 4294901760
    %573 = vmatpush.msra.mxu0 %v572
    %v574 = vand.u32 %v206, 4294901760
    %575 = vmatpush.msra.mxu0 %v574
    %v576 = vand.u32 %v205, 4294901760
    %577 = vmatpush.msra.mxu0 %v576
    %v578 = vand.u32 %v204, 4294901760
    %579 = vmatpush.msra.mxu0 %v578
    %v580 = vand.u32 %v203, 4294901760
    %581 = vmatpush.msra.mxu0 %v580
    %v582 = vand.u32 %v202, 4294901760
    %583 = vmatpush.msra.mxu0 %v582
    %v584 = vand.u32 %v201, 4294901760
    %585 = vmatpush.msra.mxu0 %v584
    %v586 = vand.u32 %v200, 4294901760
    %587 = vmatpush.msra.mxu0 %v586
    %v588 = vand.u32 %v199, 4294901760
    %589 = vmatpush.msra.mxu0 %v588
    %v590 = vand.u32 %v198, 4294901760
    %591 = vmatpush.msra.mxu0 %v590
    %v592 = vand.u32 %v197, 4294901760
    %593 = vmatpush.msra.mxu0 %v592
    %v594 = vand.u32 %v196, 4294901760
    %595 = vmatpush.msra.mxu0 %v594
    %v596 = vand.u32 %v192, 4294901760
    %597 = vmatmul.f32.gmra.mxu0 %v596
    %v598 = vpop.f32.mrf.mxu0
    %v599 = vadd.f32 %v562, %v598
    %600 = vdwg.mxu0
    %v601 = vand.u32 %v227, 4294901760
    %602 = vmatpush.msra.mxu0 %v601
    %v603 = vand.u32 %v226, 4294901760
    %604 = vmatpush.msra.mxu0 %v603
    %v605 = vand.u32 %v225, 4294901760
    %606 = vmatpush.msra.mxu0 %v605
    %v607 = vand.u32 %v224, 4294901760
    %608 = vmatpush.msra.mxu0 %v607
    %v609 = vand.u32 %v223, 4294901760
    %610 = vmatpush.msra.mxu0 %v609
    %v611 = vand.u32 %v222, 4294901760
    %612 = vmatpush.msra.mxu0 %v611
    %v613 = vand.u32 %v221, 4294901760
    %614 = vmatpush.msra.mxu0 %v613
    %v615 = vand.u32 %v220, 4294901760
    %616 = vmatpush.msra.mxu0 %v615
    %v617 = vand.u32 %v219, 4294901760
    %618 = vmatpush.msra.mxu0 %v617
    %v619 = vand.u32 %v218, 4294901760
    %620 = vmatpush.msra.mxu0 %v619
    %v621 = vand.u32 %v217, 4294901760
    %622 = vmatpush.msra.mxu0 %v621
    %v623 = vand.u32 %v216, 4294901760
    %624 = vmatpush.msra.mxu0 %v623
    %v625 = vand.u32 %v215, 4294901760
    %626 = vmatpush.msra.mxu0 %v625
    %v627 = vand.u32 %v214, 4294901760
    %628 = vmatpush.msra.mxu0 %v627
    %v629 = vand.u32 %v213, 4294901760
    %630 = vmatpush.msra.mxu0 %v629
    %v631 = vand.u32 %v212, 4294901760
    %632 = vmatpush.msra.mxu0 %v631
    %v633 = vand.u32 %v193, 4294901760
    %v634 = vsub.f32 %v193, %v633
    %v635 = vand.u32 %v634, 4294901760
    %v636 = vsub.f32 %v634, %v635
    %v637 = vand.u32 %v636, 4294901760
    %638 = vmatmul.f32.gmra.mxu0 %v637
    %v639 = vpop.f32.mrf.mxu0
    %v640 = vadd.f32 %v599, %v639
    %641 = vdwg.mxu0
    %v642 = vand.u32 %v227, 4294901760
    %v643 = vsub.f32 %v227, %v642
    %v644 = vand.u32 %v643, 4294901760
    %v645 = vsub.f32 %v643, %v644
    %v646 = vand.u32 %v645, 4294901760
    %647 = vmatpush.msra.mxu0 %v646
    %v648 = vand.u32 %v226, 4294901760
    %v649 = vsub.f32 %v226, %v648
    %v650 = vand.u32 %v649, 4294901760
    %v651 = vsub.f32 %v649, %v650
    %v652 = vand.u32 %v651, 4294901760
    %653 = vmatpush.msra.mxu0 %v652
    %v654 = vand.u32 %v225, 4294901760
    %v655 = vsub.f32 %v225, %v654
    %v656 = vand.u32 %v655, 4294901760
    %v657 = vsub.f32 %v655, %v656
    %v658 = vand.u32 %v657, 4294901760
    %659 = vmatpush.msra.mxu0 %v658
    %v660 = vand.u32 %v224, 4294901760
    %v661 = vsub.f32 %v224, %v660
    %v662 = vand.u32 %v661, 4294901760
    %v663 = vsub.f32 %v661, %v662
    %v664 = vand.u32 %v663, 4294901760
    %665 = vmatpush.msra.mxu0 %v664
    %v666 = vand.u32 %v223, 4294901760
    %v667 = vsub.f32 %v223, %v666
    %v668 = vand.u32 %v667, 4294901760
    %v669 = vsub.f32 %v667, %v668
    %v670 = vand.u32 %v669, 4294901760
    %671 = vmatpush.msra.mxu0 %v670
    %v672 = vand.u32 %v222, 4294901760
    %v673 = vsub.f32 %v222, %v672
    %v674 = vand.u32 %v673, 4294901760
    %v675 = vsub.f32 %v673, %v674
    %v676 = vand.u32 %v675, 4294901760
    %677 = vmatpush.msra.mxu0 %v676
    %v678 = vand.u32 %v221, 4294901760
    %v679 = vsub.f32 %v221, %v678
    %v680 = vand.u32 %v679, 4294901760
    %v681 = vsub.f32 %v679, %v680
    %v682 = vand.u32 %v681, 4294901760
    %683 = vmatpush.msra.mxu0 %v682
    %v684 = vand.u32 %v220, 4294901760
    %v685 = vsub.f32 %v220, %v684
    %v686 = vand.u32 %v685, 4294901760
    %v687 = vsub.f32 %v685, %v686
    %v688 = vand.u32 %v687, 4294901760
    %689 = vmatpush.msra.mxu0 %v688
    %v690 = vand.u32 %v219, 4294901760
    %v691 = vsub.f32 %v219, %v690
    %v692 = vand.u32 %v691, 4294901760
    %v693 = vsub.f32 %v691, %v692
    %v694 = vand.u32 %v693, 4294901760
    %695 = vmatpush.msra.mxu0 %v694
    %v696 = vand.u32 %v218, 4294901760
    %v697 = vsub.f32 %v218, %v696
    %v698 = vand.u32 %v697, 4294901760
    %v699 = vsub.f32 %v697, %v698
    %v700 = vand.u32 %v699, 4294901760
    %701 = vmatpush.msra.mxu0 %v700
    %v702 = vand.u32 %v217, 4294901760
    %v703 = vsub.f32 %v217, %v702
    %v704 = vand.u32 %v703, 4294901760
    %v705 = vsub.f32 %v703, %v704
    %v706 = vand.u32 %v705, 4294901760
    %707 = vmatpush.msra.mxu0 %v706
    %v708 = vand.u32 %v216, 4294901760
    %v709 = vsub.f32 %v216, %v708
    %v710 = vand.u32 %v709, 4294901760
    %v711 = vsub.f32 %v709, %v710
    %v712 = vand.u32 %v711, 4294901760
    %713 = vmatpush.msra.mxu0 %v712
    %v714 = vand.u32 %v215, 4294901760
    %v715 = vsub.f32 %v215, %v714
    %v716 = vand.u32 %v715, 4294901760
    %v717 = vsub.f32 %v715, %v716
    %v718 = vand.u32 %v717, 4294901760
    %719 = vmatpush.msra.mxu0 %v718
    %v720 = vand.u32 %v214, 4294901760
    %v721 = vsub.f32 %v214, %v720
    %v722 = vand.u32 %v721, 4294901760
    %v723 = vsub.f32 %v721, %v722
    %v724 = vand.u32 %v723, 4294901760
    %725 = vmatpush.msra.mxu0 %v724
    %v726 = vand.u32 %v213, 4294901760
    %v727 = vsub.f32 %v213, %v726
    %v728 = vand.u32 %v727, 4294901760
    %v729 = vsub.f32 %v727, %v728
    %v730 = vand.u32 %v729, 4294901760
    %731 = vmatpush.msra.mxu0 %v730
    %v732 = vand.u32 %v212, 4294901760
    %v733 = vsub.f32 %v212, %v732
    %v734 = vand.u32 %v733, 4294901760
    %v735 = vsub.f32 %v733, %v734
    %v736 = vand.u32 %v735, 4294901760
    %737 = vmatpush.msra.mxu0 %v736
    %v738 = vand.u32 %v193, 4294901760
    %739 = vmatmul.f32.gmra.mxu0 %v738
    %v740 = vpop.f32.mrf.mxu0
    %v741 = vadd.f32 %v640, %v740
    %742 = vdwg.mxu0
    %v743 = vand.u32 %v227, 4294901760
    %v744 = vsub.f32 %v227, %v743
    %745 = vmatpush.msra.mxu0 %v744
    %v746 = vand.u32 %v226, 4294901760
    %v747 = vsub.f32 %v226, %v746
    %748 = vmatpush.msra.mxu0 %v747
    %v749 = vand.u32 %v225, 4294901760
    %v750 = vsub.f32 %v225, %v749
    %751 = vmatpush.msra.mxu0 %v750
    %v752 = vand.u32 %v224, 4294901760
    %v753 = vsub.f32 %v224, %v752
    %754 = vmatpush.msra.mxu0 %v753
    %v755 = vand.u32 %v223, 4294901760
    %v756 = vsub.f32 %v223, %v755
    %757 = vmatpush.msra.mxu0 %v756
    %v758 = vand.u32 %v222, 4294901760
    %v759 = vsub.f32 %v222, %v758
    %760 = vmatpush.msra.mxu0 %v759
    %v761 = vand.u32 %v221, 4294901760
    %v762 = vsub.f32 %v221, %v761
    %763 = vmatpush.msra.mxu0 %v762
    %v764 = vand.u32 %v220, 4294901760
    %v765 = vsub.f32 %v220, %v764
    %766 = vmatpush.msra.mxu0 %v765
    %v767 = vand.u32 %v219, 4294901760
    %v768 = vsub.f32 %v219, %v767
    %769 = vmatpush.msra.mxu0 %v768
    %v770 = vand.u32 %v218, 4294901760
    %v771 = vsub.f32 %v218, %v770
    %772 = vmatpush.msra.mxu0 %v771
    %v773 = vand.u32 %v217, 4294901760
    %v774 = vsub.f32 %v217, %v773
    %775 = vmatpush.msra.mxu0 %v774
    %v776 = vand.u32 %v216, 4294901760
    %v777 = vsub.f32 %v216, %v776
    %778 = vmatpush.msra.mxu0 %v777
    %v779 = vand.u32 %v215, 4294901760
    %v780 = vsub.f32 %v215, %v779
    %781 = vmatpush.msra.mxu0 %v780
    %v782 = vand.u32 %v214, 4294901760
    %v783 = vsub.f32 %v214, %v782
    %784 = vmatpush.msra.mxu0 %v783
    %v785 = vand.u32 %v213, 4294901760
    %v786 = vsub.f32 %v213, %v785
    %787 = vmatpush.msra.mxu0 %v786
    %v788 = vand.u32 %v212, 4294901760
    %v789 = vsub.f32 %v212, %v788
    %790 = vmatpush.msra.mxu0 %v789
    %v791 = vand.u32 %v193, 4294901760
    %v792 = vsub.f32 %v193, %v791
    %793 = vmatmul.f32.gmra.mxu0 %v792
    %v794 = vpop.f32.mrf.mxu0
    %v795 = vadd.f32 %v741, %v794
    %796 = vdwg.mxu0
    %v797 = vand.u32 %v227, 4294901760
    %798 = vmatpush.msra.mxu0 %v797
    %v799 = vand.u32 %v226, 4294901760
    %800 = vmatpush.msra.mxu0 %v799
    %v801 = vand.u32 %v225, 4294901760
    %802 = vmatpush.msra.mxu0 %v801
    %v803 = vand.u32 %v224, 4294901760
    %804 = vmatpush.msra.mxu0 %v803
    %v805 = vand.u32 %v223, 4294901760
    %806 = vmatpush.msra.mxu0 %v805
    %v807 = vand.u32 %v222, 4294901760
    %808 = vmatpush.msra.mxu0 %v807
    %v809 = vand.u32 %v221, 4294901760
    %810 = vmatpush.msra.mxu0 %v809
    %v811 = vand.u32 %v220, 4294901760
    %812 = vmatpush.msra.mxu0 %v811
    %v813 = vand.u32 %v219, 4294901760
    %814 = vmatpush.msra.mxu0 %v813
    %v815 = vand.u32 %v218, 4294901760
    %816 = vmatpush.msra.mxu0 %v815
    %v817 = vand.u32 %v217, 4294901760
    %818 = vmatpush.msra.mxu0 %v817
    %v819 = vand.u32 %v216, 4294901760
    %820 = vmatpush.msra.mxu0 %v819
    %v821 = vand.u32 %v215, 4294901760
    %822 = vmatpush.msra.mxu0 %v821
    %v823 = vand.u32 %v214, 4294901760
    %824 = vmatpush.msra.mxu0 %v823
    %v825 = vand.u32 %v213, 4294901760
    %826 = vmatpush.msra.mxu0 %v825
    %v827 = vand.u32 %v212, 4294901760
    %828 = vmatpush.msra.mxu0 %v827
    %v829 = vand.u32 %v193, 4294901760
    %v830 = vsub.f32 %v193, %v829
    %v831 = vand.u32 %v830, 4294901760
    %832 = vmatmul.f32.gmra.mxu0 %v831
    %v833 = vpop.f32.mrf.mxu0
    %v834 = vadd.f32 %v795, %v833
    %835 = vdwg.mxu0
    %v836 = vand.u32 %v227, 4294901760
    %v837 = vsub.f32 %v227, %v836
    %v838 = vand.u32 %v837, 4294901760
    %839 = vmatpush.msra.mxu0 %v838
    %v840 = vand.u32 %v226, 4294901760
    %v841 = vsub.f32 %v226, %v840
    %v842 = vand.u32 %v841, 4294901760
    %843 = vmatpush.msra.mxu0 %v842
    %v844 = vand.u32 %v225, 4294901760
    %v845 = vsub.f32 %v225, %v844
    %v846 = vand.u32 %v845, 4294901760
    %847 = vmatpush.msra.mxu0 %v846
    %v848 = vand.u32 %v224, 4294901760
    %v849 = vsub.f32 %v224, %v848
    %v850 = vand.u32 %v849, 4294901760
    %851 = vmatpush.msra.mxu0 %v850
    %v852 = vand.u32 %v223, 4294901760
    %v853 = vsub.f32 %v223, %v852
    %v854 = vand.u32 %v853, 4294901760
    %855 = vmatpush.msra.mxu0 %v854
    %v856 = vand.u32 %v222, 4294901760
    %v857 = vsub.f32 %v222, %v856
    %v858 = vand.u32 %v857, 4294901760
    %859 = vmatpush.msra.mxu0 %v858
    %v860 = vand.u32 %v221, 4294901760
    %v861 = vsub.f32 %v221, %v860
    %v862 = vand.u32 %v861, 4294901760
    %863 = vmatpush.msra.mxu0 %v862
    %v864 = vand.u32 %v220, 4294901760
    %v865 = vsub.f32 %v220, %v864
    %v866 = vand.u32 %v865, 4294901760
    %867 = vmatpush.msra.mxu0 %v866
    %v868 = vand.u32 %v219, 4294901760
    %v869 = vsub.f32 %v219, %v868
    %v870 = vand.u32 %v869, 4294901760
    %871 = vmatpush.msra.mxu0 %v870
    %v872 = vand.u32 %v218, 4294901760
    %v873 = vsub.f32 %v218, %v872
    %v874 = vand.u32 %v873, 4294901760
    %875 = vmatpush.msra.mxu0 %v874
    %v876 = vand.u32 %v217, 4294901760
    %v877 = vsub.f32 %v217, %v876
    %v878 = vand.u32 %v877, 4294901760
    %879 = vmatpush.msra.mxu0 %v878
    %v880 = vand.u32 %v216, 4294901760
    %v881 = vsub.f32 %v216, %v880
    %v882 = vand.u32 %v881, 4294901760
    %883 = vmatpush.msra.mxu0 %v882
    %v884 = vand.u32 %v215, 4294901760
    %v885 = vsub.f32 %v215, %v884
    %v886 = vand.u32 %v885, 4294901760
    %887 = vmatpush.msra.mxu0 %v886
    %v888 = vand.u32 %v214, 4294901760
    %v889 = vsub.f32 %v214, %v888
    %v890 = vand.u32 %v889, 4294901760
    %891 = vmatpush.msra.mxu0 %v890
    %v892 = vand.u32 %v213, 4294901760
    %v893 = vsub.f32 %v213, %v892
    %v894 = vand.u32 %v893, 4294901760
    %895 = vmatpush.msra.mxu0 %v894
    %v896 = vand.u32 %v212, 4294901760
    %v897 = vsub.f32 %v212, %v896
    %v898 = vand.u32 %v897, 4294901760
    %899 = vmatpush.msra.mxu0 %v898
    %v900 = vand.u32 %v193, 4294901760
    %901 = vmatmul.f32.gmra.mxu0 %v900
    %v902 = vpop.f32.mrf.mxu0
    %v903 = vadd.f32 %v834, %v902
    %904 = vdwg.mxu0
    %v905 = vand.u32 %v227, 4294901760
    %906 = vmatpush.msra.mxu0 %v905
    %v907 = vand.u32 %v226, 4294901760
    %908 = vmatpush.msra.mxu0 %v907
    %v909 = vand.u32 %v225, 4294901760
    %910 = vmatpush.msra.mxu0 %v909
    %v911 = vand.u32 %v224, 4294901760
    %912 = vmatpush.msra.mxu0 %v911
    %v913 = vand.u32 %v223, 4294901760
    %914 = vmatpush.msra.mxu0 %v913
    %v915 = vand.u32 %v222, 4294901760
    %916 = vmatpush.msra.mxu0 %v915
    %v917 = vand.u32 %v221, 4294901760
    %918 = vmatpush.msra.mxu0 %v917
    %v919 = vand.u32 %v220, 4294901760
    %920 = vmatpush.msra.mxu0 %v919
    %v921 = vand.u32 %v219, 4294901760
    %922 = vmatpush.msra.mxu0 %v921
    %v923 = vand.u32 %v218, 4294901760
    %924 = vmatpush.msra.mxu0 %v923
    %v925 = vand.u32 %v217, 4294901760
    %926 = vmatpush.msra.mxu0 %v925
    %v927 = vand.u32 %v216, 4294901760
    %928 = vmatpush.msra.mxu0 %v927
    %v929 = vand.u32 %v215, 4294901760
    %930 = vmatpush.msra.mxu0 %v929
    %v931 = vand.u32 %v214, 4294901760
    %932 = vmatpush.msra.mxu0 %v931
    %v933 = vand.u32 %v213, 4294901760
    %934 = vmatpush.msra.mxu0 %v933
    %v935 = vand.u32 %v212, 4294901760
    %936 = vmatpush.msra.mxu0 %v935
    %v937 = vand.u32 %v193, 4294901760
    %938 = vmatmul.f32.gmra.mxu0 %v937
    %v939 = vpop.f32.mrf.mxu0
    %v940 = vadd.f32 %v903, %v939
    %941 = vdwg.mxu0
    %v942 = vand.u32 %v243, 4294901760
    %943 = vmatpush.msra.mxu0 %v942
    %v944 = vand.u32 %v242, 4294901760
    %945 = vmatpush.msra.mxu0 %v944
    %v946 = vand.u32 %v241, 4294901760
    %947 = vmatpush.msra.mxu0 %v946
    %v948 = vand.u32 %v240, 4294901760
    %949 = vmatpush.msra.mxu0 %v948
    %v950 = vand.u32 %v239, 4294901760
    %951 = vmatpush.msra.mxu0 %v950
    %v952 = vand.u32 %v238, 4294901760
    %953 = vmatpush.msra.mxu0 %v952
    %v954 = vand.u32 %v237, 4294901760
    %955 = vmatpush.msra.mxu0 %v954
    %v956 = vand.u32 %v236, 4294901760
    %957 = vmatpush.msra.mxu0 %v956
    %v958 = vand.u32 %v235, 4294901760
    %959 = vmatpush.msra.mxu0 %v958
    %v960 = vand.u32 %v234, 4294901760
    %961 = vmatpush.msra.mxu0 %v960
    %v962 = vand.u32 %v233, 4294901760
    %963 = vmatpush.msra.mxu0 %v962
    %v964 = vand.u32 %v232, 4294901760
    %965 = vmatpush.msra.mxu0 %v964
    %v966 = vand.u32 %v231, 4294901760
    %967 = vmatpush.msra.mxu0 %v966
    %v968 = vand.u32 %v230, 4294901760
    %969 = vmatpush.msra.mxu0 %v968
    %v970 = vand.u32 %v229, 4294901760
    %971 = vmatpush.msra.mxu0 %v970
    %v972 = vand.u32 %v228, 4294901760
    %973 = vmatpush.msra.mxu0 %v972
    %v974 = vand.u32 %v194, 4294901760
    %v975 = vsub.f32 %v194, %v974
    %v976 = vand.u32 %v975, 4294901760
    %v977 = vsub.f32 %v975, %v976
    %v978 = vand.u32 %v977, 4294901760
    %979 = vmatmul.f32.gmra.mxu0 %v978
    %v980 = vpop.f32.mrf.mxu0
    %v981 = vadd.f32 %v940, %v980
    %982 = vdwg.mxu0
    %v983 = vand.u32 %v243, 4294901760
    %v984 = vsub.f32 %v243, %v983
    %v985 = vand.u32 %v984, 4294901760
    %v986 = vsub.f32 %v984, %v985
    %v987 = vand.u32 %v986, 4294901760
    %988 = vmatpush.msra.mxu0 %v987
    %v989 = vand.u32 %v242, 4294901760
    %v990 = vsub.f32 %v242, %v989
    %v991 = vand.u32 %v990, 4294901760
    %v992 = vsub.f32 %v990, %v991
    %v993 = vand.u32 %v992, 4294901760
    %994 = vmatpush.msra.mxu0 %v993
    %v995 = vand.u32 %v241, 4294901760
    %v996 = vsub.f32 %v241, %v995
    %v997 = vand.u32 %v996, 4294901760
    %v998 = vsub.f32 %v996, %v997
    %v999 = vand.u32 %v998, 4294901760
    %1000 = vmatpush.msra.mxu0 %v999
    %v1001 = vand.u32 %v240, 4294901760
    %v1002 = vsub.f32 %v240, %v1001
    %v1003 = vand.u32 %v1002, 4294901760
    %v1004 = vsub.f32 %v1002, %v1003
    %v1005 = vand.u32 %v1004, 4294901760
    %1006 = vmatpush.msra.mxu0 %v1005
    %v1007 = vand.u32 %v239, 4294901760
    %v1008 = vsub.f32 %v239, %v1007
    %v1009 = vand.u32 %v1008, 4294901760
    %v1010 = vsub.f32 %v1008, %v1009
    %v1011 = vand.u32 %v1010, 4294901760
    %1012 = vmatpush.msra.mxu0 %v1011
    %v1013 = vand.u32 %v238, 4294901760
    %v1014 = vsub.f32 %v238, %v1013
    %v1015 = vand.u32 %v1014, 4294901760
    %v1016 = vsub.f32 %v1014, %v1015
    %v1017 = vand.u32 %v1016, 4294901760
    %1018 = vmatpush.msra.mxu0 %v1017
    %v1019 = vand.u32 %v237, 4294901760
    %v1020 = vsub.f32 %v237, %v1019
    %v1021 = vand.u32 %v1020, 4294901760
    %v1022 = vsub.f32 %v1020, %v1021
    %v1023 = vand.u32 %v1022, 4294901760
    %1024 = vmatpush.msra.mxu0 %v1023
    %v1025 = vand.u32 %v236, 4294901760
    %v1026 = vsub.f32 %v236, %v1025
    %v1027 = vand.u32 %v1026, 4294901760
    %v1028 = vsub.f32 %v1026, %v1027
    %v1029 = vand.u32 %v1028, 4294901760
    %1030 = vmatpush.msra.mxu0 %v1029
    %v1031 = vand.u32 %v235, 4294901760
    %v1032 = vsub.f32 %v235, %v1031
    %v1033 = vand.u32 %v1032, 4294901760
    %v1034 = vsub.f32 %v1032, %v1033
    %v1035 = vand.u32 %v1034, 4294901760
    %1036 = vmatpush.msra.mxu0 %v1035
    %v1037 = vand.u32 %v234, 4294901760
    %v1038 = vsub.f32 %v234, %v1037
    %v1039 = vand.u32 %v1038, 4294901760
    %v1040 = vsub.f32 %v1038, %v1039
    %v1041 = vand.u32 %v1040, 4294901760
    %1042 = vmatpush.msra.mxu0 %v1041
    %v1043 = vand.u32 %v233, 4294901760
    %v1044 = vsub.f32 %v233, %v1043
    %v1045 = vand.u32 %v1044, 4294901760
    %v1046 = vsub.f32 %v1044, %v1045
    %v1047 = vand.u32 %v1046, 4294901760
    %1048 = vmatpush.msra.mxu0 %v1047
    %v1049 = vand.u32 %v232, 4294901760
    %v1050 = vsub.f32 %v232, %v1049
    %v1051 = vand.u32 %v1050, 4294901760
    %v1052 = vsub.f32 %v1050, %v1051
    %v1053 = vand.u32 %v1052, 4294901760
    %1054 = vmatpush.msra.mxu0 %v1053
    %v1055 = vand.u32 %v231, 4294901760
    %v1056 = vsub.f32 %v231, %v1055
    %v1057 = vand.u32 %v1056, 4294901760
    %v1058 = vsub.f32 %v1056, %v1057
    %v1059 = vand.u32 %v1058, 4294901760
    %1060 = vmatpush.msra.mxu0 %v1059
    %v1061 = vand.u32 %v230, 4294901760
    %v1062 = vsub.f32 %v230, %v1061
    %v1063 = vand.u32 %v1062, 4294901760
    %v1064 = vsub.f32 %v1062, %v1063
    %v1065 = vand.u32 %v1064, 4294901760
    %1066 = vmatpush.msra.mxu0 %v1065
    %v1067 = vand.u32 %v229, 4294901760
    %v1068 = vsub.f32 %v229, %v1067
    %v1069 = vand.u32 %v1068, 4294901760
    %v1070 = vsub.f32 %v1068, %v1069
    %v1071 = vand.u32 %v1070, 4294901760
    %1072 = vmatpush.msra.mxu0 %v1071
    %v1073 = vand.u32 %v228, 4294901760
    %v1074 = vsub.f32 %v228, %v1073
    %v1075 = vand.u32 %v1074, 4294901760
    %v1076 = vsub.f32 %v1074, %v1075
    %v1077 = vand.u32 %v1076, 4294901760
    %1078 = vmatpush.msra.mxu0 %v1077
    %v1079 = vand.u32 %v194, 4294901760
    %1080 = vmatmul.f32.gmra.mxu0 %v1079
    %v1081 = vpop.f32.mrf.mxu0
    %v1082 = vadd.f32 %v981, %v1081
    %1083 = vdwg.mxu0
    %v1084 = vand.u32 %v243, 4294901760
    %v1085 = vsub.f32 %v243, %v1084
    %1086 = vmatpush.msra.mxu0 %v1085
    %v1087 = vand.u32 %v242, 4294901760
    %v1088 = vsub.f32 %v242, %v1087
    %1089 = vmatpush.msra.mxu0 %v1088
    %v1090 = vand.u32 %v241, 4294901760
    %v1091 = vsub.f32 %v241, %v1090
    %1092 = vmatpush.msra.mxu0 %v1091
    %v1093 = vand.u32 %v240, 4294901760
    %v1094 = vsub.f32 %v240, %v1093
    %1095 = vmatpush.msra.mxu0 %v1094
    %v1096 = vand.u32 %v239, 4294901760
    %v1097 = vsub.f32 %v239, %v1096
    %1098 = vmatpush.msra.mxu0 %v1097
    %v1099 = vand.u32 %v238, 4294901760
    %v1100 = vsub.f32 %v238, %v1099
    %1101 = vmatpush.msra.mxu0 %v1100
    %v1102 = vand.u32 %v237, 4294901760
    %v1103 = vsub.f32 %v237, %v1102
    %1104 = vmatpush.msra.mxu0 %v1103
    %v1105 = vand.u32 %v236, 4294901760
    %v1106 = vsub.f32 %v236, %v1105
    %1107 = vmatpush.msra.mxu0 %v1106
    %v1108 = vand.u32 %v235, 4294901760
    %v1109 = vsub.f32 %v235, %v1108
    %1110 = vmatpush.msra.mxu0 %v1109
    %v1111 = vand.u32 %v234, 4294901760
    %v1112 = vsub.f32 %v234, %v1111
    %1113 = vmatpush.msra.mxu0 %v1112
    %v1114 = vand.u32 %v233, 4294901760
    %v1115 = vsub.f32 %v233, %v1114
    %1116 = vmatpush.msra.mxu0 %v1115
    %v1117 = vand.u32 %v232, 4294901760
    %v1118 = vsub.f32 %v232, %v1117
    %1119 = vmatpush.msra.mxu0 %v1118
    %v1120 = vand.u32 %v231, 4294901760
    %v1121 = vsub.f32 %v231, %v1120
    %1122 = vmatpush.msra.mxu0 %v1121
    %v1123 = vand.u32 %v230, 4294901760
    %v1124 = vsub.f32 %v230, %v1123
    %1125 = vmatpush.msra.mxu0 %v1124
    %v1126 = vand.u32 %v229, 4294901760
    %v1127 = vsub.f32 %v229, %v1126
    %1128 = vmatpush.msra.mxu0 %v1127
    %v1129 = vand.u32 %v228, 4294901760
    %v1130 = vsub.f32 %v228, %v1129
    %1131 = vmatpush.msra.mxu0 %v1130
    %v1132 = vand.u32 %v194, 4294901760
    %v1133 = vsub.f32 %v194, %v1132
    %1134 = vmatmul.f32.gmra.mxu0 %v1133
    %v1135 = vpop.f32.mrf.mxu0
    %v1136 = vadd.f32 %v1082, %v1135
    %1137 = vdwg.mxu0
    %v1138 = vand.u32 %v243, 4294901760
    %1139 = vmatpush.msra.mxu0 %v1138
    %v1140 = vand.u32 %v242, 4294901760
    %1141 = vmatpush.msra.mxu0 %v1140
    %v1142 = vand.u32 %v241, 4294901760
    %1143 = vmatpush.msra.mxu0 %v1142
    %v1144 = vand.u32 %v240, 4294901760
    %1145 = vmatpush.msra.mxu0 %v1144
    %v1146 = vand.u32 %v239, 4294901760
    %1147 = vmatpush.msra.mxu0 %v1146
    %v1148 = vand.u32 %v238, 4294901760
    %1149 = vmatpush.msra.mxu0 %v1148
    %v1150 = vand.u32 %v237, 4294901760
    %1151 = vmatpush.msra.mxu0 %v1150
    %v1152 = vand.u32 %v236, 4294901760
    %1153 = vmatpush.msra.mxu0 %v1152
    %v1154 = vand.u32 %v235, 4294901760
    %1155 = vmatpush.msra.mxu0 %v1154
    %v1156 = vand.u32 %v234, 4294901760
    %1157 = vmatpush.msra.mxu0 %v1156
    %v1158 = vand.u32 %v233, 4294901760
    %1159 = vmatpush.msra.mxu0 %v1158
    %v1160 = vand.u32 %v232, 4294901760
    %1161 = vmatpush.msra.mxu0 %v1160
    %v1162 = vand.u32 %v231, 4294901760
    %1163 = vmatpush.msra.mxu0 %v1162
    %v1164 = vand.u32 %v230, 4294901760
    %1165 = vmatpush.msra.mxu0 %v1164
    %v1166 = vand.u32 %v229, 4294901760
    %1167 = vmatpush.msra.mxu0 %v1166
    %v1168 = vand.u32 %v228, 4294901760
    %1169 = vmatpush.msra.mxu0 %v1168
    %v1170 = vand.u32 %v194, 4294901760
    %v1171 = vsub.f32 %v194, %v1170
    %v1172 = vand.u32 %v1171, 4294901760
    %1173 = vmatmul.f32.gmra.mxu0 %v1172
    %v1174 = vpop.f32.mrf.mxu0
    %v1175 = vadd.f32 %v1136, %v1174
    %1176 = vdwg.mxu0
    %v1177 = vand.u32 %v243, 4294901760
    %v1178 = vsub.f32 %v243, %v1177
    %v1179 = vand.u32 %v1178, 4294901760
    %1180 = vmatpush.msra.mxu0 %v1179
    %v1181 = vand.u32 %v242, 4294901760
    %v1182 = vsub.f32 %v242, %v1181
    %v1183 = vand.u32 %v1182, 4294901760
    %1184 = vmatpush.msra.mxu0 %v1183
    %v1185 = vand.u32 %v241, 4294901760
    %v1186 = vsub.f32 %v241, %v1185
    %v1187 = vand.u32 %v1186, 4294901760
    %1188 = vmatpush.msra.mxu0 %v1187
    %v1189 = vand.u32 %v240, 4294901760
    %v1190 = vsub.f32 %v240, %v1189
    %v1191 = vand.u32 %v1190, 4294901760
    %1192 = vmatpush.msra.mxu0 %v1191
    %v1193 = vand.u32 %v239, 4294901760
    %v1194 = vsub.f32 %v239, %v1193
    %v1195 = vand.u32 %v1194, 4294901760
    %1196 = vmatpush.msra.mxu0 %v1195
    %v1197 = vand.u32 %v238, 4294901760
    %v1198 = vsub.f32 %v238, %v1197
    %v1199 = vand.u32 %v1198, 4294901760
    %1200 = vmatpush.msra.mxu0 %v1199
    %v1201 = vand.u32 %v237, 4294901760
    %v1202 = vsub.f32 %v237, %v1201
    %v1203 = vand.u32 %v1202, 4294901760
    %1204 = vmatpush.msra.mxu0 %v1203
    %v1205 = vand.u32 %v236, 4294901760
    %v1206 = vsub.f32 %v236, %v1205
    %v1207 = vand.u32 %v1206, 4294901760
    %1208 = vmatpush.msra.mxu0 %v1207
    %v1209 = vand.u32 %v235, 4294901760
    %v1210 = vsub.f32 %v235, %v1209
    %v1211 = vand.u32 %v1210, 4294901760
    %1212 = vmatpush.msra.mxu0 %v1211
    %v1213 = vand.u32 %v234, 4294901760
    %v1214 = vsub.f32 %v234, %v1213
    %v1215 = vand.u32 %v1214, 4294901760
    %1216 = vmatpush.msra.mxu0 %v1215
    %v1217 = vand.u32 %v233, 4294901760
    %v1218 = vsub.f32 %v233, %v1217
    %v1219 = vand.u32 %v1218, 4294901760
    %1220 = vmatpush.msra.mxu0 %v1219
    %v1221 = vand.u32 %v232, 4294901760
    %v1222 = vsub.f32 %v232, %v1221
    %v1223 = vand.u32 %v1222, 4294901760
    %1224 = vmatpush.msra.mxu0 %v1223
    %v1225 = vand.u32 %v231, 4294901760
    %v1226 = vsub.f32 %v231, %v1225
    %v1227 = vand.u32 %v1226, 4294901760
    %1228 = vmatpush.msra.mxu0 %v1227
    %v1229 = vand.u32 %v230, 4294901760
    %v1230 = vsub.f32 %v230, %v1229
    %v1231 = vand.u32 %v1230, 4294901760
    %1232 = vmatpush.msra.mxu0 %v1231
    %v1233 = vand.u32 %v229, 4294901760
    %v1234 = vsub.f32 %v229, %v1233
    %v1235 = vand.u32 %v1234, 4294901760
    %1236 = vmatpush.msra.mxu0 %v1235
    %v1237 = vand.u32 %v228, 4294901760
    %v1238 = vsub.f32 %v228, %v1237
    %v1239 = vand.u32 %v1238, 4294901760
    %1240 = vmatpush.msra.mxu0 %v1239
    %v1241 = vand.u32 %v194, 4294901760
    %1242 = vmatmul.f32.gmra.mxu0 %v1241
    %v1243 = vpop.f32.mrf.mxu0
    %v1244 = vadd.f32 %v1175, %v1243
    %1245 = vdwg.mxu0
    %v1246 = vand.u32 %v243, 4294901760
    %1247 = vmatpush.msra.mxu0 %v1246
    %v1248 = vand.u32 %v242, 4294901760
    %1249 = vmatpush.msra.mxu0 %v1248
    %v1250 = vand.u32 %v241, 4294901760
    %1251 = vmatpush.msra.mxu0 %v1250
    %v1252 = vand.u32 %v240, 4294901760
    %1253 = vmatpush.msra.mxu0 %v1252
    %v1254 = vand.u32 %v239, 4294901760
    %1255 = vmatpush.msra.mxu0 %v1254
    %v1256 = vand.u32 %v238, 4294901760
    %1257 = vmatpush.msra.mxu0 %v1256
    %v1258 = vand.u32 %v237, 4294901760
    %1259 = vmatpush.msra.mxu0 %v1258
    %v1260 = vand.u32 %v236, 4294901760
    %1261 = vmatpush.msra.mxu0 %v1260
    %v1262 = vand.u32 %v235, 4294901760
    %1263 = vmatpush.msra.mxu0 %v1262
    %v1264 = vand.u32 %v234, 4294901760
    %1265 = vmatpush.msra.mxu0 %v1264
    %v1266 = vand.u32 %v233, 4294901760
    %1267 = vmatpush.msra.mxu0 %v1266
    %v1268 = vand.u32 %v232, 4294901760
    %1269 = vmatpush.msra.mxu0 %v1268
    %v1270 = vand.u32 %v231, 4294901760
    %1271 = vmatpush.msra.mxu0 %v1270
    %v1272 = vand.u32 %v230, 4294901760
    %1273 = vmatpush.msra.mxu0 %v1272
    %v1274 = vand.u32 %v229, 4294901760
    %1275 = vmatpush.msra.mxu0 %v1274
    %v1276 = vand.u32 %v228, 4294901760
    %1277 = vmatpush.msra.mxu0 %v1276
    %v1278 = vand.u32 %v194, 4294901760
    %1279 = vmatmul.f32.gmra.mxu0 %v1278
    %v1280 = vpop.f32.mrf.mxu0
    %v1281 = vadd.f32 %v1244, %v1280
    %1282 = vdwg.mxu0
    %v1283 = vand.u32 %v259, 4294901760
    %1284 = vmatpush.msra.mxu0 %v1283
    %v1285 = vand.u32 %v258, 4294901760
    %1286 = vmatpush.msra.mxu0 %v1285
    %v1287 = vand.u32 %v257, 4294901760
    %1288 = vmatpush.msra.mxu0 %v1287
    %v1289 = vand.u32 %v256, 4294901760
    %1290 = vmatpush.msra.mxu0 %v1289
    %v1291 = vand.u32 %v255, 4294901760
    %1292 = vmatpush.msra.mxu0 %v1291
    %v1293 = vand.u32 %v254, 4294901760
    %1294 = vmatpush.msra.mxu0 %v1293
    %v1295 = vand.u32 %v253, 4294901760
    %1296 = vmatpush.msra.mxu0 %v1295
    %v1297 = vand.u32 %v252, 4294901760
    %1298 = vmatpush.msra.mxu0 %v1297
    %v1299 = vand.u32 %v251, 4294901760
    %1300 = vmatpush.msra.mxu0 %v1299
    %v1301 = vand.u32 %v250, 4294901760
    %1302 = vmatpush.msra.mxu0 %v1301
    %v1303 = vand.u32 %v249, 4294901760
    %1304 = vmatpush.msra.mxu0 %v1303
    %v1305 = vand.u32 %v248, 4294901760
    %1306 = vmatpush.msra.mxu0 %v1305
    %v1307 = vand.u32 %v247, 4294901760
    %1308 = vmatpush.msra.mxu0 %v1307
    %v1309 = vand.u32 %v246, 4294901760
    %1310 = vmatpush.msra.mxu0 %v1309
    %v1311 = vand.u32 %v245, 4294901760
    %1312 = vmatpush.msra.mxu0 %v1311
    %v1313 = vand.u32 %v244, 4294901760
    %1314 = vmatpush.msra.mxu0 %v1313
    %v1315 = vand.u32 %v195, 4294901760
    %v1316 = vsub.f32 %v195, %v1315
    %v1317 = vand.u32 %v1316, 4294901760
    %v1318 = vsub.f32 %v1316, %v1317
    %v1319 = vand.u32 %v1318, 4294901760
    %1320 = vmatmul.f32.gmra.mxu0 %v1319
    %v1321 = vpop.f32.mrf.mxu0
    %v1322 = vadd.f32 %v1281, %v1321
    %1323 = vdwg.mxu0
    %v1324 = vand.u32 %v259, 4294901760
    %v1325 = vsub.f32 %v259, %v1324
    %v1326 = vand.u32 %v1325, 4294901760
    %v1327 = vsub.f32 %v1325, %v1326
    %v1328 = vand.u32 %v1327, 4294901760
    %1329 = vmatpush.msra.mxu0 %v1328
    %v1330 = vand.u32 %v258, 4294901760
    %v1331 = vsub.f32 %v258, %v1330
    %v1332 = vand.u32 %v1331, 4294901760
    %v1333 = vsub.f32 %v1331, %v1332
    %v1334 = vand.u32 %v1333, 4294901760
    %1335 = vmatpush.msra.mxu0 %v1334
    %v1336 = vand.u32 %v257, 4294901760
    %v1337 = vsub.f32 %v257, %v1336
    %v1338 = vand.u32 %v1337, 4294901760
    %v1339 = vsub.f32 %v1337, %v1338
    %v1340 = vand.u32 %v1339, 4294901760
    %1341 = vmatpush.msra.mxu0 %v1340
    %v1342 = vand.u32 %v256, 4294901760
    %v1343 = vsub.f32 %v256, %v1342
    %v1344 = vand.u32 %v1343, 4294901760
    %v1345 = vsub.f32 %v1343, %v1344
    %v1346 = vand.u32 %v1345, 4294901760
    %1347 = vmatpush.msra.mxu0 %v1346
    %v1348 = vand.u32 %v255, 4294901760
    %v1349 = vsub.f32 %v255, %v1348
    %v1350 = vand.u32 %v1349, 4294901760
    %v1351 = vsub.f32 %v1349, %v1350
    %v1352 = vand.u32 %v1351, 4294901760
    %1353 = vmatpush.msra.mxu0 %v1352
    %v1354 = vand.u32 %v254, 4294901760
    %v1355 = vsub.f32 %v254, %v1354
    %v1356 = vand.u32 %v1355, 4294901760
    %v1357 = vsub.f32 %v1355, %v1356
    %v1358 = vand.u32 %v1357, 4294901760
    %1359 = vmatpush.msra.mxu0 %v1358
    %v1360 = vand.u32 %v253, 4294901760
    %v1361 = vsub.f32 %v253, %v1360
    %v1362 = vand.u32 %v1361, 4294901760
    %v1363 = vsub.f32 %v1361, %v1362
    %v1364 = vand.u32 %v1363, 4294901760
    %1365 = vmatpush.msra.mxu0 %v1364
    %v1366 = vand.u32 %v252, 4294901760
    %v1367 = vsub.f32 %v252, %v1366
    %v1368 = vand.u32 %v1367, 4294901760
    %v1369 = vsub.f32 %v1367, %v1368
    %v1370 = vand.u32 %v1369, 4294901760
    %1371 = vmatpush.msra.mxu0 %v1370
    %v1372 = vand.u32 %v251, 4294901760
    %v1373 = vsub.f32 %v251, %v1372
    %v1374 = vand.u32 %v1373, 4294901760
    %v1375 = vsub.f32 %v1373, %v1374
    %v1376 = vand.u32 %v1375, 4294901760
    %1377 = vmatpush.msra.mxu0 %v1376
    %v1378 = vand.u32 %v250, 4294901760
    %v1379 = vsub.f32 %v250, %v1378
    %v1380 = vand.u32 %v1379, 4294901760
    %v1381 = vsub.f32 %v1379, %v1380
    %v1382 = vand.u32 %v1381, 4294901760
    %1383 = vmatpush.msra.mxu0 %v1382
    %v1384 = vand.u32 %v249, 4294901760
    %v1385 = vsub.f32 %v249, %v1384
    %v1386 = vand.u32 %v1385, 4294901760
    %v1387 = vsub.f32 %v1385, %v1386
    %v1388 = vand.u32 %v1387, 4294901760
    %1389 = vmatpush.msra.mxu0 %v1388
    %v1390 = vand.u32 %v248, 4294901760
    %v1391 = vsub.f32 %v248, %v1390
    %v1392 = vand.u32 %v1391, 4294901760
    %v1393 = vsub.f32 %v1391, %v1392
    %v1394 = vand.u32 %v1393, 4294901760
    %1395 = vmatpush.msra.mxu0 %v1394
    %v1396 = vand.u32 %v247, 4294901760
    %v1397 = vsub.f32 %v247, %v1396
    %v1398 = vand.u32 %v1397, 4294901760
    %v1399 = vsub.f32 %v1397, %v1398
    %v1400 = vand.u32 %v1399, 4294901760
    %1401 = vmatpush.msra.mxu0 %v1400
    %v1402 = vand.u32 %v246, 4294901760
    %v1403 = vsub.f32 %v246, %v1402
    %v1404 = vand.u32 %v1403, 4294901760
    %v1405 = vsub.f32 %v1403, %v1404
    %v1406 = vand.u32 %v1405, 4294901760
    %1407 = vmatpush.msra.mxu0 %v1406
    %v1408 = vand.u32 %v245, 4294901760
    %v1409 = vsub.f32 %v245, %v1408
    %v1410 = vand.u32 %v1409, 4294901760
    %v1411 = vsub.f32 %v1409, %v1410
    %v1412 = vand.u32 %v1411, 4294901760
    %1413 = vmatpush.msra.mxu0 %v1412
    %v1414 = vand.u32 %v244, 4294901760
    %v1415 = vsub.f32 %v244, %v1414
    %v1416 = vand.u32 %v1415, 4294901760
    %v1417 = vsub.f32 %v1415, %v1416
    %v1418 = vand.u32 %v1417, 4294901760
    %1419 = vmatpush.msra.mxu0 %v1418
    %v1420 = vand.u32 %v195, 4294901760
    %1421 = vmatmul.f32.gmra.mxu0 %v1420
    %v1422 = vpop.f32.mrf.mxu0
    %v1423 = vadd.f32 %v1322, %v1422
    %1424 = vdwg.mxu0
    %v1425 = vand.u32 %v259, 4294901760
    %v1426 = vsub.f32 %v259, %v1425
    %1427 = vmatpush.msra.mxu0 %v1426
    %v1428 = vand.u32 %v258, 4294901760
    %v1429 = vsub.f32 %v258, %v1428
    %1430 = vmatpush.msra.mxu0 %v1429
    %v1431 = vand.u32 %v257, 4294901760
    %v1432 = vsub.f32 %v257, %v1431
    %1433 = vmatpush.msra.mxu0 %v1432
    %v1434 = vand.u32 %v256, 4294901760
    %v1435 = vsub.f32 %v256, %v1434
    %1436 = vmatpush.msra.mxu0 %v1435
    %v1437 = vand.u32 %v255, 4294901760
    %v1438 = vsub.f32 %v255, %v1437
    %1439 = vmatpush.msra.mxu0 %v1438
    %v1440 = vand.u32 %v254, 4294901760
    %v1441 = vsub.f32 %v254, %v1440
    %1442 = vmatpush.msra.mxu0 %v1441
    %v1443 = vand.u32 %v253, 4294901760
    %v1444 = vsub.f32 %v253, %v1443
    %1445 = vmatpush.msra.mxu0 %v1444
    %v1446 = vand.u32 %v252, 4294901760
    %v1447 = vsub.f32 %v252, %v1446
    %1448 = vmatpush.msra.mxu0 %v1447
    %v1449 = vand.u32 %v251, 4294901760
    %v1450 = vsub.f32 %v251, %v1449
    %1451 = vmatpush.msra.mxu0 %v1450
    %v1452 = vand.u32 %v250, 4294901760
    %v1453 = vsub.f32 %v250, %v1452
    %1454 = vmatpush.msra.mxu0 %v1453
    %v1455 = vand.u32 %v249, 4294901760
    %v1456 = vsub.f32 %v249, %v1455
    %1457 = vmatpush.msra.mxu0 %v1456
    %v1458 = vand.u32 %v248, 4294901760
    %v1459 = vsub.f32 %v248, %v1458
    %1460 = vmatpush.msra.mxu0 %v1459
    %v1461 = vand.u32 %v247, 4294901760
    %v1462 = vsub.f32 %v247, %v1461
    %1463 = vmatpush.msra.mxu0 %v1462
    %v1464 = vand.u32 %v246, 4294901760
    %v1465 = vsub.f32 %v246, %v1464
    %1466 = vmatpush.msra.mxu0 %v1465
    %v1467 = vand.u32 %v245, 4294901760
    %v1468 = vsub.f32 %v245, %v1467
    %1469 = vmatpush.msra.mxu0 %v1468
    %v1470 = vand.u32 %v244, 4294901760
    %v1471 = vsub.f32 %v244, %v1470
    %1472 = vmatpush.msra.mxu0 %v1471
    %v1473 = vand.u32 %v195, 4294901760
    %v1474 = vsub.f32 %v195, %v1473
    %1475 = vmatmul.f32.gmra.mxu0 %v1474
    %v1476 = vpop.f32.mrf.mxu0
    %v1477 = vadd.f32 %v1423, %v1476
    %1478 = vdwg.mxu0
    %v1479 = vand.u32 %v259, 4294901760
    %1480 = vmatpush.msra.mxu0 %v1479
    %v1481 = vand.u32 %v258, 4294901760
    %1482 = vmatpush.msra.mxu0 %v1481
    %v1483 = vand.u32 %v257, 4294901760
    %1484 = vmatpush.msra.mxu0 %v1483
    %v1485 = vand.u32 %v256, 4294901760
    %1486 = vmatpush.msra.mxu0 %v1485
    %v1487 = vand.u32 %v255, 4294901760
    %1488 = vmatpush.msra.mxu0 %v1487
    %v1489 = vand.u32 %v254, 4294901760
    %1490 = vmatpush.msra.mxu0 %v1489
    %v1491 = vand.u32 %v253, 4294901760
    %1492 = vmatpush.msra.mxu0 %v1491
    %v1493 = vand.u32 %v252, 4294901760
    %1494 = vmatpush.msra.mxu0 %v1493
    %v1495 = vand.u32 %v251, 4294901760
    %1496 = vmatpush.msra.mxu0 %v1495
    %v1497 = vand.u32 %v250, 4294901760
    %1498 = vmatpush.msra.mxu0 %v1497
    %v1499 = vand.u32 %v249, 4294901760
    %1500 = vmatpush.msra.mxu0 %v1499
    %v1501 = vand.u32 %v248, 4294901760
    %1502 = vmatpush.msra.mxu0 %v1501
    %v1503 = vand.u32 %v247, 4294901760
    %1504 = vmatpush.msra.mxu0 %v1503
    %v1505 = vand.u32 %v246, 4294901760
    %1506 = vmatpush.msra.mxu0 %v1505
    %v1507 = vand.u32 %v245, 4294901760
    %1508 = vmatpush.msra.mxu0 %v1507
    %v1509 = vand.u32 %v244, 4294901760
    %1510 = vmatpush.msra.mxu0 %v1509
    %v1511 = vand.u32 %v195, 4294901760
    %v1512 = vsub.f32 %v195, %v1511
    %v1513 = vand.u32 %v1512, 4294901760
    %1514 = vmatmul.f32.gmra.mxu0 %v1513
    %v1515 = vpop.f32.mrf.mxu0
    %v1516 = vadd.f32 %v1477, %v1515
    %1517 = vdwg.mxu0
    %v1518 = vand.u32 %v259, 4294901760
    %v1519 = vsub.f32 %v259, %v1518
    %v1520 = vand.u32 %v1519, 4294901760
    %1521 = vmatpush.msra.mxu0 %v1520
    %v1522 = vand.u32 %v258, 4294901760
    %v1523 = vsub.f32 %v258, %v1522
    %v1524 = vand.u32 %v1523, 4294901760
    %1525 = vmatpush.msra.mxu0 %v1524
    %v1526 = vand.u32 %v257, 4294901760
    %v1527 = vsub.f32 %v257, %v1526
    %v1528 = vand.u32 %v1527, 4294901760
    %1529 = vmatpush.msra.mxu0 %v1528
    %v1530 = vand.u32 %v256, 4294901760
    %v1531 = vsub.f32 %v256, %v1530
    %v1532 = vand.u32 %v1531, 4294901760
    %1533 = vmatpush.msra.mxu0 %v1532
    %v1534 = vand.u32 %v255, 4294901760
    %v1535 = vsub.f32 %v255, %v1534
    %v1536 = vand.u32 %v1535, 4294901760
    %1537 = vmatpush.msra.mxu0 %v1536
    %v1538 = vand.u32 %v254, 4294901760
    %v1539 = vsub.f32 %v254, %v1538
    %v1540 = vand.u32 %v1539, 4294901760
    %1541 = vmatpush.msra.mxu0 %v1540
    %v1542 = vand.u32 %v253, 4294901760
    %v1543 = vsub.f32 %v253, %v1542
    %v1544 = vand.u32 %v1543, 4294901760
    %1545 = vmatpush.msra.mxu0 %v1544
    %v1546 = vand.u32 %v252, 4294901760
    %v1547 = vsub.f32 %v252, %v1546
    %v1548 = vand.u32 %v1547, 4294901760
    %1549 = vmatpush.msra.mxu0 %v1548
    %v1550 = vand.u32 %v251, 4294901760
    %v1551 = vsub.f32 %v251, %v1550
    %v1552 = vand.u32 %v1551, 4294901760
    %1553 = vmatpush.msra.mxu0 %v1552
    %v1554 = vand.u32 %v250, 4294901760
    %v1555 = vsub.f32 %v250, %v1554
    %v1556 = vand.u32 %v1555, 4294901760
    %1557 = vmatpush.msra.mxu0 %v1556
    %v1558 = vand.u32 %v249, 4294901760
    %v1559 = vsub.f32 %v249, %v1558
    %v1560 = vand.u32 %v1559, 4294901760
    %1561 = vmatpush.msra.mxu0 %v1560
    %v1562 = vand.u32 %v248, 4294901760
    %v1563 = vsub.f32 %v248, %v1562
    %v1564 = vand.u32 %v1563, 4294901760
    %1565 = vmatpush.msra.mxu0 %v1564
    %v1566 = vand.u32 %v247, 4294901760
    %v1567 = vsub.f32 %v247, %v1566
    %v1568 = vand.u32 %v1567, 4294901760
    %1569 = vmatpush.msra.mxu0 %v1568
    %v1570 = vand.u32 %v246, 4294901760
    %v1571 = vsub.f32 %v246, %v1570
    %v1572 = vand.u32 %v1571, 4294901760
    %1573 = vmatpush.msra.mxu0 %v1572
    %v1574 = vand.u32 %v245, 4294901760
    %v1575 = vsub.f32 %v245, %v1574
    %v1576 = vand.u32 %v1575, 4294901760
    %1577 = vmatpush.msra.mxu0 %v1576
    %v1578 = vand.u32 %v244, 4294901760
    %v1579 = vsub.f32 %v244, %v1578
    %v1580 = vand.u32 %v1579, 4294901760
    %1581 = vmatpush.msra.mxu0 %v1580
    %v1582 = vand.u32 %v195, 4294901760
    %1583 = vmatmul.f32.gmra.mxu0 %v1582
    %v1584 = vpop.f32.mrf.mxu0
    %v1585 = vadd.f32 %v1516, %v1584
    %1586 = vdwg.mxu0
    %v1587 = vand.u32 %v259, 4294901760
    %1588 = vmatpush.msra.mxu0 %v1587
    %v1589 = vand.u32 %v258, 4294901760
    %1590 = vmatpush.msra.mxu0 %v1589
    %v1591 = vand.u32 %v257, 4294901760
    %1592 = vmatpush.msra.mxu0 %v1591
    %v1593 = vand.u32 %v256, 4294901760
    %1594 = vmatpush.msra.mxu0 %v1593
    %v1595 = vand.u32 %v255, 4294901760
    %1596 = vmatpush.msra.mxu0 %v1595
    %v1597 = vand.u32 %v254, 4294901760
    %1598 = vmatpush.msra.mxu0 %v1597
    %v1599 = vand.u32 %v253, 4294901760
    %1600 = vmatpush.msra.mxu0 %v1599
    %v1601 = vand.u32 %v252, 4294901760
    %1602 = vmatpush.msra.mxu0 %v1601
    %v1603 = vand.u32 %v251, 4294901760
    %1604 = vmatpush.msra.mxu0 %v1603
    %v1605 = vand.u32 %v250, 4294901760
    %1606 = vmatpush.msra.mxu0 %v1605
    %v1607 = vand.u32 %v249, 4294901760
    %1608 = vmatpush.msra.mxu0 %v1607
    %v1609 = vand.u32 %v248, 4294901760
    %1610 = vmatpush.msra.mxu0 %v1609
    %v1611 = vand.u32 %v247, 4294901760
    %1612 = vmatpush.msra.mxu0 %v1611
    %v1613 = vand.u32 %v246, 4294901760
    %1614 = vmatpush.msra.mxu0 %v1613
    %v1615 = vand.u32 %v245, 4294901760
    %1616 = vmatpush.msra.mxu0 %v1615
    %v1617 = vand.u32 %v244, 4294901760
    %1618 = vmatpush.msra.mxu0 %v1617
    %v1619 = vand.u32 %v195, 4294901760
    %1620 = vmatmul.f32.gmra.mxu0 %v1619
    %v1621 = vpop.f32.mrf.mxu0
    %v1622 = vadd.f32 %v1585, %v1621
    %1623 = vdwg.mxu0
    %1624 = vst [vmem:[#allocation7] sm:$0xff] %v1622
    // Predicated region
    $region18: #{tpu_custom_call.1} parent=1 // pred_check
      _
    $region19: #{tpu_custom_call.1} parent=1 // pred_check_branch
      %1626 = sbr.rel (0) target = $region21
    $region20: #{tpu_custom_call.1} parent=1 // pred_region
      %1628 = vsyncadd [#allocation4], 0
      %s1630 = sshll.u32 [#allocation7], 4
      %s1631 = int_to_ptr.vmem [resolvable:$true] %s1630
      %s1632 = sshll.u32 %s2, 4
      %s1633 = int_to_ptr.hbm [resolvable:$true] %s1632
      %1635 = dma.vmem_to_hbm [thread:$0]  %s1631, 128, %s1633, [#allocation4]
    $region21: #{tpu_custom_call.1} parent=1 // pred_fallthru
      _
    // Predicated region
    $region22: #{tpu_custom_call.1} parent=1 // pred_check
      _
    $region23: #{tpu_custom_call.1} parent=1 // pred_check_branch
      %1637 = sbr.rel (0) target = $region25
    $region24: #{tpu_custom_call.1} parent=1 // pred_region
      %1639 = dma.done [#allocation4], 128
    $region25: #{tpu_custom_call.1} parent=1 // pred_fallthru
      _
    %1640 = vsyncpa [#allocation3], 1
    %1641 = vsyncpa [#allocation6], 1
    %1642 = vsyncpa [#allocation4], 1

</llo_original>
